<compile_context>
chip_gen: v5e
topology: v5e:2x2
jax: 0.10.0
libtpu: 0.0.40
codegen_flags: <defaults>
</compile_context>

<pallas_src>
import functools
import math

import jax
import jax.numpy as jnp
from jax.experimental import pallas as pl
from jax.experimental.pallas import tpu as pltpu

# ---- static hyper-parameters (mirror TransConv.__init__ defaults / args) ----
K_IN = 1.0        # curvature of manifold_in
K_HID = 1.0       # curvature of manifold_hidden
K_OUT = 1.0       # curvature of manifold_out
POWER_K = 2.0     # args.power_k
NORM_SCALE = 1.0  # TransConvLayer.norm_scale init
LN_EPS = 1e-5     # torch.nn.LayerNorm default eps
NUM_LAYERS = 2
NUM_HEADS = 1     # kernels below are specialized to a single head

_BF16 = jnp.bfloat16  # MXU operand dtype (f32 accumulation everywhere)


def _row_tile(n, cap=512):
    """Largest multiple-of-8 row tile dividing n (<= cap); prefer >=2 grid steps."""
    divs = [t for t in range(8, min(cap, n) + 1, 8) if n % t == 0]
    if not divs:
        return n
    small = [t for t in divs if t <= n // 2]   # >=2 steps -> megacore-shardable on v7x
    return max(small) if small else max(divs)


# ---------------------------- in-kernel helpers ----------------------------

def _recip(x):
    return pl.reciprocal(x, approx=True)       # EUP slot, frees VALU issue slots


def _dot(a, b):
    return jnp.dot(a.astype(_BF16), b.astype(_BF16),
                   preferred_element_type=jnp.float32)


def _time_of(space, k):
    return jnp.sqrt(jnp.sum(space * space, axis=-1, keepdims=True) + k)


def _hyp_linear(x_s, x_t, w_s_ref, w_t_ref, b_ref):
    # [x_t | x_s] @ [w_t ; w_s] + b, with the odd-width (1+H) contraction split into a
    # lane-aligned matmul plus a rank-1 broadcast term for the time coordinate.
    return (_dot(x_s, w_s_ref[...]) + x_t * w_t_ref[...].astype(jnp.float32)
            + b_ref[...].astype(jnp.float32))


def _phi(space):
    inv_ns = jnp.float32(1.0 / abs(NORM_SCALE))
    return (jnp.maximum(space, 0.0) + 1e-6) * inv_ns


def _fp(x):                                    # TransConvLayer.fp (power_k == 2)
    nx = jnp.sqrt(jnp.sum(x * x, axis=-1, keepdims=True))
    xp = x * x if POWER_K == 2.0 else x ** POWER_K
    nxp = jnp.sqrt(jnp.sum(xp * xp, axis=-1, keepdims=True))
    return nx * _recip(nxp) * xp


def _mid_point_space(a_t, a_s, b_t, b_s, k):
    # Lorentz mid_point of a 2-stack; only the space part is needed downstream
    # (HypLayerNorm / HypActivation recompute their own time coordinate).
    ave_t = 0.5 * (a_t + b_t)
    ave_s = 0.5 * (a_s + b_s)
    inner = -ave_t * ave_t + jnp.sum(ave_s * ave_s, axis=-1, keepdims=True)
    denom = jnp.sqrt(jnp.maximum(jnp.abs(inner), 1e-8))
    return jnp.float32(math.sqrt(k)) * ave_s * _recip(denom)


def _ln_relu(s, g_ref, be_ref, eps):           # HypLayerNorm + HypActivation(ReLU)
    mu = jnp.mean(s, axis=-1, keepdims=True)
    var = jnp.mean((s - mu) * (s - mu), axis=-1, keepdims=True)
    s = ((s - mu) * jax.lax.rsqrt(var + eps) * g_ref[...].astype(jnp.float32)
         + be_ref[...].astype(jnp.float32))
    return jnp.maximum(s, 0.0)


# ============================== Pallas kernels ==============================

def _input_stage_kernel(x_ref, w_s_ref, w_t_ref, b_ref, g_ref, be_ref, o_ref,
                        *, k_in, k_hid, out_scale, eps, hidden):
    """fcs[0] + positional_embedding (one fused matmul) + mid_point + bns[0] + ReLU."""
    x = x_ref[...].astype(jnp.float32)
    sqrtk = jnp.float32(math.sqrt(k_in))
    inv_sqrtk = jnp.float32(1.0 / math.sqrt(k_in))
    # Lorentz expmap0 of u = [1, x] (Euclidean lift).
    # TODO(synk): <u,u>_L = ||x||^2 - 1 can be negative for ||x|| < 1; clamped as in the
    # mirrored Hypformer helper -- verify small-norm behaviour against the reference.
    inner = jnp.sum(x * x, axis=-1, keepdims=True) - 1.0
    nrm = jnp.sqrt(jnp.maximum(inner, 1e-8))
    e = jnp.exp(nrm * inv_sqrtk)
    einv = _recip(e)
    ch = 0.5 * (e + einv)
    sh = 0.5 * (e - einv)
    r = sqrtk * sh * _recip(nrm)
    u_t = ch * sqrtk + r                        # lifted time (u0 == 1)
    u_s = r * x                                 # lifted space
    y = _hyp_linear(u_s, u_t, w_s_ref, w_t_ref, b_ref) * jnp.float32(out_scale)
    a_s, p_s = y[:, :hidden], y[:, hidden:]     # fc0 | positional_embedding space parts
    s = _mid_point_space(_time_of(a_s, k_hid), a_s, _time_of(p_s, k_hid), p_s, k_hid)
    o_ref[...] = _ln_relu(s, g_ref, be_ref, eps).astype(o_ref.dtype)


def _layer_kernel(x_ref, wkv_s_ref, wkv_t_ref, bkv_ref,
                  wqv_s_ref, wqv_t_ref, bqv_ref, wvm_ref, bvm_ref,
                  g_ref, be_ref, o_ref, ktv_ref, ksum_ref,
                  *, k, eps, hidden):
    """One TransConvLayer + residual mid_point + HypLayerNorm + ReLU, fully fused.

    grid = (2, num_row_tiles):
      phase 0: k/v HypLinear (fused [Wk|Wv]) -> accumulate PhiK^T V and sum(PhiK)
      phase 1: q/v HypLinear (fused [Wq|Wv]) -> attention, v_map_mlp, residual, LN, ReLU
    The reference projx / singleton-head mid_point after attention are exact identities
    (Lorentz inner == -k by construction) and are elided.
    """
    phase, step = pl.program_id(0), pl.program_id(1)
    x_s = x_ref[...].astype(jnp.float32)
    x_t = _time_of(x_s, k)

    @pl.when(phase == 0)
    def _():
        @pl.when(step == 0)
        def _():
            ktv_ref[...] = jnp.zeros_like(ktv_ref)
            ksum_ref[...] = jnp.zeros_like(ksum_ref)
        kv = _hyp_linear(x_s, x_t, wkv_s_ref, wkv_t_ref, bkv_ref)
        k_s, v_s = kv[:, :hidden], kv[:, hidden:]
        phi_k = _fp(_phi(k_s))
        ktv_ref[...] += jax.lax.dot_general(        # PhiK^T V   [H, H]
            phi_k.astype(_BF16), v_s.astype(_BF16),
            (((0,), (0,)), ((), ())), preferred_element_type=jnp.float32)
        ksum_ref[...] += jnp.sum(phi_k, axis=0, keepdims=True)

    @pl.when(phase == 1)
    def _():
        qv = _hyp_linear(x_s, x_t, wqv_s_ref, wqv_t_ref, bqv_ref)
        q_s, v_s = qv[:, :hidden], qv[:, hidden:]
        phi_q = _fp(_phi(q_s))
        numer = _dot(phi_q, ktv_ref[...])                                 # [T, H]
        denom = jnp.sum(phi_q * ksum_ref[...], axis=-1, keepdims=True)    # [T, 1]
        attn = numer * _recip(denom + 1e-6)
        vmap = _dot(v_s, wvm_ref[...]) + bvm_ref[...].astype(jnp.float32)  # v_map_mlp
        out_s = attn + vmap
        # residual mid_point with layer_[i] (== this layer's input x), then LN + ReLU
        s = _mid_point_space(_time_of(out_s, k), out_s, x_t, x_s, k)
        o_ref[...] = _ln_relu(s, g_ref, be_ref, eps).astype(o_ref.dtype)


def _out_linear_kernel(x_ref, w_s_ref, w_t_ref, b_ref, t_ref, s_ref,
                       *, k_in, k_out, out_scale):
    """Final HypLinear; the hyperbolic time is a separate lane-dense output."""
    x_s = x_ref[...].astype(jnp.float32)
    x_t = _time_of(x_s, k_in)
    y = _hyp_linear(x_s, x_t, w_s_ref, w_t_ref, b_ref) * jnp.float32(out_scale)
    t_ref[...] = _time_of(y, k_out).astype(t_ref.dtype)
    s_ref[...] = y.astype(s_ref.dtype)


# ============================== wrappers ==============================

def input_stage(x, w_cat, b_cat, gamma, beta):
    n, c_in = x.shape
    hidden = gamma.shape[0]
    tile = _row_tile(n)
    w_t, w_s = w_cat[0:1, :], w_cat[1:, :]
    kern = functools.partial(_input_stage_kernel, k_in=K_IN, k_hid=K_HID,
                             out_scale=math.sqrt(K_HID / K_IN), eps=LN_EPS,
                             hidden=hidden)
    return pl.pallas_call(
        kern,
        out_shape=jax.ShapeDtypeStruct((n, hidden), jnp.float32),
        grid=(n // tile,),
        in_specs=[
            pl.BlockSpec((tile, c_in), lambda i: (i, 0)),
            pl.BlockSpec((c_in, 2 * hidden), lambda i: (0, 0)),
            pl.BlockSpec((1, 2 * hidden), lambda i: (0, 0)),
            pl.BlockSpec((1, 2 * hidden), lambda i: (0, 0)),
            pl.BlockSpec((1, hidden), lambda i: (0, 0)),
            pl.BlockSpec((1, hidden), lambda i: (0, 0)),
        ],
        out_specs=pl.BlockSpec((tile, hidden), lambda i: (i, 0)),
        compiler_params=pltpu.CompilerParams(dimension_semantics=("parallel",)),
    )(x, w_s, w_t, b_cat.reshape(1, -1), gamma.reshape(1, -1), beta.reshape(1, -1))


def transconv_layer(x_s, cp, gamma, beta):
    n, hidden = x_s.shape
    tile = _row_tile(n)
    nt = n // tile
    # fused projection weights: phase 0 uses [Wk | Wv], phase 1 uses [Wq | Wv]
    wkv = jnp.concatenate([cp["wk"], cp["wv"]], axis=1)        # [1+H, 2H]
    wqv = jnp.concatenate([cp["wq"], cp["wv"]], axis=1)        # [1+H, 2H]
    bkv = jnp.concatenate([cp["bk"], cp["bv"]]).reshape(1, -1)
    bqv = jnp.concatenate([cp["bq"], cp["bv"]]).reshape(1, -1)

    def full(shape):
        return pl.BlockSpec(shape, lambda p, i: (0, 0))

    kern = functools.partial(_layer_kernel, k=K_HID, eps=LN_EPS, hidden=hidden)
    return pl.pallas_call(
        kern,
        out_shape=jax.ShapeDtypeStruct((n, hidden), jnp.float32),
        grid=(2, nt),                 # (phase, row tile) -- phase 1 consumes phase 0
        in_specs=[
            pl.BlockSpec((tile, hidden), lambda p, i: (i, 0)),
            full((hidden, 2 * hidden)), full((1, 2 * hidden)), full((1, 2 * hidden)),
            full((hidden, 2 * hidden)), full((1, 2 * hidden)), full((1, 2 * hidden)),
            full((hidden, hidden)), full((1, hidden)),
            full((1, hidden)), full((1, hidden)),
        ],
        # phase 0 never writes: park the output window on block 0 so nothing is
        # flushed until phase 1 has fully written each row tile.
        out_specs=pl.BlockSpec((tile, hidden), lambda p, i: (p * i, 0)),
        scratch_shapes=[pltpu.VMEM((hidden, hidden), jnp.float32),   # PhiK^T V
                        pltpu.VMEM((1, hidden), jnp.float32)],       # sum(PhiK)
        compiler_params=pltpu.CompilerParams(
            dimension_semantics=("arbitrary", "arbitrary")),
    )(x_s, wkv[1:], wkv[0:1], bkv, wqv[1:], wqv[0:1], bqv,
      cp["vmap_w"], cp["vmap_b"].reshape(1, -1),
      gamma.reshape(1, -1), beta.reshape(1, -1))


def hyp_linear_out(x_s, w, b):
    n, hidden = x_s.shape
    d_out = w.shape[1]
    tile = _row_tile(n)
    kern = functools.partial(_out_linear_kernel, k_in=K_HID, k_out=K_OUT,
                             out_scale=math.sqrt(K_OUT / K_HID))
    t, s = pl.pallas_call(
        kern,
        out_shape=(jax.ShapeDtypeStruct((n, 1), jnp.float32),
                   jax.ShapeDtypeStruct((n, d_out), jnp.float32)),
        grid=(n // tile,),
        in_specs=[
            pl.BlockSpec((tile, hidden), lambda i: (i, 0)),
            pl.BlockSpec((hidden, d_out), lambda i: (0, 0)),
            pl.BlockSpec((1, d_out), lambda i: (0, 0)),
            pl.BlockSpec((1, d_out), lambda i: (0, 0)),
        ],
        out_specs=(pl.BlockSpec((tile, 1), lambda i: (i, 0)),
                   pl.BlockSpec((tile, d_out), lambda i: (i, 0))),
        compiler_params=pltpu.CompilerParams(dimension_semantics=("parallel",)),
    )(x_s, w[1:], w[0:1], b.reshape(1, -1))
    return jnp.concatenate([t, s], axis=-1)     # [time | space], as the module returns


# ============================ parameters / forward ============================

def _xavier(key, din, dout, gain):
    limit = gain * math.sqrt(6.0 / (din + dout))
    return jax.random.uniform(key, (din, dout), jnp.float32, -limit, limit)


def init_params(key, in_channels, hidden):
    ks = jax.random.split(key, 4 + 4 * NUM_LAYERS)
    g = math.sqrt(2)  # HypLinear xavier gain
    p = {
        "fc0_w": _xavier(ks[0], in_channels + 1, hidden, g),
        "fc0_b": jnp.zeros((hidden,), jnp.float32),
        "pos_w": _xavier(ks[1], in_channels + 1, hidden, g),
        "pos_b": jnp.zeros((hidden,), jnp.float32),
        "bn_g": [jnp.ones((hidden,), jnp.float32) for _ in range(NUM_LAYERS + 1)],
        "bn_b": [jnp.zeros((hidden,), jnp.float32) for _ in range(NUM_LAYERS + 1)],
        "fc_out_w": _xavier(ks[2], hidden + 1, hidden, g),
        "fc_out_b": jnp.zeros((hidden,), jnp.float32),
        "convs": [],
    }
    idx = 3
    for _ in range(NUM_LAYERS):
        p["convs"].append({
            "wq": _xavier(ks[idx + 0], hidden + 1, hidden, g),
            "bq": jnp.zeros((hidden,), jnp.float32),
            "wk": _xavier(ks[idx + 1], hidden + 1, hidden, g),
            "bk": jnp.zeros((hidden,), jnp.float32),
            "wv": _xavier(ks[idx + 2], hidden + 1, hidden, g),
            "bv": jnp.zeros((hidden,), jnp.float32),
            "vmap_w": _xavier(ks[idx + 3], hidden, hidden, 1.0),  # v_map_mlp (nn.Linear)
            "vmap_b": jnp.zeros((hidden,), jnp.float32),
        })
        idx += 4
    return p


def transconv_forward(params, x_input):
    # fcs[0] / positional_embedding consume Euclidean input (x_manifold='euc')
    w_cat = jnp.concatenate([params["fc0_w"], params["pos_w"]], axis=1)
    b_cat = jnp.concatenate([params["fc0_b"], params["pos_b"]])
    x_s = input_stage(x_input, w_cat, b_cat, params["bn_g"][0], params["bn_b"][0])
    # TODO(synk): HypDropout is stochastic; implemented as eval-mode identity.
    for i in range(NUM_LAYERS):
        x_s = transconv_layer(x_s, params["convs"][i],
                              params["bn_g"][i + 1], params["bn_b"][i + 1])
    return hyp_linear_out(x_s, params["fc_out_w"], params["fc_out_b"])


if __name__ == "__main__":
    N, C_IN, HIDDEN = 64, 16, 32
    key = jax.random.PRNGKey(0)
    kp, kx = jax.random.split(key)
    params = init_params(kp, C_IN, HIDDEN)
    x_input = 0.5 * jax.random.normal(kx, (N, C_IN), jnp.float32)

    out = jax.jit(transconv_forward)(params, x_input)
    out = jax.block_until_ready(out)

    assert out.shape == (N, HIDDEN + 1), out.shape
    assert bool(jnp.all(jnp.isfinite(out)))
    print("KERNEL_OK")
</pallas_src>

<mosaic_0001>
module attributes {stable_mosaic.version = 11 : i64} {
  func.func @_out_linear_kernel(%arg0: i32, %arg1: memref<32x32xf32, #tpu.memory_space<vmem>>, %arg2: memref<32x32xf32, #tpu.memory_space<vmem>>, %arg3: memref<1x32xf32, #tpu.memory_space<vmem>>, %arg4: memref<1x32xf32, #tpu.memory_space<vmem>>, %arg5: memref<32x1xf32, #tpu.memory_space<vmem>>, %arg6: memref<32x32xf32, #tpu.memory_space<vmem>>) attributes {dimension_semantics = [#tpu.dimension_semantics<parallel>], iteration_bounds = array<i64: 2>, scalar_prefetch = 0 : i64, scratch_operands = 0 : i64, tpu.core_type = #tpu.core_type<tc>, window_params = [{transform_indices = @transform_0, window_bounds = array<i64: 32, 32>}, {pipeline_mode = #tpu.pipeline_mode<synchronous>, transform_indices = @transform_1, window_bounds = array<i64: 32, 32>}, {pipeline_mode = #tpu.pipeline_mode<synchronous>, transform_indices = @transform_2, window_bounds = array<i64: 1, 32>}, {pipeline_mode = #tpu.pipeline_mode<synchronous>, transform_indices = @transform_3, window_bounds = array<i64: 1, 32>}, {transform_indices = @transform_4, window_bounds = array<i64: 32, 1>}, {transform_indices = @transform_5, window_bounds = array<i64: 32, 32>}]} {
    %c0 = arith.constant 0 : index
    %c0_0 = arith.constant 0 : index
    %0 = vector.load %arg1[%c0, %c0_0] : memref<32x32xf32, #tpu.memory_space<vmem>>, vector<32x32xf32>
    %1 = arith.mulf %0, %0 : vector<32x32xf32>
    %cst = arith.constant dense<0.000000e+00> : vector<32xf32>
    %2 = vector.multi_reduction <add>, %1, %cst [1] : vector<32x32xf32> to vector<32xf32>
    %3 = vector.shape_cast %2 : vector<32xf32> to vector<32x1xf32>
    %cst_1 = arith.constant 1.000000e+00 : f32
    %4 = vector.broadcast %cst_1 : f32 to vector<32x1xf32>
    %5 = arith.addf %3, %4 : vector<32x1xf32>
    %6 = math.sqrt %5 : vector<32x1xf32>
    %c0_2 = arith.constant 0 : index
    %c0_3 = arith.constant 0 : index
    %7 = vector.load %arg2[%c0_2, %c0_3] : memref<32x32xf32, #tpu.memory_space<vmem>>, vector<32x32xf32>
    %8 = arith.truncf %0 : vector<32x32xf32> to vector<32x32xbf16>
    %9 = arith.truncf %7 : vector<32x32xf32> to vector<32x32xbf16>
    %cst_4 = arith.constant dense<0.000000e+00> : vector<32x32xf32>
    %10 = tpu.matmul %8, %9, %cst_4 {dimension_numbers = #tpu.dot_dimension_numbers<[1], [0], [0], [1], [0, 0, 1, 1], [], []>} : vector<32x32xbf16>, vector<32x32xbf16>, vector<32x32xf32> -> vector<32x32xf32>
    %c0_5 = arith.constant 0 : index
    %c0_6 = arith.constant 0 : index
    %11 = vector.load %arg3[%c0_5, %c0_6] : memref<1x32xf32, #tpu.memory_space<vmem>>, vector<1x32xf32>
    %12 = vector.broadcast %6 : vector<32x1xf32> to vector<32x32xf32>
    %13 = vector.broadcast %11 : vector<1x32xf32> to vector<32x32xf32>
    %14 = arith.mulf %12, %13 : vector<32x32xf32>
    %15 = arith.addf %10, %14 : vector<32x32xf32>
    %c0_7 = arith.constant 0 : index
    %c0_8 = arith.constant 0 : index
    %16 = vector.load %arg4[%c0_7, %c0_8] : memref<1x32xf32, #tpu.memory_space<vmem>>, vector<1x32xf32>
    %17 = vector.broadcast %16 : vector<1x32xf32> to vector<32x32xf32>
    %18 = arith.addf %15, %17 : vector<32x32xf32>
    %cst_9 = arith.constant 1.000000e+00 : f32
    %19 = vector.broadcast %cst_9 : f32 to vector<32x32xf32>
    %20 = arith.mulf %18, %19 : vector<32x32xf32>
    %21 = arith.mulf %20, %20 : vector<32x32xf32>
    %cst_10 = arith.constant dense<0.000000e+00> : vector<32xf32>
    %22 = vector.multi_reduction <add>, %21, %cst_10 [1] : vector<32x32xf32> to vector<32xf32>
    %23 = vector.shape_cast %22 : vector<32xf32> to vector<32x1xf32>
    %cst_11 = arith.constant 1.000000e+00 : f32
    %24 = vector.broadcast %cst_11 : f32 to vector<32x1xf32>
    %25 = arith.addf %23, %24 : vector<32x1xf32>
    %26 = math.sqrt %25 : vector<32x1xf32>
    %c0_12 = arith.constant 0 : index
    %c0_13 = arith.constant 0 : index
    %27 = vector.load %arg5[%c0_12, %c0_13] : memref<32x1xf32, #tpu.memory_space<vmem>>, vector<32x1xf32>
    tpu.vector_store %arg5[%c0_12, %c0_13], %26 {strides = array<i32>} : memref<32x1xf32, #tpu.memory_space<vmem>>, vector<32x1xf32>,
    %c0_14 = arith.constant 0 : index
    %c0_15 = arith.constant 0 : index
    %28 = vector.load %arg6[%c0_14, %c0_15] : memref<32x32xf32, #tpu.memory_space<vmem>>, vector<32x32xf32>
    tpu.vector_store %arg6[%c0_14, %c0_15], %20 {strides = array<i32>} : memref<32x32xf32, #tpu.memory_space<vmem>>, vector<32x32xf32>,
    return
  }
  func.func @transform_0(%arg0: i32) -> (i32, i32) {
    %c0_i32 = arith.constant 0 : i32
    %c0_i32_0 = arith.constant 0 : i32
    return %arg0, %c0_i32 : i32, i32
  }
  func.func @transform_1(%arg0: i32) -> (i32, i32) {
    %c0_i32 = arith.constant 0 : i32
    %c0_i32_0 = arith.constant 0 : i32
    %c0_i32_1 = arith.constant 0 : i32
    return %c0_i32, %c0_i32_0 : i32, i32
  }
  func.func @transform_2(%arg0: i32) -> (i32, i32) {
    %c0_i32 = arith.constant 0 : i32
    %c0_i32_0 = arith.constant 0 : i32
    %c0_i32_1 = arith.constant 0 : i32
    return %c0_i32, %c0_i32_0 : i32, i32
  }
  func.func @transform_3(%arg0: i32) -> (i32, i32) {
    %c0_i32 = arith.constant 0 : i32
    %c0_i32_0 = arith.constant 0 : i32
    %c0_i32_1 = arith.constant 0 : i32
    return %c0_i32, %c0_i32_0 : i32, i32
  }
  func.func @transform_4(%arg0: i32) -> (i32, i32) {
    %c0_i32 = arith.constant 0 : i32
    %c0_i32_0 = arith.constant 0 : i32
    return %arg0, %c0_i32 : i32, i32
  }
  func.func @transform_5(%arg0: i32) -> (i32, i32) {
    %c0_i32 = arith.constant 0 : i32
    %c0_i32_0 = arith.constant 0 : i32
    return %arg0, %c0_i32 : i32, i32
  }
}

module attributes {stable_mosaic.version = 11 : i64} {
  func.func @_input_stage_kernel(%arg0: i32, %arg1: memref<32x16xf32, #tpu.memory_space<vmem>>, %arg2: memref<16x64xf32, #tpu.memory_space<vmem>>, %arg3: memref<1x64xf32, #tpu.memory_space<vmem>>, %arg4: memref<1x64xf32, #tpu.memory_space<vmem>>, %arg5: memref<1x32xf32, #tpu.memory_space<vmem>>, %arg6: memref<1x32xf32, #tpu.memory_space<vmem>>, %arg7: memref<32x32xf32, #tpu.memory_space<vmem>>) attributes {dimension_semantics = [#tpu.dimension_semantics<parallel>], iteration_bounds = array<i64: 2>, scalar_prefetch = 0 : i64, scratch_operands = 0 : i64, tpu.core_type = #tpu.core_type<tc>, window_params = [{transform_indices = @transform_0, window_bounds = array<i64: 32, 16>}, {pipeline_mode = #tpu.pipeline_mode<synchronous>, transform_indices = @transform_1, window_bounds = array<i64: 16, 64>}, {pipeline_mode = #tpu.pipeline_mode<synchronous>, transform_indices = @transform_2, window_bounds = array<i64: 1, 64>}, {pipeline_mode = #tpu.pipeline_mode<synchronous>, transform_indices = @transform_3, window_bounds = array<i64: 1, 64>}, {pipeline_mode = #tpu.pipeline_mode<synchronous>, transform_indices = @transform_4, window_bounds = array<i64: 1, 32>}, {pipeline_mode = #tpu.pipeline_mode<synchronous>, transform_indices = @transform_5, window_bounds = array<i64: 1, 32>}, {transform_indices = @transform_6, window_bounds = array<i64: 32, 32>}]} {
    %c0 = arith.constant 0 : index
    %c0_0 = arith.constant 0 : index
    %0 = vector.load %arg1[%c0, %c0_0] : memref<32x16xf32, #tpu.memory_space<vmem>>, vector<32x16xf32>
    %1 = arith.mulf %0, %0 : vector<32x16xf32>
    %cst = arith.constant dense<0.000000e+00> : vector<32xf32>
    %2 = vector.multi_reduction <add>, %1, %cst [1] : vector<32x16xf32> to vector<32xf32>
    %3 = vector.shape_cast %2 : vector<32xf32> to vector<32x1xf32>
    %cst_1 = arith.constant 1.000000e+00 : f32
    %4 = vector.broadcast %cst_1 : f32 to vector<32x1xf32>
    %5 = arith.subf %3, %4 : vector<32x1xf32>
    %cst_2 = arith.constant 9.99999993E-9 : f32
    %6 = vector.broadcast %cst_2 : f32 to vector<32x1xf32>
    %7 = arith.maximumf %5, %6 : vector<32x1xf32>
    %8 = math.sqrt %7 : vector<32x1xf32>
    %cst_3 = arith.constant 1.000000e+00 : f32
    %9 = vector.broadcast %cst_3 : f32 to vector<32x1xf32>
    %10 = arith.mulf %8, %9 : vector<32x1xf32>
    %11 = math.exp %10 : vector<32x1xf32>
    %12 = tpu.reciprocal %11 {approx = true} : vector<32x1xf32> -> vector<32x1xf32>
    %13 = arith.addf %11, %12 : vector<32x1xf32>
    %cst_4 = arith.constant 5.000000e-01 : f32
    %14 = vector.broadcast %cst_4 : f32 to vector<32x1xf32>
    %15 = arith.mulf %14, %13 : vector<32x1xf32>
    %16 = arith.subf %11, %12 : vector<32x1xf32>
    %cst_5 = arith.constant 5.000000e-01 : f32
    %17 = vector.broadcast %cst_5 : f32 to vector<32x1xf32>
    %18 = arith.mulf %17, %16 : vector<32x1xf32>
    %cst_6 = arith.constant 1.000000e+00 : f32
    %19 = vector.broadcast %cst_6 : f32 to vector<32x1xf32>
    %20 = arith.mulf %19, %18 : vector<32x1xf32>
    %21 = tpu.reciprocal %8 {approx = true} : vector<32x1xf32> -> vector<32x1xf32>
    %22 = arith.mulf %20, %21 : vector<32x1xf32>
    %cst_7 = arith.constant 1.000000e+00 : f32
    %23 = vector.broadcast %cst_7 : f32 to vector<32x1xf32>
    %24 = arith.mulf %15, %23 : vector<32x1xf32>
    %25 = arith.addf %24, %22 : vector<32x1xf32>
    %26 = vector.broadcast %22 : vector<32x1xf32> to vector<32x16xf32>
    %27 = arith.mulf %26, %0 : vector<32x16xf32>
    %c0_8 = arith.constant 0 : index
    %c0_9 = arith.constant 0 : index
    %28 = vector.load %arg2[%c0_8, %c0_9] : memref<16x64xf32, #tpu.memory_space<vmem>>, vector<16x64xf32>
    %29 = arith.truncf %27 : vector<32x16xf32> to vector<32x16xbf16>
    %30 = arith.truncf %28 : vector<16x64xf32> to vector<16x64xbf16>
    %cst_10 = arith.constant dense<0.000000e+00> : vector<32x64xf32>
    %31 = tpu.matmul %29, %30, %cst_10 {dimension_numbers = #tpu.dot_dimension_numbers<[1], [0], [0], [1], [0, 0, 1, 1], [], []>} : vector<32x16xbf16>, vector<16x64xbf16>, vector<32x64xf32> -> vector<32x64xf32>
    %c0_11 = arith.constant 0 : index
    %c0_12 = arith.constant 0 : index
    %32 = vector.load %arg3[%c0_11, %c0_12] : memref<1x64xf32, #tpu.memory_space<vmem>>, vector<1x64xf32>
    %33 = vector.broadcast %25 : vector<32x1xf32> to vector<32x64xf32>
    %34 = vector.broadcast %32 : vector<1x64xf32> to vector<32x64xf32>
    %35 = arith.mulf %33, %34 : vector<32x64xf32>
    %36 = arith.addf %31, %35 : vector<32x64xf32>
    %c0_13 = arith.constant 0 : index
    %c0_14 = arith.constant 0 : index
    %37 = vector.load %arg4[%c0_13, %c0_14] : memref<1x64xf32, #tpu.memory_space<vmem>>, vector<1x64xf32>
    %38 = vector.broadcast %37 : vector<1x64xf32> to vector<32x64xf32>
    %39 = arith.addf %36, %38 : vector<32x64xf32>
    %cst_15 = arith.constant 1.000000e+00 : f32
    %40 = vector.broadcast %cst_15 : f32 to vector<32x64xf32>
    %41 = arith.mulf %39, %40 : vector<32x64xf32>
    %42 = vector.extract_strided_slice %41 {offsets = [0, 0], sizes = [32, 32], strides = [1, 1]} : vector<32x64xf32> to vector<32x32xf32>
    %43 = vector.extract_strided_slice %41 {offsets = [0, 32], sizes = [32, 32], strides = [1, 1]} : vector<32x64xf32> to vector<32x32xf32>
    %44 = arith.mulf %42, %42 : vector<32x32xf32>
    %cst_16 = arith.constant dense<0.000000e+00> : vector<32xf32>
    %45 = vector.multi_reduction <add>, %44, %cst_16 [1] : vector<32x32xf32> to vector<32xf32>
    %46 = vector.shape_cast %45 : vector<32xf32> to vector<32x1xf32>
    %cst_17 = arith.constant 1.000000e+00 : f32
    %47 = vector.broadcast %cst_17 : f32 to vector<32x1xf32>
    %48 = arith.addf %46, %47 : vector<32x1xf32>
    %49 = math.sqrt %48 : vector<32x1xf32>
    %50 = arith.mulf %43, %43 : vector<32x32xf32>
    %cst_18 = arith.constant dense<0.000000e+00> : vector<32xf32>
    %51 = vector.multi_reduction <add>, %50, %cst_18 [1] : vector<32x32xf32> to vector<32xf32>
    %52 = vector.shape_cast %51 : vector<32xf32> to vector<32x1xf32>
    %cst_19 = arith.constant 1.000000e+00 : f32
    %53 = vector.broadcast %cst_19 : f32 to vector<32x1xf32>
    %54 = arith.addf %52, %53 : vector<32x1xf32>
    %55 = math.sqrt %54 : vector<32x1xf32>
    %56 = arith.addf %49, %55 : vector<32x1xf32>
    %cst_20 = arith.constant 5.000000e-01 : f32
    %57 = vector.broadcast %cst_20 : f32 to vector<32x1xf32>
    %58 = arith.mulf %57, %56 : vector<32x1xf32>
    %59 = arith.addf %42, %43 : vector<32x32xf32>
    %cst_21 = arith.constant 5.000000e-01 : f32
    %60 = vector.broadcast %cst_21 : f32 to vector<32x32xf32>
    %61 = arith.mulf %60, %59 : vector<32x32xf32>
    %cst_22 = arith.constant 0.000000e+00 : f32
    %62 = vector.broadcast %cst_22 : f32 to vector<32x1xf32>
    %63 = arith.subf %62, %58 : vector<32x1xf32>
    %64 = arith.mulf %63, %58 : vector<32x1xf32>
    %65 = arith.mulf %61, %61 : vector<32x32xf32>
    %cst_23 = arith.constant dense<0.000000e+00> : vector<32xf32>
    %66 = vector.multi_reduction <add>, %65, %cst_23 [1] : vector<32x32xf32> to vector<32xf32>
    %67 = vector.shape_cast %66 : vector<32xf32> to vector<32x1xf32>
    %68 = arith.addf %64, %67 : vector<32x1xf32>
    %69 = math.absf %68 : vector<32x1xf32>
    %cst_24 = arith.constant 9.99999993E-9 : f32
    %70 = vector.broadcast %cst_24 : f32 to vector<32x1xf32>
    %71 = arith.maximumf %69, %70 : vector<32x1xf32>
    %72 = math.sqrt %71 : vector<32x1xf32>
    %cst_25 = arith.constant 1.000000e+00 : f32
    %73 = vector.broadcast %cst_25 : f32 to vector<32x32xf32>
    %74 = arith.mulf %73, %61 : vector<32x32xf32>
    %75 = tpu.reciprocal %72 {approx = true} : vector<32x1xf32> -> vector<32x1xf32>
    %76 = vector.broadcast %75 : vector<32x1xf32> to vector<32x32xf32>
    %77 = arith.mulf %74, %76 : vector<32x32xf32>
    %cst_26 = arith.constant dense<0.000000e+00> : vector<32xf32>
    %78 = vector.multi_reduction <add>, %77, %cst_26 [1] : vector<32x32xf32> to vector<32xf32>
    %79 = vector.shape_cast %78 : vector<32xf32> to vector<32x1xf32>
    %cst_27 = arith.constant 3.200000e+01 : f32
    %80 = vector.broadcast %cst_27 : f32 to vector<32x1xf32>
    %81 = arith.divf %79, %80 : vector<32x1xf32>
    %82 = vector.broadcast %81 : vector<32x1xf32> to vector<32x32xf32>
    %83 = arith.subf %77, %82 : vector<32x32xf32>
    %84 = vector.broadcast %81 : vector<32x1xf32> to vector<32x32xf32>
    %85 = arith.subf %77, %84 : vector<32x32xf32>
    %86 = arith.mulf %83, %85 : vector<32x32xf32>
    %cst_28 = arith.constant dense<0.000000e+00> : vector<32xf32>
    %87 = vector.multi_reduction <add>, %86, %cst_28 [1] : vector<32x32xf32> to vector<32xf32>
    %88 = vector.shape_cast %87 : vector<32xf32> to vector<32x1xf32>
    %cst_29 = arith.constant 3.200000e+01 : f32
    %89 = vector.broadcast %cst_29 : f32 to vector<32x1xf32>
    %90 = arith.divf %88, %89 : vector<32x1xf32>
    %91 = vector.broadcast %81 : vector<32x1xf32> to vector<32x32xf32>
    %92 = arith.subf %77, %91 : vector<32x32xf32>
    %cst_30 = arith.constant 9.99999974E-6 : f32
    %93 = vector.broadcast %cst_30 : f32 to vector<32x1xf32>
    %94 = arith.addf %90, %93 : vector<32x1xf32>
    %95 = math.rsqrt %94 : vector<32x1xf32>
    %96 = vector.broadcast %95 : vector<32x1xf32> to vector<32x32xf32>
    %97 = arith.mulf %92, %96 : vector<32x32xf32>
    %c0_31 = arith.constant 0 : index
    %c0_32 = arith.constant 0 : index
    %98 = vector.load %arg5[%c0_31, %c0_32] : memref<1x32xf32, #tpu.memory_space<vmem>>, vector<1x32xf32>
    %99 = vector.broadcast %98 : vector<1x32xf32> to vector<32x32xf32>
    %100 = arith.mulf %97, %99 : vector<32x32xf32>
    %c0_33 = arith.constant 0 : index
    %c0_34 = arith.constant 0 : index
    %101 = vector.load %arg6[%c0_33, %c0_34] : memref<1x32xf32, #tpu.memory_space<vmem>>, vector<1x32xf32>
    %102 = vector.broadcast %101 : vector<1x32xf32> to vector<32x32xf32>
    %103 = arith.addf %100, %102 : vector<32x32xf32>
    %cst_35 = arith.constant 0.000000e+00 : f32
    %104 = vector.broadcast %cst_35 : f32 to vector<32x32xf32>
    %105 = arith.maximumf %103, %104 : vector<32x32xf32>
    %c0_36 = arith.constant 0 : index
    %c0_37 = arith.constant 0 : index
    %106 = vector.load %arg7[%c0_36, %c0_37] : memref<32x32xf32, #tpu.memory_space<vmem>>, vector<32x32xf32>
    tpu.vector_store %arg7[%c0_36, %c0_37], %105 {strides = array<i32>} : memref<32x32xf32, #tpu.memory_space<vmem>>, vector<32x32xf32>,
    return
  }
  func.func @transform_0(%arg0: i32) -> (i32, i32) {
    %c0_i32 = arith.constant 0 : i32
    %c0_i32_0 = arith.constant 0 : i32
    return %arg0, %c0_i32 : i32, i32
  }
  func.func @transform_1(%arg0: i32) -> (i32, i32) {
    %c0_i32 = arith.constant 0 : i32
    %c0_i32_0 = arith.constant 0 : i32
    %c0_i32_1 = arith.constant 0 : i32
    return %c0_i32, %c0_i32_0 : i32, i32
  }
  func.func @transform_2(%arg0: i32) -> (i32, i32) {
    %c0_i32 = arith.constant 0 : i32
    %c0_i32_0 = arith.constant 0 : i32
    %c0_i32_1 = arith.constant 0 : i32
    return %c0_i32, %c0_i32_0 : i32, i32
  }
  func.func @transform_3(%arg0: i32) -> (i32, i32) {
    %c0_i32 = arith.constant 0 : i32
    %c0_i32_0 = arith.constant 0 : i32
    %c0_i32_1 = arith.constant 0 : i32
    return %c0_i32, %c0_i32_0 : i32, i32
  }
  func.func @transform_4(%arg0: i32) -> (i32, i32) {
    %c0_i32 = arith.constant 0 : i32
    %c0_i32_0 = arith.constant 0 : i32
    %c0_i32_1 = arith.constant 0 : i32
    return %c0_i32, %c0_i32_0 : i32, i32
  }
  func.func @transform_5(%arg0: i32) -> (i32, i32) {
    %c0_i32 = arith.constant 0 : i32
    %c0_i32_0 = arith.constant 0 : i32
    %c0_i32_1 = arith.constant 0 : i32
    return %c0_i32, %c0_i32_0 : i32, i32
  }
  func.func @transform_6(%arg0: i32) -> (i32, i32) {
    %c0_i32 = arith.constant 0 : i32
    %c0_i32_0 = arith.constant 0 : i32
    return %arg0, %c0_i32 : i32, i32
  }
}

module attributes {stable_mosaic.version = 11 : i64} {
  func.func @_layer_kernel(%arg0: i32, %arg1: i32, %arg2: memref<32x32xf32, #tpu.memory_space<vmem>>, %arg3: memref<32x64xf32, #tpu.memory_space<vmem>>, %arg4: memref<1x64xf32, #tpu.memory_space<vmem>>, %arg5: memref<1x64xf32, #tpu.memory_space<vmem>>, %arg6: memref<32x64xf32, #tpu.memory_space<vmem>>, %arg7: memref<1x64xf32, #tpu.memory_space<vmem>>, %arg8: memref<1x64xf32, #tpu.memory_space<vmem>>, %arg9: memref<32x32xf32, #tpu.memory_space<vmem>>, %arg10: memref<1x32xf32, #tpu.memory_space<vmem>>, %arg11: memref<1x32xf32, #tpu.memory_space<vmem>>, %arg12: memref<1x32xf32, #tpu.memory_space<vmem>>, %arg13: memref<32x32xf32, #tpu.memory_space<vmem>>, %arg14: memref<32x32xf32, #tpu.memory_space<vmem>>, %arg15: memref<1x32xf32, #tpu.memory_space<vmem>>) attributes {dimension_semantics = [#tpu.dimension_semantics<arbitrary>, #tpu.dimension_semantics<arbitrary>], iteration_bounds = array<i64: 2, 2>, scalar_prefetch = 0 : i64, scratch_operands = 2 : i64, tpu.core_type = #tpu.core_type<tc>, window_params = [{transform_indices = @transform_0, window_bounds = array<i64: 32, 32>}, {pipeline_mode = #tpu.pipeline_mode<synchronous>, transform_indices = @transform_1, window_bounds = array<i64: 32, 64>}, {pipeline_mode = #tpu.pipeline_mode<synchronous>, transform_indices = @transform_2, window_bounds = array<i64: 1, 64>}, {pipeline_mode = #tpu.pipeline_mode<synchronous>, transform_indices = @transform_3, window_bounds = array<i64: 1, 64>}, {pipeline_mode = #tpu.pipeline_mode<synchronous>, transform_indices = @transform_4, window_bounds = array<i64: 32, 64>}, {pipeline_mode = #tpu.pipeline_mode<synchronous>, transform_indices = @transform_5, window_bounds = array<i64: 1, 64>}, {pipeline_mode = #tpu.pipeline_mode<synchronous>, transform_indices = @transform_6, window_bounds = array<i64: 1, 64>}, {pipeline_mode = #tpu.pipeline_mode<synchronous>, transform_indices = @transform_7, window_bounds = array<i64: 32, 32>}, {pipeline_mode = #tpu.pipeline_mode<synchronous>, transform_indices = @transform_8, window_bounds = array<i64: 1, 32>}, {pipeline_mode = #tpu.pipeline_mode<synchronous>, transform_indices = @transform_9, window_bounds = array<i64: 1, 32>}, {pipeline_mode = #tpu.pipeline_mode<synchronous>, transform_indices = @transform_10, window_bounds = array<i64: 1, 32>}, {transform_indices = @transform_11, window_bounds = array<i64: 32, 32>}]} {
    %c0 = arith.constant 0 : index
    %c0_0 = arith.constant 0 : index
    %0 = vector.load %arg2[%c0, %c0_0] : memref<32x32xf32, #tpu.memory_space<vmem>>, vector<32x32xf32>
    %1 = arith.mulf %0, %0 : vector<32x32xf32>
    %cst = arith.constant dense<0.000000e+00> : vector<32xf32>
    %2 = vector.multi_reduction <add>, %1, %cst [1] : vector<32x32xf32> to vector<32xf32>
    %3 = vector.shape_cast %2 : vector<32xf32> to vector<32x1xf32>
    %cst_1 = arith.constant 1.000000e+00 : f32
    %4 = vector.broadcast %cst_1 : f32 to vector<32x1xf32>
    %5 = arith.addf %3, %4 : vector<32x1xf32>
    %6 = math.sqrt %5 : vector<32x1xf32>
    %c0_i32 = arith.constant 0 : i32
    %7 = arith.cmpi eq, %arg0, %c0_i32 : i32
    %8 = arith.extui %7 : i1 to i32
    %c0_i32_2 = arith.constant 0 : i32
    %9 = arith.cmpi ne, %8, %c0_i32_2 : i32
    scf.if %9 {
      %c0_i32_4 = arith.constant 0 : i32
      %13 = arith.cmpi eq, %arg1, %c0_i32_4 : i32
      %14 = arith.extui %13 : i1 to i32
      %c0_i32_5 = arith.constant 0 : i32
      %15 = arith.cmpi ne, %14, %c0_i32_5 : i32
      scf.if %15 {
        %cst_28 = arith.constant 0.000000e+00 : f32
        %60 = vector.broadcast %cst_28 : f32 to vector<32x32xf32>
        %c0_29 = arith.constant 0 : index
        %c0_30 = arith.constant 0 : index
        %61 = vector.load %arg14[%c0_29, %c0_30] : memref<32x32xf32, #tpu.memory_space<vmem>>, vector<32x32xf32>
        tpu.vector_store %arg14[%c0_29, %c0_30], %60 {strides = array<i32>} : memref<32x32xf32, #tpu.memory_space<vmem>>, vector<32x32xf32>,
        %cst_31 = arith.constant 0.000000e+00 : f32
        %62 = vector.broadcast %cst_31 : f32 to vector<1x32xf32>
        %c0_32 = arith.constant 0 : index
        %c0_33 = arith.constant 0 : index
        %63 = vector.load %arg15[%c0_32, %c0_33] : memref<1x32xf32, #tpu.memory_space<vmem>>, vector<1x32xf32>
        tpu.vector_store %arg15[%c0_32, %c0_33], %62 {strides = array<i32>} : memref<1x32xf32, #tpu.memory_space<vmem>>, vector<1x32xf32>,
      } else {
      }
      %c0_6 = arith.constant 0 : index
      %c0_7 = arith.constant 0 : index
      %16 = vector.load %arg3[%c0_6, %c0_7] : memref<32x64xf32, #tpu.memory_space<vmem>>, vector<32x64xf32>
      %17 = arith.truncf %0 : vector<32x32xf32> to vector<32x32xbf16>
      %18 = arith.truncf %16 : vector<32x64xf32> to vector<32x64xbf16>
      %cst_8 = arith.constant dense<0.000000e+00> : vector<32x64xf32>
      %19 = tpu.matmul %17, %18, %cst_8 {dimension_numbers = #tpu.dot_dimension_numbers<[1], [0], [0], [1], [0, 0, 1, 1], [], []>} : vector<32x32xbf16>, vector<32x64xbf16>, vector<32x64xf32> -> vector<32x64xf32>
      %c0_9 = arith.constant 0 : index
      %c0_10 = arith.constant 0 : index
      %20 = vector.load %arg4[%c0_9, %c0_10] : memref<1x64xf32, #tpu.memory_space<vmem>>, vector<1x64xf32>
      %21 = vector.broadcast %6 : vector<32x1xf32> to vector<32x64xf32>
      %22 = vector.broadcast %20 : vector<1x64xf32> to vector<32x64xf32>
      %23 = arith.mulf %21, %22 : vector<32x64xf32>
      %24 = arith.addf %19, %23 : vector<32x64xf32>
      %c0_11 = arith.constant 0 : index
      %c0_12 = arith.constant 0 : index
      %25 = vector.load %arg5[%c0_11, %c0_12] : memref<1x64xf32, #tpu.memory_space<vmem>>, vector<1x64xf32>
      %26 = vector.broadcast %25 : vector<1x64xf32> to vector<32x64xf32>
      %27 = arith.addf %24, %26 : vector<32x64xf32>
      %28 = vector.extract_strided_slice %27 {offsets = [0, 0], sizes = [32, 32], strides = [1, 1]} : vector<32x64xf32> to vector<32x32xf32>
      %29 = vector.extract_strided_slice %27 {offsets = [0, 32], sizes = [32, 32], strides = [1, 1]} : vector<32x64xf32> to vector<32x32xf32>
      %cst_13 = arith.constant 0.000000e+00 : f32
      %30 = vector.broadcast %cst_13 : f32 to vector<32x32xf32>
      %31 = arith.maximumf %28, %30 : vector<32x32xf32>
      %cst_14 = arith.constant 9.99999997E-7 : f32
      %32 = vector.broadcast %cst_14 : f32 to vector<32x32xf32>
      %33 = arith.addf %31, %32 : vector<32x32xf32>
      %cst_15 = arith.constant 1.000000e+00 : f32
      %34 = vector.broadcast %cst_15 : f32 to vector<32x32xf32>
      %35 = arith.mulf %33, %34 : vector<32x32xf32>
      %36 = arith.mulf %35, %35 : vector<32x32xf32>
      %cst_16 = arith.constant dense<0.000000e+00> : vector<32xf32>
      %37 = vector.multi_reduction <add>, %36, %cst_16 [1] : vector<32x32xf32> to vector<32xf32>
      %38 = vector.shape_cast %37 : vector<32xf32> to vector<32x1xf32>
      %39 = math.sqrt %38 : vector<32x1xf32>
      %40 = arith.mulf %35, %35 : vector<32x32xf32>
      %41 = arith.mulf %40, %40 : vector<32x32xf32>
      %cst_17 = arith.constant dense<0.000000e+00> : vector<32xf32>
      %42 = vector.multi_reduction <add>, %41, %cst_17 [1] : vector<32x32xf32> to vector<32xf32>
      %43 = vector.shape_cast %42 : vector<32xf32> to vector<32x1xf32>
      %44 = math.sqrt %43 : vector<32x1xf32>
      %45 = tpu.reciprocal %44 {approx = true} : vector<32x1xf32> -> vector<32x1xf32>
      %46 = arith.mulf %39, %45 : vector<32x1xf32>
      %47 = vector.broadcast %46 : vector<32x1xf32> to vector<32x32xf32>
      %48 = arith.mulf %47, %40 : vector<32x32xf32>
      %c0_18 = arith.constant 0 : index
      %c0_19 = arith.constant 0 : index
      %49 = vector.load %arg14[%c0_18, %c0_19] : memref<32x32xf32, #tpu.memory_space<vmem>>, vector<32x32xf32>
      %50 = arith.truncf %48 : vector<32x32xf32> to vector<32x32xbf16>
      %51 = arith.truncf %29 : vector<32x32xf32> to vector<32x32xbf16>
      %cst_20 = arith.constant dense<0.000000e+00> : vector<32x32xf32>
      %52 = tpu.matmul %50, %51, %cst_20 {dimension_numbers = #tpu.dot_dimension_numbers<[0], [0], [1], [1], [0, 1, 1, 1], [], []>} : vector<32x32xbf16>, vector<32x32xbf16>, vector<32x32xf32> -> vector<32x32xf32>
      %53 = arith.addf %49, %52 : vector<32x32xf32>
      %c0_21 = arith.constant 0 : index
      %c0_22 = arith.constant 0 : index
      %54 = vector.load %arg14[%c0_21, %c0_22] : memref<32x32xf32, #tpu.memory_space<vmem>>, vector<32x32xf32>
      tpu.vector_store %arg14[%c0_21, %c0_22], %53 {strides = array<i32>} : memref<32x32xf32, #tpu.memory_space<vmem>>, vector<32x32xf32>,
      %c0_23 = arith.constant 0 : index
      %c0_24 = arith.constant 0 : index
      %55 = vector.load %arg15[%c0_23, %c0_24] : memref<1x32xf32, #tpu.memory_space<vmem>>, vector<1x32xf32>
      %cst_25 = arith.constant dense<0.000000e+00> : vector<32xf32>
      %56 = vector.multi_reduction <add>, %48, %cst_25 [0] : vector<32x32xf32> to vector<32xf32>
      %57 = vector.shape_cast %56 : vector<32xf32> to vector<1x32xf32>
      %58 = arith.addf %55, %57 : vector<1x32xf32>
      %c0_26 = arith.constant 0 : index
      %c0_27 = arith.constant 0 : index
      %59 = vector.load %arg15[%c0_26, %c0_27] : memref<1x32xf32, #tpu.memory_space<vmem>>, vector<1x32xf32>
      tpu.vector_store %arg15[%c0_26, %c0_27], %58 {strides = array<i32>} : memref<1x32xf32, #tpu.memory_space<vmem>>, vector<1x32xf32>,
    } else {
    }
    %c1_i32 = arith.constant 1 : i32
    %10 = arith.cmpi eq, %arg0, %c1_i32 : i32
    %11 = arith.extui %10 : i1 to i32
    %c0_i32_3 = arith.constant 0 : i32
    %12 = arith.cmpi ne, %11, %c0_i32_3 : i32
    scf.if %12 {
      %c0_4 = arith.constant 0 : index
      %c0_5 = arith.constant 0 : index
      %13 = vector.load %arg6[%c0_4, %c0_5] : memref<32x64xf32, #tpu.memory_space<vmem>>, vector<32x64xf32>
      %14 = arith.truncf %0 : vector<32x32xf32> to vector<32x32xbf16>
      %15 = arith.truncf %13 : vector<32x64xf32> to vector<32x64xbf16>
      %cst_6 = arith.constant dense<0.000000e+00> : vector<32x64xf32>
      %16 = tpu.matmul %14, %15, %cst_6 {dimension_numbers = #tpu.dot_dimension_numbers<[1], [0], [0], [1], [0, 0, 1, 1], [], []>} : vector<32x32xbf16>, vector<32x64xbf16>, vector<32x64xf32> -> vector<32x64xf32>
      %c0_7 = arith.constant 0 : index
      %c0_8 = arith.constant 0 : index
      %17 = vector.load %arg7[%c0_7, %c0_8] : memref<1x64xf32, #tpu.memory_space<vmem>>, vector<1x64xf32>
      %18 = vector.broadcast %6 : vector<32x1xf32> to vector<32x64xf32>
      %19 = vector.broadcast %17 : vector<1x64xf32> to vector<32x64xf32>
      %20 = arith.mulf %18, %19 : vector<32x64xf32>
      %21 = arith.addf %16, %20 : vector<32x64xf32>
      %c0_9 = arith.constant 0 : index
      %c0_10 = arith.constant 0 : index
      %22 = vector.load %arg8[%c0_9, %c0_10] : memref<1x64xf32, #tpu.memory_space<vmem>>, vector<1x64xf32>
      %23 = vector.broadcast %22 : vector<1x64xf32> to vector<32x64xf32>
      %24 = arith.addf %21, %23 : vector<32x64xf32>
      %25 = vector.extract_strided_slice %24 {offsets = [0, 0], sizes = [32, 32], strides = [1, 1]} : vector<32x64xf32> to vector<32x32xf32>
      %26 = vector.extract_strided_slice %24 {offsets = [0, 32], sizes = [32, 32], strides = [1, 1]} : vector<32x64xf32> to vector<32x32xf32>
      %cst_11 = arith.constant 0.000000e+00 : f32
      %27 = vector.broadcast %cst_11 : f32 to vector<32x32xf32>
      %28 = arith.maximumf %25, %27 : vector<32x32xf32>
      %cst_12 = arith.constant 9.99999997E-7 : f32
      %29 = vector.broadcast %cst_12 : f32 to vector<32x32xf32>
      %30 = arith.addf %28, %29 : vector<32x32xf32>
      %cst_13 = arith.constant 1.000000e+00 : f32
      %31 = vector.broadcast %cst_13 : f32 to vector<32x32xf32>
      %32 = arith.mulf %30, %31 : vector<32x32xf32>
      %33 = arith.mulf %32, %32 : vector<32x32xf32>
      %cst_14 = arith.constant dense<0.000000e+00> : vector<32xf32>
      %34 = vector.multi_reduction <add>, %33, %cst_14 [1] : vector<32x32xf32> to vector<32xf32>
      %35 = vector.shape_cast %34 : vector<32xf32> to vector<32x1xf32>
      %36 = math.sqrt %35 : vector<32x1xf32>
      %37 = arith.mulf %32, %32 : vector<32x32xf32>
      %38 = arith.mulf %37, %37 : vector<32x32xf32>
      %cst_15 = arith.constant dense<0.000000e+00> : vector<32xf32>
      %39 = vector.multi_reduction <add>, %38, %cst_15 [1] : vector<32x32xf32> to vector<32xf32>
      %40 = vector.shape_cast %39 : vector<32xf32> to vector<32x1xf32>
      %41 = math.sqrt %40 : vector<32x1xf32>
      %42 = tpu.reciprocal %41 {approx = true} : vector<32x1xf32> -> vector<32x1xf32>
      %43 = arith.mulf %36, %42 : vector<32x1xf32>
      %44 = vector.broadcast %43 : vector<32x1xf32> to vector<32x32xf32>
      %45 = arith.mulf %44, %37 : vector<32x32xf32>
      %c0_16 = arith.constant 0 : index
      %c0_17 = arith.constant 0 : index
      %46 = vector.load %arg14[%c0_16, %c0_17] : memref<32x32xf32, #tpu.memory_space<vmem>>, vector<32x32xf32>
      %47 = arith.truncf %45 : vector<32x32xf32> to vector<32x32xbf16>
      %48 = arith.truncf %46 : vector<32x32xf32> to vector<32x32xbf16>
      %cst_18 = arith.constant dense<0.000000e+00> : vector<32x32xf32>
      %49 = tpu.matmul %47, %48, %cst_18 {dimension_numbers = #tpu.dot_dimension_numbers<[1], [0], [0], [1], [0, 0, 1, 1], [], []>} : vector<32x32xbf16>, vector<32x32xbf16>, vector<32x32xf32> -> vector<32x32xf32>
      %c0_19 = arith.constant 0 : index
      %c0_20 = arith.constant 0 : index
      %50 = vector.load %arg15[%c0_19, %c0_20] : memref<1x32xf32, #tpu.memory_space<vmem>>, vector<1x32xf32>
      %51 = vector.broadcast %50 : vector<1x32xf32> to vector<32x32xf32>
      %52 = arith.mulf %45, %51 : vector<32x32xf32>
      %cst_21 = arith.constant dense<0.000000e+00> : vector<32xf32>
      %53 = vector.multi_reduction <add>, %52, %cst_21 [1] : vector<32x32xf32> to vector<32xf32>
      %54 = vector.shape_cast %53 : vector<32xf32> to vector<32x1xf32>
      %cst_22 = arith.constant 9.99999997E-7 : f32
      %55 = vector.broadcast %cst_22 : f32 to vector<32x1xf32>
      %56 = arith.addf %54, %55 : vector<32x1xf32>
      %57 = tpu.reciprocal %56 {approx = true} : vector<32x1xf32> -> vector<32x1xf32>
      %58 = vector.broadcast %57 : vector<32x1xf32> to vector<32x32xf32>
      %59 = arith.mulf %49, %58 : vector<32x32xf32>
      %c0_23 = arith.constant 0 : index
      %c0_24 = arith.constant 0 : index
      %60 = vector.load %arg9[%c0_23, %c0_24] : memref<32x32xf32, #tpu.memory_space<vmem>>, vector<32x32xf32>
      %61 = arith.truncf %26 : vector<32x32xf32> to vector<32x32xbf16>
      %62 = arith.truncf %60 : vector<32x32xf32> to vector<32x32xbf16>
      %cst_25 = arith.constant dense<0.000000e+00> : vector<32x32xf32>
      %63 = tpu.matmul %61, %62, %cst_25 {dimension_numbers = #tpu.dot_dimension_numbers<[1], [0], [0], [1], [0, 0, 1, 1], [], []>} : vector<32x32xbf16>, vector<32x32xbf16>, vector<32x32xf32> -> vector<32x32xf32>
      %c0_26 = arith.constant 0 : index
      %c0_27 = arith.constant 0 : index
      %64 = vector.load %arg10[%c0_26, %c0_27] : memref<1x32xf32, #tpu.memory_space<vmem>>, vector<1x32xf32>
      %65 = vector.broadcast %64 : vector<1x32xf32> to vector<32x32xf32>
      %66 = arith.addf %63, %65 : vector<32x32xf32>
      %67 = arith.addf %59, %66 : vector<32x32xf32>
      %68 = arith.mulf %67, %67 : vector<32x32xf32>
      %cst_28 = arith.constant dense<0.000000e+00> : vector<32xf32>
      %69 = vector.multi_reduction <add>, %68, %cst_28 [1] : vector<32x32xf32> to vector<32xf32>
      %70 = vector.shape_cast %69 : vector<32xf32> to vector<32x1xf32>
      %cst_29 = arith.constant 1.000000e+00 : f32
      %71 = vector.broadcast %cst_29 : f32 to vector<32x1xf32>
      %72 = arith.addf %70, %71 : vector<32x1xf32>
      %73 = math.sqrt %72 : vector<32x1xf32>
      %74 = arith.addf %73, %6 : vector<32x1xf32>
      %cst_30 = arith.constant 5.000000e-01 : f32
      %75 = vector.broadcast %cst_30 : f32 to vector<32x1xf32>
      %76 = arith.mulf %75, %74 : vector<32x1xf32>
      %77 = arith.addf %67, %0 : vector<32x32xf32>
      %cst_31 = arith.constant 5.000000e-01 : f32
      %78 = vector.broadcast %cst_31 : f32 to vector<32x32xf32>
      %79 = arith.mulf %78, %77 : vector<32x32xf32>
      %cst_32 = arith.constant 0.000000e+00 : f32
      %80 = vector.broadcast %cst_32 : f32 to vector<32x1xf32>
      %81 = arith.subf %80, %76 : vector<32x1xf32>
      %82 = arith.mulf %81, %76 : vector<32x1xf32>
      %83 = arith.mulf %79, %79 : vector<32x32xf32>
      %cst_33 = arith.constant dense<0.000000e+00> : vector<32xf32>
      %84 = vector.multi_reduction <add>, %83, %cst_33 [1] : vector<32x32xf32> to vector<32xf32>
      %85 = vector.shape_cast %84 : vector<32xf32> to vector<32x1xf32>
      %86 = arith.addf %82, %85 : vector<32x1xf32>
      %87 = math.absf %86 : vector<32x1xf32>
      %cst_34 = arith.constant 9.99999993E-9 : f32
      %88 = vector.broadcast %cst_34 : f32 to vector<32x1xf32>
      %89 = arith.maximumf %87, %88 : vector<32x1xf32>
      %90 = math.sqrt %89 : vector<32x1xf32>
      %cst_35 = arith.constant 1.000000e+00 : f32
      %91 = vector.broadcast %cst_35 : f32 to vector<32x32xf32>
      %92 = arith.mulf %91, %79 : vector<32x32xf32>
      %93 = tpu.reciprocal %90 {approx = true} : vector<32x1xf32> -> vector<32x1xf32>
      %94 = vector.broadcast %93 : vector<32x1xf32> to vector<32x32xf32>
      %95 = arith.mulf %92, %94 : vector<32x32xf32>
      %cst_36 = arith.constant dense<0.000000e+00> : vector<32xf32>
      %96 = vector.multi_reduction <add>, %95, %cst_36 [1] : vector<32x32xf32> to vector<32xf32>
      %97 = vector.shape_cast %96 : vector<32xf32> to vector<32x1xf32>
      %cst_37 = arith.constant 3.200000e+01 : f32
      %98 = vector.broadcast %cst_37 : f32 to vector<32x1xf32>
      %99 = arith.divf %97, %98 : vector<32x1xf32>
      %100 = vector.broadcast %99 : vector<32x1xf32> to vector<32x32xf32>
      %101 = arith.subf %95, %100 : vector<32x32xf32>
      %102 = vector.broadcast %99 : vector<32x1xf32> to vector<32x32xf32>
      %103 = arith.subf %95, %102 : vector<32x32xf32>
      %104 = arith.mulf %101, %103 : vector<32x32xf32>
      %cst_38 = arith.constant dense<0.000000e+00> : vector<32xf32>
      %105 = vector.multi_reduction <add>, %104, %cst_38 [1] : vector<32x32xf32> to vector<32xf32>
      %106 = vector.shape_cast %105 : vector<32xf32> to vector<32x1xf32>
      %cst_39 = arith.constant 3.200000e+01 : f32
      %107 = vector.broadcast %cst_39 : f32 to vector<32x1xf32>
      %108 = arith.divf %106, %107 : vector<32x1xf32>
      %109 = vector.broadcast %99 : vector<32x1xf32> to vector<32x32xf32>
      %110 = arith.subf %95, %109 : vector<32x32xf32>
      %cst_40 = arith.constant 9.99999974E-6 : f32
      %111 = vector.broadcast %cst_40 : f32 to vector<32x1xf32>
      %112 = arith.addf %108, %111 : vector<32x1xf32>
      %113 = math.rsqrt %112 : vector<32x1xf32>
      %114 = vector.broadcast %113 : vector<32x1xf32> to vector<32x32xf32>
      %115 = arith.mulf %110, %114 : vector<32x32xf32>
      %c0_41 = arith.constant 0 : index
      %c0_42 = arith.constant 0 : index
      %116 = vector.load %arg11[%c0_41, %c0_42] : memref<1x32xf32, #tpu.memory_space<vmem>>, vector<1x32xf32>
      %117 = vector.broadcast %116 : vector<1x32xf32> to vector<32x32xf32>
      %118 = arith.mulf %115, %117 : vector<32x32xf32>
      %c0_43 = arith.constant 0 : index
      %c0_44 = arith.constant 0 : index
      %119 = vector.load %arg12[%c0_43, %c0_44] : memref<1x32xf32, #tpu.memory_space<vmem>>, vector<1x32xf32>
      %120 = vector.broadcast %119 : vector<1x32xf32> to vector<32x32xf32>
      %121 = arith.addf %118, %120 : vector<32x32xf32>
      %cst_45 = arith.constant 0.000000e+00 : f32
      %122 = vector.broadcast %cst_45 : f32 to vector<32x32xf32>
      %123 = arith.maximumf %121, %122 : vector<32x32xf32>
      %c0_46 = arith.constant 0 : index
      %c0_47 = arith.constant 0 : index
      %124 = vector.load %arg13[%c0_46, %c0_47] : memref<32x32xf32, #tpu.memory_space<vmem>>, vector<32x32xf32>
      tpu.vector_store %arg13[%c0_46, %c0_47], %123 {strides = array<i32>} : memref<32x32xf32, #tpu.memory_space<vmem>>, vector<32x32xf32>,
    } else {
    }
    return
  }
  func.func @transform_0(%arg0: i32, %arg1: i32) -> (i32, i32) {
    %c0_i32 = arith.constant 0 : i32
    %c0_i32_0 = arith.constant 0 : i32
    return %arg1, %c0_i32 : i32, i32
  }
  func.func @transform_1(%arg0: i32, %arg1: i32) -> (i32, i32) {
    %c0_i32 = arith.constant 0 : i32
    %c0_i32_0 = arith.constant 0 : i32
    %c0_i32_1 = arith.constant 0 : i32
    return %c0_i32, %c0_i32_0 : i32, i32
  }
  func.func @transform_2(%arg0: i32, %arg1: i32) -> (i32, i32) {
    %c0_i32 = arith.constant 0 : i32
    %c0_i32_0 = arith.constant 0 : i32
    %c0_i32_1 = arith.constant 0 : i32
    return %c0_i32, %c0_i32_0 : i32, i32
  }
  func.func @transform_3(%arg0: i32, %arg1: i32) -> (i32, i32) {
    %c0_i32 = arith.constant 0 : i32
    %c0_i32_0 = arith.constant 0 : i32
    %c0_i32_1 = arith.constant 0 : i32
    return %c0_i32, %c0_i32_0 : i32, i32
  }
  func.func @transform_4(%arg0: i32, %arg1: i32) -> (i32, i32) {
    %c0_i32 = arith.constant 0 : i32
    %c0_i32_0 = arith.constant 0 : i32
    %c0_i32_1 = arith.constant 0 : i32
    return %c0_i32, %c0_i32_0 : i32, i32
  }
  func.func @transform_5(%arg0: i32, %arg1: i32) -> (i32, i32) {
    %c0_i32 = arith.constant 0 : i32
    %c0_i32_0 = arith.constant 0 : i32
    %c0_i32_1 = arith.constant 0 : i32
    return %c0_i32, %c0_i32_0 : i32, i32
  }
  func.func @transform_6(%arg0: i32, %arg1: i32) -> (i32, i32) {
    %c0_i32 = arith.constant 0 : i32
    %c0_i32_0 = arith.constant 0 : i32
    %c0_i32_1 = arith.constant 0 : i32
    return %c0_i32, %c0_i32_0 : i32, i32
  }
  func.func @transform_7(%arg0: i32, %arg1: i32) -> (i32, i32) {
    %c0_i32 = arith.constant 0 : i32
    %c0_i32_0 = arith.constant 0 : i32
    %c0_i32_1 = arith.constant 0 : i32
    return %c0_i32, %c0_i32_0 : i32, i32
  }
  func.func @transform_8(%arg0: i32, %arg1: i32) -> (i32, i32) {
    %c0_i32 = arith.constant 0 : i32
    %c0_i32_0 = arith.constant 0 : i32
    %c0_i32_1 = arith.constant 0 : i32
    return %c0_i32, %c0_i32_0 : i32, i32
  }
  func.func @transform_9(%arg0: i32, %arg1: i32) -> (i32, i32) {
    %c0_i32 = arith.constant 0 : i32
    %c0_i32_0 = arith.constant 0 : i32
    %c0_i32_1 = arith.constant 0 : i32
    return %c0_i32, %c0_i32_0 : i32, i32
  }
  func.func @transform_10(%arg0: i32, %arg1: i32) -> (i32, i32) {
    %c0_i32 = arith.constant 0 : i32
    %c0_i32_0 = arith.constant 0 : i32
    %c0_i32_1 = arith.constant 0 : i32
    return %c0_i32, %c0_i32_0 : i32, i32
  }
  func.func @transform_11(%arg0: i32, %arg1: i32) -> (i32, i32) {
    %0 = arith.muli %arg0, %arg1 : i32
    %c0_i32 = arith.constant 0 : i32
    %c0_i32_0 = arith.constant 0 : i32
    return %0, %c0_i32 : i32, i32
  }
}

</mosaic_0001>

<llo_original>
// kernel: transconv_forward.7
$region0: #{transconv_forward.7}
  #allocation0 [shape = 'u32[]', space=smem, size = 0x4, offset = 0x4, fixed_abs, tag = 'smem constant byte address 0x4 - core index']
  #allocation1 [shape = 'u32[72,128]{1,0:T(1,128)}', space=vmem, size = 0x9000, scoped, tag = 'internal scratch']
  %s0 = inlined_call_operand.vmem [shape: f32[64,32], index: 0, kind: input, shape index: {}]
  %s1 = inlined_call_operand.vmem [shape: f32[32,32], index: 1, kind: input, shape index: {}]
  %s2 = inlined_call_operand.vmem [shape: f32[1,32], index: 2, kind: input, shape index: {}]
  %s3 = inlined_call_operand.vmem [shape: f32[1,32], index: 3, kind: input, shape index: {}]
  %s4 = inlined_call_operand.vmem [shape: f32[64,1], index: 4, kind: output, shape index: {0}]
  %s5 = inlined_call_operand.vmem [shape: f32[64,32], index: 5, kind: output, shape index: {1}]
  %6 = xla_tuple %s4, %s5
  %s7 = sld [smem:[#allocation0]]
  $region57: #{transconv_forward.7} parent=0
    _
  %s9 = ssub.s32 1, %s7
  %s10 = scalar_select 0, %s9, %s7
  loop: start=0, step=1, limit=4
  $region2: #{transconv_forward.7} parent=0 // loop_pre_header
    _
  $region3: #{transconv_forward.7} parent=0 // loop_header
    %s12 = sphi 0, %s16
    %p13 = scmp.ge.s32.totalorder %s12, 4
    %s22 = sphi 0, %s24
    %s25 = sphi 0, %s22
    %s26 = sphi 0, %s25
    %s42 = sphi 0, %s26
    %s46 = sphi 0, %s46
    %s48 = sphi 0, %s46
    %s49 = sphi 0, %s48
    %s63 = sphi 0, %s49
    %s67 = sphi 0, %s67
    %s69 = sphi 0, %s67
    %s70 = sphi 0, %s69
    %s84 = sphi 0, %s70
    %s88 = sphi 0, %s88
    %s90 = sphi 0, %s88
    %s91 = sphi 0, %s90
    %s105 = sphi 0, %s91
    %s111 = sphi 0, %s113
    %s114 = sphi 0, %s111
    %s115 = sphi 0, %s114
    %s131 = sphi 0, %s115
    %s137 = sphi 0, %s139
    %s140 = sphi 0, %s137
    %s141 = sphi 0, %s140
    %s157 = sphi 0, %s141
  $region4: #{transconv_forward.7} parent=0 // loop_header_branch
    %15 = sbr.rel (%p13) target = $region8
  $region5: #{transconv_forward.7} parent=0 // loop_body
    %s17 = ssub.s32 %s12, 1
    %s18 = ssub.s32 %s12, 2
    %s19 = sadd.s32 %s12, 1
    %s20 = ssub.s32 %s12, %s19
    %p21 = scmp.eq.s32.totalorder %s20, 0
    %s23 = sadd.s32 %s22, 1
    %s24 = scalar_select %p21, %s22, %s23
    %p27 = pneg %p21
    %p28 = scmp.eq.s32.totalorder %s12, 1
    %p29 = por %p27, %p28
    %p30 = scmp.ne.s32.totalorder %s22, %s25
    %p31 = scmp.eq.s32.totalorder %s12, 0
    %p32 = por %p30, %p31
    %p33 = scmp.ne.s32.totalorder %s22, %s25
    %p34 = scmp.eq.s32.totalorder %s17, 1
    %p35 = por %p33, %p34
    %p36 = scmp.ne.s32.totalorder %s25, %s26
    %p37 = scmp.eq.s32.totalorder %s17, 0
    %p38 = por %p36, %p37
    %p39 = scmp.ne.s32.totalorder %s25, %s26
    %p40 = scmp.eq.s32.totalorder %s18, 1
    %p41 = por %p39, %p40
    %p43 = scmp.ne.s32.totalorder %s26, %s42
    %p44 = scmp.eq.s32.totalorder %s18, 0
    %p45 = por %p43, %p44
    %s47 = sadd.s32 %s46, 1
    %p50 = scmp.eq.s32.totalorder %s12, 1
    %p51 = scmp.ne.s32.totalorder %s46, %s48
    %p52 = scmp.eq.s32.totalorder %s12, 0
    %p53 = por %p51, %p52
    %p54 = scmp.ne.s32.totalorder %s46, %s48
    %p55 = scmp.eq.s32.totalorder %s17, 1
    %p56 = por %p54, %p55
    %p57 = scmp.ne.s32.totalorder %s48, %s49
    %p58 = scmp.eq.s32.totalorder %s17, 0
    %p59 = por %p57, %p58
    %p60 = scmp.ne.s32.totalorder %s48, %s49
    %p61 = scmp.eq.s32.totalorder %s18, 1
    %p62 = por %p60, %p61
    %p64 = scmp.ne.s32.totalorder %s49, %s63
    %p65 = scmp.eq.s32.totalorder %s18, 0
    %p66 = por %p64, %p65
    %s68 = sadd.s32 %s67, 1
    %p71 = scmp.eq.s32.totalorder %s12, 1
    %p72 = scmp.ne.s32.totalorder %s67, %s69
    %p73 = scmp.eq.s32.totalorder %s12, 0
    %p74 = por %p72, %p73
    %p75 = scmp.ne.s32.totalorder %s67, %s69
    %p76 = scmp.eq.s32.totalorder %s17, 1
    %p77 = por %p75, %p76
    %p78 = scmp.ne.s32.totalorder %s69, %s70
    %p79 = scmp.eq.s32.totalorder %s17, 0
    %p80 = por %p78, %p79
    %p81 = scmp.ne.s32.totalorder %s69, %s70
    %p82 = scmp.eq.s32.totalorder %s18, 1
    %p83 = por %p81, %p82
    %p85 = scmp.ne.s32.totalorder %s70, %s84
    %p86 = scmp.eq.s32.totalorder %s18, 0
    %p87 = por %p85, %p86
    %s89 = sadd.s32 %s88, 1
    %p92 = scmp.eq.s32.totalorder %s12, 1
    %p93 = scmp.ne.s32.totalorder %s88, %s90
    %p94 = scmp.eq.s32.totalorder %s12, 0
    %p95 = por %p93, %p94
    %p96 = scmp.ne.s32.totalorder %s88, %s90
    %p97 = scmp.eq.s32.totalorder %s17, 1
    %p98 = por %p96, %p97
    %p99 = scmp.ne.s32.totalorder %s90, %s91
    %p100 = scmp.eq.s32.totalorder %s17, 0
    %p101 = por %p99, %p100
    %p102 = scmp.ne.s32.totalorder %s90, %s91
    %p103 = scmp.eq.s32.totalorder %s18, 1
    %p104 = por %p102, %p103
    %p106 = scmp.ne.s32.totalorder %s91, %s105
    %p107 = scmp.eq.s32.totalorder %s18, 0
    %p108 = por %p106, %p107
    %s109 = ssub.s32 %s12, %s19
    %p110 = scmp.eq.s32.totalorder %s109, 0
    %s112 = sadd.s32 %s111, 1
    %s113 = scalar_select %p110, %s111, %s112
    %p116 = pneg %p110
    %p117 = scmp.eq.s32.totalorder %s12, 1
    %p118 = por %p116, %p117
    %p119 = scmp.ne.s32.totalorder %s111, %s114
    %p120 = scmp.eq.s32.totalorder %s12, 0
    %p121 = por %p119, %p120
    %p122 = scmp.ne.s32.totalorder %s111, %s114
    %p123 = scmp.eq.s32.totalorder %s17, 1
    %p124 = por %p122, %p123
    %p125 = scmp.ne.s32.totalorder %s114, %s115
    %p126 = scmp.eq.s32.totalorder %s17, 0
    %p127 = por %p125, %p126
    %p128 = scmp.ne.s32.totalorder %s114, %s115
    %p129 = scmp.eq.s32.totalorder %s18, 1
    %p130 = por %p128, %p129
    %p132 = scmp.ne.s32.totalorder %s115, %s131
    %p133 = scmp.eq.s32.totalorder %s18, 0
    %p134 = por %p132, %p133
    %s135 = ssub.s32 %s12, %s19
    %p136 = scmp.eq.s32.totalorder %s135, 0
    %s138 = sadd.s32 %s137, 1
    %s139 = scalar_select %p136, %s137, %s138
    %p142 = pneg %p136
    %p143 = scmp.eq.s32.totalorder %s12, 1
    %p144 = por %p142, %p143
    %p145 = scmp.ne.s32.totalorder %s137, %s140
    %p146 = scmp.eq.s32.totalorder %s12, 0
    %p147 = por %p145, %p146
    %p148 = scmp.ne.s32.totalorder %s137, %s140
    %p149 = scmp.eq.s32.totalorder %s17, 1
    %p150 = por %p148, %p149
    %p151 = scmp.ne.s32.totalorder %s140, %s141
    %p152 = scmp.eq.s32.totalorder %s17, 0
    %p153 = por %p151, %p152
    %p154 = scmp.ne.s32.totalorder %s140, %s141
    %p155 = scmp.eq.s32.totalorder %s18, 1
    %p156 = por %p154, %p155
    %p158 = scmp.ne.s32.totalorder %s141, %s157
    %p159 = scmp.eq.s32.totalorder %s18, 0
    %p160 = por %p158, %p159
    %p161 = scmp.le.s32.totalorder 1, %s12
    %p162 = scmp.lt.s32.totalorder %s12, 3
    %p163 = pnand %p161, %p162
    %p164 = pneg %p163
    // Predicated region
    $region9: #{transconv_forward.7} parent=5 // pred_check
      _
    $region10: #{transconv_forward.7} parent=5 // pred_check_branch
      %166 = sbr.rel (%p163) target = $region12
    $region11: #{transconv_forward.7} parent=5 // pred_region
      %s167 = ssub.s32 %s12, 1
      // Predicated region
      $region13: #{transconv_forward.7} parent=11 // pred_check
        %p168 = pneg %p59
      $region14: #{transconv_forward.7} parent=11 // pred_check_branch
        %170 = sbr.rel (%p168) target = $region16
      $region15: #{transconv_forward.7} parent=11 // pred_region
        _
      $region16: #{transconv_forward.7} parent=11 // pred_fallthru
        _
      // Predicated region
      $region17: #{transconv_forward.7} parent=11 // pred_check
        %p171 = pneg %p80
      $region18: #{transconv_forward.7} parent=11 // pred_check_branch
        %173 = sbr.rel (%p171) target = $region20
      $region19: #{transconv_forward.7} parent=11 // pred_region
        _
      $region20: #{transconv_forward.7} parent=11 // pred_fallthru
        _
      // Predicated region
      $region21: #{transconv_forward.7} parent=11 // pred_check
        %p174 = pneg %p101
      $region22: #{transconv_forward.7} parent=11 // pred_check_branch
        %176 = sbr.rel (%p174) target = $region24
      $region23: #{transconv_forward.7} parent=11 // pred_region
        _
      $region24: #{transconv_forward.7} parent=11 // pred_fallthru
        _
    $region12: #{transconv_forward.7} parent=5 // pred_fallthru
      _
    %p177 = scmp.lt.s32.totalorder %s12, 2
    // Predicated region
    $region25: #{transconv_forward.7} parent=5 // pred_check
      %p178 = pneg %p177
    $region26: #{transconv_forward.7} parent=5 // pred_check_branch
      %180 = sbr.rel (%p178) target = $region28
    $region27: #{transconv_forward.7} parent=5 // pred_region
      // Predicated region
      $region29: #{transconv_forward.7} parent=27 // pred_check
        %p181 = pneg %p32
      $region30: #{transconv_forward.7} parent=27 // pred_check_branch
        %183 = sbr.rel (%p181) target = $region32
      $region31: #{transconv_forward.7} parent=27 // pred_region
        %s184 = smul.u32 4, %s12
        %p185 = scmp.lt.s32.totalorder %s184, 7
        %s186 = scalar_select %p185, %s184, 7
        %s187 = smul.addr %s186, 8
        %s188 = scalar_lea.vmem %s0, %s187
        %s189 = smul.u32 4, %s12
      $region32: #{transconv_forward.7} parent=27 // pred_fallthru
        _
    $region28: #{transconv_forward.7} parent=5 // pred_fallthru
      _
    %p190 = scmp.le.s32.totalorder 1, %s12
    %p191 = scmp.lt.s32.totalorder %s12, 3
    %p192 = pnand %p190, %p191
    %p193 = pneg %p192
    // Predicated region
    $region33: #{transconv_forward.7} parent=5 // pred_check
      _
    $region34: #{transconv_forward.7} parent=5 // pred_check_branch
      %195 = sbr.rel (%p192) target = $region36
    $region35: #{transconv_forward.7} parent=5 // pred_region
      %s196 = ssub.s32 %s12, 1
      %s197 = smul.u32 4, %s17
      %p198 = scmp.lt.s32.totalorder %s197, 7
      %s199 = scalar_select %p198, %s197, 7
      %s200 = smul.addr %s199, 8
      %s201 = scalar_lea.vmem %s0, %s200
      %p202 = pneg %p38
      %p203 = pneg %p35
      %p204 = pneg %p59
      %p205 = pneg %p56
      %p206 = pneg %p80
      %p207 = pneg %p77
      %p208 = pneg %p101
      %p209 = pneg %p98
      %p210 = pneg %p127
      %p211 = pneg %p124
      %s212 = smul.u32 4, %s17
      %p213 = scmp.lt.s32.totalorder %s212, 7
      %s214 = scalar_select %p213, %s212, 7
      %s215 = smul.addr %s214, 8
      %s216 = scalar_lea.vmem %s4, %s215
      %p217 = pneg %p153
      %p218 = pneg %p150
      %s219 = smul.u32 4, %s17
      %p220 = scmp.lt.s32.totalorder %s219, 7
      %s221 = scalar_select %p220, %s219, 7
      %s222 = smul.addr %s221, 8
      %s223 = scalar_lea.vmem %s5, %s222
      %s224 = smul.u32 4, %s17
      %p225 = scmp.lt.s32.totalorder %s224, 7
      %s226 = scalar_select %p225, %s224, 7
      %s227 = smul.addr %s226, 8
      %s228 = scalar_lea.vmem %s0, %s227
      %s229 = smul.u32 4, %s17
      %s230 = smul.u32 4, %s17
      %p231 = scmp.lt.s32.totalorder %s230, 7
      %s232 = scalar_select %p231, %s230, 7
      %s233 = smul.addr %s232, 8
      %s234 = scalar_lea.vmem %s4, %s233
      %s235 = smul.u32 4, %s17
      %s236 = smul.u32 4, %s17
      %p237 = scmp.lt.s32.totalorder %s236, 7
      %s238 = scalar_select %p237, %s236, 7
      %s239 = smul.addr %s238, 8
      %s240 = scalar_lea.vmem %s5, %s239
      %s241 = smul.u32 4, %s17
      %v243 = vld [vmem:[%s228] sm:$0xff]
      %v244 = vld [vmem:[%s228 + $0x8] sm:$0xff]
      %v245 = vld [vmem:[%s228 + $0x10] sm:$0xff]
      %v246 = vld [vmem:[%s228 + $0x18] sm:$0xff]
      %v247 = vmul.f32 %v243, %v243
      %v248 = vmul.f32 %v244, %v244
      %v249 = vmul.f32 %v245, %v245
      %v250 = vmul.f32 %v246, %v246
      %vm251 = vcmask 261120
      %v252 = vsel %vm251, %v247, 0.0
      %253 = vadd.xlane.f32.xlu0 %v252
      %v254 = vpop.xlane.xlu0 %253
      %v255 = vsel %vm251, %v248, 0.0
      %256 = vadd.xlane.f32.xlu0 %v255
      %v257 = vpop.xlane.xlu0 %256
      %v258 = vsel %vm251, %v249, 0.0
      %259 = vadd.xlane.f32.xlu0 %v258
      %v260 = vpop.xlane.xlu0 %259
      %v261 = vsel %vm251, %v250, 0.0
      %262 = vadd.xlane.f32.xlu0 %v261
      %v263 = vpop.xlane.xlu0 %262
      %v264 = vadd.f32 %v254, 1.0
      %v265 = vadd.f32 %v257, 1.0
      %v266 = vadd.f32 %v260, 1.0
      %v267 = vadd.f32 %v263, 1.0
      %v268 = vrsqrt.pop %v264
      %v269 = vmul.f32 %v268, %v264
      %v270 = vmul.f32 %v269, %v268
      %v271 = vmul.f32 0.5, %v270
      %v272 = vsub.f32 1.5, %v271
      %v273 = vmul.f32 %v268, %v272
      %v274 = vmul.f32 %v264, %v273
      %vm275 = vcmp.eq.f32.partialorder %v264, inf
      %v276 = vsel %vm275, %v264, %v274
      %vm277 = vcmp.eq.f32.partialorder %v264, 0.0
      %v278 = vand.u32 %v264, 2147483648
      %v279 = vsel %vm277, %v278, %v276
      %v280 = vrsqrt.pop %v265
      %v281 = vmul.f32 %v280, %v265
      %v282 = vmul.f32 %v281, %v280
      %v283 = vmul.f32 0.5, %v282
      %v284 = vsub.f32 1.5, %v283
      %v285 = vmul.f32 %v280, %v284
      %v286 = vmul.f32 %v265, %v285
      %vm287 = vcmp.eq.f32.partialorder %v265, inf
      %v288 = vsel %vm287, %v265, %v286
      %vm289 = vcmp.eq.f32.partialorder %v265, 0.0
      %v290 = vand.u32 %v265, 2147483648
      %v291 = vsel %vm289, %v290, %v288
      %v292 = vrsqrt.pop %v266
      %v293 = vmul.f32 %v292, %v266
      %v294 = vmul.f32 %v293, %v292
      %v295 = vmul.f32 0.5, %v294
      %v296 = vsub.f32 1.5, %v295
      %v297 = vmul.f32 %v292, %v296
      %v298 = vmul.f32 %v266, %v297
      %vm299 = vcmp.eq.f32.partialorder %v266, inf
      %v300 = vsel %vm299, %v266, %v298
      %vm301 = vcmp.eq.f32.partialorder %v266, 0.0
      %v302 = vand.u32 %v266, 2147483648
      %v303 = vsel %vm301, %v302, %v300
      %v304 = vrsqrt.pop %v267
      %v305 = vmul.f32 %v304, %v267
      %v306 = vmul.f32 %v305, %v304
      %v307 = vmul.f32 0.5, %v306
      %v308 = vsub.f32 1.5, %v307
      %v309 = vmul.f32 %v304, %v308
      %v310 = vmul.f32 %v267, %v309
      %vm311 = vcmp.eq.f32.partialorder %v267, inf
      %v312 = vsel %vm311, %v267, %v310
      %vm313 = vcmp.eq.f32.partialorder %v267, 0.0
      %v314 = vand.u32 %v267, 2147483648
      %v315 = vsel %vm313, %v314, %v312
      %v316 = vld [vmem:[%s1] sm:$0xff]
      %v317 = vld [vmem:[%s1 + $0x8] sm:$0xff]
      %v318 = vld [vmem:[%s1 + $0x10] sm:$0xff]
      %v319 = vld [vmem:[%s1 + $0x18] sm:$0xff]
      %v320 = vpack.c.bf16 %v244, %v243
      %v321 = vpack.c.bf16 %v246, %v245
      %v322 = vpack.c.bf16 %v317, %v316
      %v323 = vpack.c.bf16 %v319, %v318
      %v324 = vld [vmem:[%s2] sm:$0x1]
      %v326 = vperm.slane %v324, 0
      %v328 = vmul.f32 %v279, %v326
      %v329 = vmul.f32 %v291, %v326
      %v330 = vmul.f32 %v303, %v326
      %v331 = vmul.f32 %v315, %v326
      %v333 = vsel %vm251, %v320, 0
      %v336 = vsel %vm251, %v321, 0
      %338 = vmatpush.bf16.msra.mxu0 0
      %339 = vmatpush.bf16.msra.mxu0 0
      %340 = vmatpush.bf16.msra.mxu0 0
      %341 = vmatpush.bf16.msra.mxu0 0
      %342 = vmatpush.bf16.msra.mxu0 0
      %343 = vmatpush.bf16.msra.mxu0 0
      %344 = vmatpush.bf16.msra.mxu0 %v323
      %345 = vmatpush.bf16.msra.mxu0 %v322
      %346 = vmatmul.bf16.gmra.mxu0 %v333
      %v347 = vpop.f32.mrf.mxu0
      %v348 = vadd.f32 %v328, %v347
      %v349 = vpop.f32.mrf.mxu0
      %v350 = vadd.f32 %v329, %v349
      %351 = vmatmul.bf16.gmra.mxu0 %v336
      %v352 = vpop.f32.mrf.mxu0
      %v353 = vadd.f32 %v330, %v352
      %v354 = vpop.f32.mrf.mxu0
      %v355 = vadd.f32 %v331, %v354
      %356 = vdwg.mxu0
      %v357 = vld [vmem:[%s3] sm:$0x1]
      %v359 = vperm.slane %v357, 0
      %v361 = vadd.f32 %v348, %v359
      %v362 = vadd.f32 %v350, %v359
      %v363 = vadd.f32 %v353, %v359
      %v364 = vadd.f32 %v355, %v359
      %v365 = vmul.f32 %v361, %v361
      %v366 = vmul.f32 %v362, %v362
      %v367 = vmul.f32 %v363, %v363
      %v368 = vmul.f32 %v364, %v364
      %v369 = vsel %vm251, %v365, 0.0
      %370 = vadd.xlane.f32.xlu0 %v369
      %v371 = vpop.xlane.xlu0 %370
      %v372 = vsel %vm251, %v366, 0.0
      %373 = vadd.xlane.f32.xlu0 %v372
      %v374 = vpop.xlane.xlu0 %373
      %v375 = vsel %vm251, %v367, 0.0
      %376 = vadd.xlane.f32.xlu0 %v375
      %v377 = vpop.xlane.xlu0 %376
      %v378 = vsel %vm251, %v368, 0.0
      %379 = vadd.xlane.f32.xlu0 %v378
      %v380 = vpop.xlane.xlu0 %379
      %v381 = vadd.f32 %v371, 1.0
      %v382 = vadd.f32 %v374, 1.0
      %v383 = vadd.f32 %v377, 1.0
      %v384 = vadd.f32 %v380, 1.0
      %v385 = vrsqrt.pop %v381
      %v386 = vmul.f32 %v385, %v381
      %v387 = vmul.f32 %v386, %v385
      %v388 = vmul.f32 0.5, %v387
      %v389 = vsub.f32 1.5, %v388
      %v390 = vmul.f32 %v385, %v389
      %v391 = vmul.f32 %v381, %v390
      %vm392 = vcmp.eq.f32.partialorder %v381, inf
      %v393 = vsel %vm392, %v381, %v391
      %vm394 = vcmp.eq.f32.partialorder %v381, 0.0
      %v395 = vand.u32 %v381, 2147483648
      %v396 = vsel %vm394, %v395, %v393
      %v397 = vrsqrt.pop %v382
      %v398 = vmul.f32 %v397, %v382
      %v399 = vmul.f32 %v398, %v397
      %v400 = vmul.f32 0.5, %v399
      %v401 = vsub.f32 1.5, %v400
      %v402 = vmul.f32 %v397, %v401
      %v403 = vmul.f32 %v382, %v402
      %vm404 = vcmp.eq.f32.partialorder %v382, inf
      %v405 = vsel %vm404, %v382, %v403
      %vm406 = vcmp.eq.f32.partialorder %v382, 0.0
      %v407 = vand.u32 %v382, 2147483648
      %v408 = vsel %vm406, %v407, %v405
      %v409 = vrsqrt.pop %v383
      %v410 = vmul.f32 %v409, %v383
      %v411 = vmul.f32 %v410, %v409
      %v412 = vmul.f32 0.5, %v411
      %v413 = vsub.f32 1.5, %v412
      %v414 = vmul.f32 %v409, %v413
      %v415 = vmul.f32 %v383, %v414
      %vm416 = vcmp.eq.f32.partialorder %v383, inf
      %v417 = vsel %vm416, %v383, %v415
      %vm418 = vcmp.eq.f32.partialorder %v383, 0.0
      %v419 = vand.u32 %v383, 2147483648
      %v420 = vsel %vm418, %v419, %v417
      %v421 = vrsqrt.pop %v384
      %v422 = vmul.f32 %v421, %v384
      %v423 = vmul.f32 %v422, %v421
      %v424 = vmul.f32 0.5, %v423
      %v425 = vsub.f32 1.5, %v424
      %v426 = vmul.f32 %v421, %v425
      %v427 = vmul.f32 %v384, %v426
      %vm428 = vcmp.eq.f32.partialorder %v384, inf
      %v429 = vsel %vm428, %v384, %v427
      %vm430 = vcmp.eq.f32.partialorder %v384, 0.0
      %v431 = vand.u32 %v384, 2147483648
      %v432 = vsel %vm430, %v431, %v429
      %vm433 = vcmask 7168
      %434 = vst.msk [vmem:[%s234] sm:$0xff] %vm433, %v396
      %435 = vst.msk [vmem:[%s234 + $0x8] sm:$0xff] %vm433, %v408
      %436 = vst.msk [vmem:[%s234 + $0x10] sm:$0xff] %vm433, %v420
      %437 = vst.msk [vmem:[%s234 + $0x18] sm:$0xff] %vm433, %v432
      %438 = vst.msk [vmem:[%s240] sm:$0xff] %vm251, %v361
      %439 = vst.msk [vmem:[%s240 + $0x8] sm:$0xff] %vm251, %v362
      %440 = vst.msk [vmem:[%s240 + $0x10] sm:$0xff] %vm251, %v363
      %441 = vst.msk [vmem:[%s240 + $0x18] sm:$0xff] %vm251, %v364
      %s442 = smul.u32 4, %s17
      %p443 = scmp.lt.s32.totalorder %s442, 7
      %s444 = scalar_select %p443, %s442, 7
      %s445 = smul.addr %s444, 8
      %s446 = scalar_lea.vmem %s4, %s445
      %s447 = smul.u32 4, %s17
      %p448 = scmp.lt.s32.totalorder %s447, 7
      %s449 = scalar_select %p448, %s447, 7
      %s450 = smul.addr %s449, 8
      %s451 = scalar_lea.vmem %s5, %s450
      // Predicated region
      $region37: #{transconv_forward.7} parent=35 // pred_check
        %p452 = pneg %p124
      $region38: #{transconv_forward.7} parent=35 // pred_check_branch
        %454 = sbr.rel (%p452) target = $region40
      $region39: #{transconv_forward.7} parent=35 // pred_region
        %s455 = smul.u32 4, %s17
      $region40: #{transconv_forward.7} parent=35 // pred_fallthru
        _
      // Predicated region
      $region41: #{transconv_forward.7} parent=35 // pred_check
        %p456 = pneg %p150
      $region42: #{transconv_forward.7} parent=35 // pred_check_branch
        %458 = sbr.rel (%p456) target = $region44
      $region43: #{transconv_forward.7} parent=35 // pred_region
        %s459 = smul.u32 4, %s17
      $region44: #{transconv_forward.7} parent=35 // pred_fallthru
        _
    $region36: #{transconv_forward.7} parent=5 // pred_fallthru
      _
    %p460 = scmp.le.s32.totalorder 2, %s12
    // Predicated region
    $region45: #{transconv_forward.7} parent=5 // pred_check
      %p461 = pneg %p460
    $region46: #{transconv_forward.7} parent=5 // pred_check_branch
      %463 = sbr.rel (%p461) target = $region48
    $region47: #{transconv_forward.7} parent=5 // pred_region
      %s464 = ssub.s32 %s12, 2
      // Predicated region
      $region49: #{transconv_forward.7} parent=47 // pred_check
        %p465 = pneg %p130
      $region50: #{transconv_forward.7} parent=47 // pred_check_branch
        %467 = sbr.rel (%p465) target = $region52
      $region51: #{transconv_forward.7} parent=47 // pred_region
        %s468 = smul.u32 4, %s18
        %p469 = scmp.lt.s32.totalorder %s468, 7
        %s470 = scalar_select %p469, %s468, 7
        %s471 = smul.addr %s470, 8
        %s472 = scalar_lea.vmem %s4, %s471
      $region52: #{transconv_forward.7} parent=47 // pred_fallthru
        _
      // Predicated region
      $region53: #{transconv_forward.7} parent=47 // pred_check
        %p473 = pneg %p156
      $region54: #{transconv_forward.7} parent=47 // pred_check_branch
        %475 = sbr.rel (%p473) target = $region56
      $region55: #{transconv_forward.7} parent=47 // pred_region
        %s476 = smul.u32 4, %s18
        %p477 = scmp.lt.s32.totalorder %s476, 7
        %s478 = scalar_select %p477, %s476, 7
        %s479 = smul.addr %s478, 8
        %s480 = scalar_lea.vmem %s5, %s479
      $region56: #{transconv_forward.7} parent=47 // pred_fallthru
        _
    $region48: #{transconv_forward.7} parent=5 // pred_fallthru
      _
  $region6: #{transconv_forward.7} parent=0 // loop_footer
    %s16 = sadd.s32 1, %s12
  $region7: #{transconv_forward.7} parent=0 // loop_footer_branch
    %11 = sbr.rel target = $region3
  $region8: #{transconv_forward.7} parent=0 // loop_exit
    _

// kernel: transconv_forward.4
$region0: #{transconv_forward.4}
  #allocation0 [shape = 'u32[]', space=smem, size = 0x4, offset = 0x4, fixed_abs, tag = 'smem constant byte address 0x4 - core index']
  #allocation1 [shape = 'u32[72,128]{1,0:T(1,128)}', space=vmem, size = 0x9000, scoped, tag = 'internal scratch']
  %s0 = inlined_call_operand.vmem [shape: f32[64,16], index: 0, kind: input, shape index: {}]
  %s1 = inlined_call_operand.vmem [shape: f32[16,64], index: 1, kind: input, shape index: {}]
  %s2 = inlined_call_operand.vmem [shape: f32[1,64], index: 2, kind: input, shape index: {}]
  %s3 = inlined_call_operand.vmem [shape: f32[1,64], index: 3, kind: input, shape index: {}]
  %s4 = inlined_call_operand.vmem [shape: f32[1,32], index: 4, kind: input, shape index: {}]
  %s5 = inlined_call_operand.vmem [shape: f32[1,32], index: 5, kind: input, shape index: {}]
  %s6 = inlined_call_operand.vmem [shape: f32[64,32], index: 6, kind: output, shape index: {}]
  %s7 = sld [smem:[#allocation0]]
  $region57: #{transconv_forward.4} parent=0
    _
  %s9 = ssub.s32 1, %s7
  %s10 = scalar_select 0, %s9, %s7
  loop: start=0, step=1, limit=4
  $region2: #{transconv_forward.4} parent=0 // loop_pre_header
    _
  $region3: #{transconv_forward.4} parent=0 // loop_header
    %s12 = sphi 0, %s16
    %p13 = scmp.ge.s32.totalorder %s12, 4
    %s22 = sphi 0, %s24
    %s25 = sphi 0, %s22
    %s26 = sphi 0, %s25
    %s42 = sphi 0, %s26
    %s46 = sphi 0, %s46
    %s48 = sphi 0, %s46
    %s49 = sphi 0, %s48
    %s63 = sphi 0, %s49
    %s67 = sphi 0, %s67
    %s69 = sphi 0, %s67
    %s70 = sphi 0, %s69
    %s84 = sphi 0, %s70
    %s88 = sphi 0, %s88
    %s90 = sphi 0, %s88
    %s91 = sphi 0, %s90
    %s105 = sphi 0, %s91
    %s109 = sphi 0, %s109
    %s111 = sphi 0, %s109
    %s112 = sphi 0, %s111
    %s126 = sphi 0, %s112
    %s130 = sphi 0, %s130
    %s132 = sphi 0, %s130
    %s133 = sphi 0, %s132
    %s147 = sphi 0, %s133
    %s153 = sphi 0, %s155
    %s156 = sphi 0, %s153
    %s157 = sphi 0, %s156
    %s173 = sphi 0, %s157
  $region4: #{transconv_forward.4} parent=0 // loop_header_branch
    %15 = sbr.rel (%p13) target = $region8
  $region5: #{transconv_forward.4} parent=0 // loop_body
    %s17 = ssub.s32 %s12, 1
    %s18 = ssub.s32 %s12, 2
    %s19 = sadd.s32 %s12, 1
    %s20 = ssub.s32 %s12, %s19
    %p21 = scmp.eq.s32.totalorder %s20, 0
    %s23 = sadd.s32 %s22, 1
    %s24 = scalar_select %p21, %s22, %s23
    %p27 = pneg %p21
    %p28 = scmp.eq.s32.totalorder %s12, 1
    %p29 = por %p27, %p28
    %p30 = scmp.ne.s32.totalorder %s22, %s25
    %p31 = scmp.eq.s32.totalorder %s12, 0
    %p32 = por %p30, %p31
    %p33 = scmp.ne.s32.totalorder %s22, %s25
    %p34 = scmp.eq.s32.totalorder %s17, 1
    %p35 = por %p33, %p34
    %p36 = scmp.ne.s32.totalorder %s25, %s26
    %p37 = scmp.eq.s32.totalorder %s17, 0
    %p38 = por %p36, %p37
    %p39 = scmp.ne.s32.totalorder %s25, %s26
    %p40 = scmp.eq.s32.totalorder %s18, 1
    %p41 = por %p39, %p40
    %p43 = scmp.ne.s32.totalorder %s26, %s42
    %p44 = scmp.eq.s32.totalorder %s18, 0
    %p45 = por %p43, %p44
    %s47 = sadd.s32 %s46, 1
    %p50 = scmp.eq.s32.totalorder %s12, 1
    %p51 = scmp.ne.s32.totalorder %s46, %s48
    %p52 = scmp.eq.s32.totalorder %s12, 0
    %p53 = por %p51, %p52
    %p54 = scmp.ne.s32.totalorder %s46, %s48
    %p55 = scmp.eq.s32.totalorder %s17, 1
    %p56 = por %p54, %p55
    %p57 = scmp.ne.s32.totalorder %s48, %s49
    %p58 = scmp.eq.s32.totalorder %s17, 0
    %p59 = por %p57, %p58
    %p60 = scmp.ne.s32.totalorder %s48, %s49
    %p61 = scmp.eq.s32.totalorder %s18, 1
    %p62 = por %p60, %p61
    %p64 = scmp.ne.s32.totalorder %s49, %s63
    %p65 = scmp.eq.s32.totalorder %s18, 0
    %p66 = por %p64, %p65
    %s68 = sadd.s32 %s67, 1
    %p71 = scmp.eq.s32.totalorder %s12, 1
    %p72 = scmp.ne.s32.totalorder %s67, %s69
    %p73 = scmp.eq.s32.totalorder %s12, 0
    %p74 = por %p72, %p73
    %p75 = scmp.ne.s32.totalorder %s67, %s69
    %p76 = scmp.eq.s32.totalorder %s17, 1
    %p77 = por %p75, %p76
    %p78 = scmp.ne.s32.totalorder %s69, %s70
    %p79 = scmp.eq.s32.totalorder %s17, 0
    %p80 = por %p78, %p79
    %p81 = scmp.ne.s32.totalorder %s69, %s70
    %p82 = scmp.eq.s32.totalorder %s18, 1
    %p83 = por %p81, %p82
    %p85 = scmp.ne.s32.totalorder %s70, %s84
    %p86 = scmp.eq.s32.totalorder %s18, 0
    %p87 = por %p85, %p86
    %s89 = sadd.s32 %s88, 1
    %p92 = scmp.eq.s32.totalorder %s12, 1
    %p93 = scmp.ne.s32.totalorder %s88, %s90
    %p94 = scmp.eq.s32.totalorder %s12, 0
    %p95 = por %p93, %p94
    %p96 = scmp.ne.s32.totalorder %s88, %s90
    %p97 = scmp.eq.s32.totalorder %s17, 1
    %p98 = por %p96, %p97
    %p99 = scmp.ne.s32.totalorder %s90, %s91
    %p100 = scmp.eq.s32.totalorder %s17, 0
    %p101 = por %p99, %p100
    %p102 = scmp.ne.s32.totalorder %s90, %s91
    %p103 = scmp.eq.s32.totalorder %s18, 1
    %p104 = por %p102, %p103
    %p106 = scmp.ne.s32.totalorder %s91, %s105
    %p107 = scmp.eq.s32.totalorder %s18, 0
    %p108 = por %p106, %p107
    %s110 = sadd.s32 %s109, 1
    %p113 = scmp.eq.s32.totalorder %s12, 1
    %p114 = scmp.ne.s32.totalorder %s109, %s111
    %p115 = scmp.eq.s32.totalorder %s12, 0
    %p116 = por %p114, %p115
    %p117 = scmp.ne.s32.totalorder %s109, %s111
    %p118 = scmp.eq.s32.totalorder %s17, 1
    %p119 = por %p117, %p118
    %p120 = scmp.ne.s32.totalorder %s111, %s112
    %p121 = scmp.eq.s32.totalorder %s17, 0
    %p122 = por %p120, %p121
    %p123 = scmp.ne.s32.totalorder %s111, %s112
    %p124 = scmp.eq.s32.totalorder %s18, 1
    %p125 = por %p123, %p124
    %p127 = scmp.ne.s32.totalorder %s112, %s126
    %p128 = scmp.eq.s32.totalorder %s18, 0
    %p129 = por %p127, %p128
    %s131 = sadd.s32 %s130, 1
    %p134 = scmp.eq.s32.totalorder %s12, 1
    %p135 = scmp.ne.s32.totalorder %s130, %s132
    %p136 = scmp.eq.s32.totalorder %s12, 0
    %p137 = por %p135, %p136
    %p138 = scmp.ne.s32.totalorder %s130, %s132
    %p139 = scmp.eq.s32.totalorder %s17, 1
    %p140 = por %p138, %p139
    %p141 = scmp.ne.s32.totalorder %s132, %s133
    %p142 = scmp.eq.s32.totalorder %s17, 0
    %p143 = por %p141, %p142
    %p144 = scmp.ne.s32.totalorder %s132, %s133
    %p145 = scmp.eq.s32.totalorder %s18, 1
    %p146 = por %p144, %p145
    %p148 = scmp.ne.s32.totalorder %s133, %s147
    %p149 = scmp.eq.s32.totalorder %s18, 0
    %p150 = por %p148, %p149
    %s151 = ssub.s32 %s12, %s19
    %p152 = scmp.eq.s32.totalorder %s151, 0
    %s154 = sadd.s32 %s153, 1
    %s155 = scalar_select %p152, %s153, %s154
    %p158 = pneg %p152
    %p159 = scmp.eq.s32.totalorder %s12, 1
    %p160 = por %p158, %p159
    %p161 = scmp.ne.s32.totalorder %s153, %s156
    %p162 = scmp.eq.s32.totalorder %s12, 0
    %p163 = por %p161, %p162
    %p164 = scmp.ne.s32.totalorder %s153, %s156
    %p165 = scmp.eq.s32.totalorder %s17, 1
    %p166 = por %p164, %p165
    %p167 = scmp.ne.s32.totalorder %s156, %s157
    %p168 = scmp.eq.s32.totalorder %s17, 0
    %p169 = por %p167, %p168
    %p170 = scmp.ne.s32.totalorder %s156, %s157
    %p171 = scmp.eq.s32.totalorder %s18, 1
    %p172 = por %p170, %p171
    %p174 = scmp.ne.s32.totalorder %s157, %s173
    %p175 = scmp.eq.s32.totalorder %s18, 0
    %p176 = por %p174, %p175
    %p177 = scmp.le.s32.totalorder 1, %s12
    %p178 = scmp.lt.s32.totalorder %s12, 3
    %p179 = pnand %p177, %p178
    %p180 = pneg %p179
    // Predicated region
    $region9: #{transconv_forward.4} parent=5 // pred_check
      _
    $region10: #{transconv_forward.4} parent=5 // pred_check_branch
      %182 = sbr.rel (%p179) target = $region12
    $region11: #{transconv_forward.4} parent=5 // pred_region
      %s183 = ssub.s32 %s12, 1
      // Predicated region
      $region13: #{transconv_forward.4} parent=11 // pred_check
        %p184 = pneg %p59
      $region14: #{transconv_forward.4} parent=11 // pred_check_branch
        %186 = sbr.rel (%p184) target = $region16
      $region15: #{transconv_forward.4} parent=11 // pred_region
        _
      $region16: #{transconv_forward.4} parent=11 // pred_fallthru
        _
      // Predicated region
      $region17: #{transconv_forward.4} parent=11 // pred_check
        %p187 = pneg %p80
      $region18: #{transconv_forward.4} parent=11 // pred_check_branch
        %189 = sbr.rel (%p187) target = $region20
      $region19: #{transconv_forward.4} parent=11 // pred_region
        _
      $region20: #{transconv_forward.4} parent=11 // pred_fallthru
        _
      // Predicated region
      $region21: #{transconv_forward.4} parent=11 // pred_check
        %p190 = pneg %p101
      $region22: #{transconv_forward.4} parent=11 // pred_check_branch
        %192 = sbr.rel (%p190) target = $region24
      $region23: #{transconv_forward.4} parent=11 // pred_region
        _
      $region24: #{transconv_forward.4} parent=11 // pred_fallthru
        _
      // Predicated region
      $region25: #{transconv_forward.4} parent=11 // pred_check
        %p193 = pneg %p122
      $region26: #{transconv_forward.4} parent=11 // pred_check_branch
        %195 = sbr.rel (%p193) target = $region28
      $region27: #{transconv_forward.4} parent=11 // pred_region
        _
      $region28: #{transconv_forward.4} parent=11 // pred_fallthru
        _
      // Predicated region
      $region29: #{transconv_forward.4} parent=11 // pred_check
        %p196 = pneg %p143
      $region30: #{transconv_forward.4} parent=11 // pred_check_branch
        %198 = sbr.rel (%p196) target = $region32
      $region31: #{transconv_forward.4} parent=11 // pred_region
        _
      $region32: #{transconv_forward.4} parent=11 // pred_fallthru
        _
    $region12: #{transconv_forward.4} parent=5 // pred_fallthru
      _
    %p199 = scmp.lt.s32.totalorder %s12, 2
    // Predicated region
    $region33: #{transconv_forward.4} parent=5 // pred_check
      %p200 = pneg %p199
    $region34: #{transconv_forward.4} parent=5 // pred_check_branch
      %202 = sbr.rel (%p200) target = $region36
    $region35: #{transconv_forward.4} parent=5 // pred_region
      // Predicated region
      $region37: #{transconv_forward.4} parent=35 // pred_check
        %p203 = pneg %p32
      $region38: #{transconv_forward.4} parent=35 // pred_check_branch
        %205 = sbr.rel (%p203) target = $region40
      $region39: #{transconv_forward.4} parent=35 // pred_region
        %s206 = smul.u32 4, %s12
        %p207 = scmp.lt.s32.totalorder %s206, 7
        %s208 = scalar_select %p207, %s206, 7
        %s209 = smul.addr %s208, 8
        %s210 = scalar_lea.vmem %s0, %s209
        %s211 = smul.u32 4, %s12
      $region40: #{transconv_forward.4} parent=35 // pred_fallthru
        _
    $region36: #{transconv_forward.4} parent=5 // pred_fallthru
      _
    %p212 = scmp.le.s32.totalorder 1, %s12
    %p213 = scmp.lt.s32.totalorder %s12, 3
    %p214 = pnand %p212, %p213
    %p215 = pneg %p214
    // Predicated region
    $region41: #{transconv_forward.4} parent=5 // pred_check
      _
    $region42: #{transconv_forward.4} parent=5 // pred_check_branch
      %217 = sbr.rel (%p214) target = $region44
    $region43: #{transconv_forward.4} parent=5 // pred_region
      %s218 = ssub.s32 %s12, 1
      %s219 = smul.u32 4, %s17
      %p220 = scmp.lt.s32.totalorder %s219, 7
      %s221 = scalar_select %p220, %s219, 7
      %s222 = smul.addr %s221, 8
      %s223 = scalar_lea.vmem %s0, %s222
      %p224 = pneg %p38
      %p225 = pneg %p35
      %p226 = pneg %p59
      %p227 = pneg %p56
      %p228 = pneg %p80
      %p229 = pneg %p77
      %p230 = pneg %p101
      %p231 = pneg %p98
      %p232 = pneg %p122
      %p233 = pneg %p119
      %p234 = pneg %p143
      %p235 = pneg %p140
      %p236 = pneg %p169
      %p237 = pneg %p166
      %s238 = smul.u32 4, %s17
      %p239 = scmp.lt.s32.totalorder %s238, 7
      %s240 = scalar_select %p239, %s238, 7
      %s241 = smul.addr %s240, 8
      %s242 = scalar_lea.vmem %s6, %s241
      %s243 = smul.u32 4, %s17
      %p244 = scmp.lt.s32.totalorder %s243, 7
      %s245 = scalar_select %p244, %s243, 7
      %s246 = smul.addr %s245, 8
      %s247 = scalar_lea.vmem %s0, %s246
      %s248 = smul.u32 4, %s17
      %s249 = smul.u32 4, %s17
      %p250 = scmp.lt.s32.totalorder %s249, 7
      %s251 = scalar_select %p250, %s249, 7
      %s252 = smul.addr %s251, 8
      %s253 = scalar_lea.vmem %s6, %s252
      %s254 = smul.u32 4, %s17
      %v256 = vld [vmem:[%s247] sm:$0xff]
      %v257 = vld [vmem:[%s247 + $0x8] sm:$0xff]
      %v258 = vld [vmem:[%s247 + $0x10] sm:$0xff]
      %v259 = vld [vmem:[%s247 + $0x18] sm:$0xff]
      %v260 = vmul.f32 %v256, %v256
      %v261 = vmul.f32 %v257, %v257
      %v262 = vmul.f32 %v258, %v258
      %v263 = vmul.f32 %v259, %v259
      %vm264 = vcmask 130048
      %v265 = vsel %vm264, %v260, 0.0
      %266 = vadd.xlane.f32.xlu0 %v265
      %v267 = vpop.xlane.xlu0 %266
      %v268 = vsel %vm264, %v261, 0.0
      %269 = vadd.xlane.f32.xlu0 %v268
      %v270 = vpop.xlane.xlu0 %269
      %v271 = vsel %vm264, %v262, 0.0
      %272 = vadd.xlane.f32.xlu0 %v271
      %v273 = vpop.xlane.xlu0 %272
      %v274 = vsel %vm264, %v263, 0.0
      %275 = vadd.xlane.f32.xlu0 %v274
      %v276 = vpop.xlane.xlu0 %275
      %v277 = vsub.f32 %v267, 1.0
      %v278 = vsub.f32 %v270, 1.0
      %v279 = vsub.f32 %v273, 1.0
      %v280 = vsub.f32 %v276, 1.0
      %v281 = vmax.f32 %v277, 1e-08
      %v282 = vmax.f32 %v278, 1e-08
      %v283 = vmax.f32 %v279, 1e-08
      %v284 = vmax.f32 %v280, 1e-08
      %v285 = vrsqrt.pop %v281
      %v286 = vmul.f32 %v285, %v281
      %v287 = vmul.f32 %v286, %v285
      %v288 = vmul.f32 0.5, %v287
      %v289 = vsub.f32 1.5, %v288
      %v290 = vmul.f32 %v285, %v289
      %v291 = vmul.f32 %v281, %v290
      %vm292 = vcmp.eq.f32.partialorder %v281, inf
      %v293 = vsel %vm292, %v281, %v291
      %vm294 = vcmp.eq.f32.partialorder %v281, 0.0
      %v295 = vand.u32 %v281, 2147483648
      %v296 = vsel %vm294, %v295, %v293
      %v297 = vrsqrt.pop %v282
      %v298 = vmul.f32 %v297, %v282
      %v299 = vmul.f32 %v298, %v297
      %v300 = vmul.f32 0.5, %v299
      %v301 = vsub.f32 1.5, %v300
      %v302 = vmul.f32 %v297, %v301
      %v303 = vmul.f32 %v282, %v302
      %vm304 = vcmp.eq.f32.partialorder %v282, inf
      %v305 = vsel %vm304, %v282, %v303
      %vm306 = vcmp.eq.f32.partialorder %v282, 0.0
      %v307 = vand.u32 %v282, 2147483648
      %v308 = vsel %vm306, %v307, %v305
      %v309 = vrsqrt.pop %v283
      %v310 = vmul.f32 %v309, %v283
      %v311 = vmul.f32 %v310, %v309
      %v312 = vmul.f32 0.5, %v311
      %v313 = vsub.f32 1.5, %v312
      %v314 = vmul.f32 %v309, %v313
      %v315 = vmul.f32 %v283, %v314
      %vm316 = vcmp.eq.f32.partialorder %v283, inf
      %v317 = vsel %vm316, %v283, %v315
      %vm318 = vcmp.eq.f32.partialorder %v283, 0.0
      %v319 = vand.u32 %v283, 2147483648
      %v320 = vsel %vm318, %v319, %v317
      %v321 = vrsqrt.pop %v284
      %v322 = vmul.f32 %v321, %v284
      %v323 = vmul.f32 %v322, %v321
      %v324 = vmul.f32 0.5, %v323
      %v325 = vsub.f32 1.5, %v324
      %v326 = vmul.f32 %v321, %v325
      %v327 = vmul.f32 %v284, %v326
      %vm328 = vcmp.eq.f32.partialorder %v284, inf
      %v329 = vsel %vm328, %v284, %v327
      %vm330 = vcmp.eq.f32.partialorder %v284, 0.0
      %v331 = vand.u32 %v284, 2147483648
      %v332 = vsel %vm330, %v331, %v329
      %v333 = vmul.f32 %v296, 1.442695
      %v334 = vpow.pop %v333
      %v335 = vmul.f32 %v308, 1.442695
      %v336 = vpow.pop %v335
      %v337 = vmul.f32 %v320, 1.442695
      %v338 = vpow.pop %v337
      %v339 = vmul.f32 %v332, 1.442695
      %v340 = vpow.pop %v339
      %v341 = vrcp.pop %v334
      %v342 = vrcp.pop %v336
      %v343 = vrcp.pop %v338
      %v344 = vrcp.pop %v340
      %v345 = vadd.f32 %v334, %v341
      %v346 = vadd.f32 %v336, %v342
      %v347 = vadd.f32 %v338, %v343
      %v348 = vadd.f32 %v340, %v344
      %v349 = vmul.f32 %v345, 0.5
      %v350 = vmul.f32 %v346, 0.5
      %v351 = vmul.f32 %v347, 0.5
      %v352 = vmul.f32 %v348, 0.5
      %v353 = vsub.f32 %v334, %v341
      %v354 = vsub.f32 %v336, %v342
      %v355 = vsub.f32 %v338, %v343
      %v356 = vsub.f32 %v340, %v344
      %v357 = vmul.f32 %v353, 0.5
      %v358 = vmul.f32 %v354, 0.5
      %v359 = vmul.f32 %v355, 0.5
      %v360 = vmul.f32 %v356, 0.5
      %v361 = vrcp.pop %v296
      %v362 = vrcp.pop %v308
      %v363 = vrcp.pop %v320
      %v364 = vrcp.pop %v332
      %v365 = vmul.f32 %v357, %v361
      %v366 = vmul.f32 %v358, %v362
      %v367 = vmul.f32 %v359, %v363
      %v368 = vmul.f32 %v360, %v364
      %v369 = vadd.f32 %v349, %v365
      %v370 = vadd.f32 %v350, %v366
      %v371 = vadd.f32 %v351, %v367
      %v372 = vadd.f32 %v352, %v368
      %v373 = vmul.f32 %v365, %v256
      %v374 = vmul.f32 %v366, %v257
      %v375 = vmul.f32 %v367, %v258
      %v376 = vmul.f32 %v368, %v259
      %v377 = vld [vmem:[%s1] sm:$0xff]
      %v378 = vld [vmem:[%s1 + $0x8] sm:$0xff]
      %v379 = vpack.c.bf16 %v374, %v373
      %v380 = vpack.c.bf16 %v376, %v375
      %v381 = vpack.c.bf16 %v378, %v377
      %v382 = vld [vmem:[%s2] sm:$0x1]
      %v384 = vperm.slane %v382, 0
      %v386 = vmul.f32 %v369, %v384
      %v387 = vmul.f32 %v370, %v384
      %v388 = vmul.f32 %v371, %v384
      %v389 = vmul.f32 %v372, %v384
      %v391 = vsel %vm264, %v379, 0
      %v394 = vsel %vm264, %v380, 0
      %396 = vmatpush.bf16.msra.mxu0 0
      %397 = vmatpush.bf16.msra.mxu0 0
      %398 = vmatpush.bf16.msra.mxu0 0
      %399 = vmatpush.bf16.msra.mxu0 0
      %400 = vmatpush.bf16.msra.mxu0 0
      %401 = vmatpush.bf16.msra.mxu0 0
      %402 = vmatpush.bf16.msra.mxu0 0
      %403 = vmatpush.bf16.msra.mxu0 %v381
      %404 = vmatmul.bf16.gmra.mxu0 %v391
      %v405 = vpop.f32.mrf.mxu0
      %v406 = vadd.f32 %v386, %v405
      %v407 = vpop.f32.mrf.mxu0
      %v408 = vadd.f32 %v387, %v407
      %409 = vmatmul.bf16.gmra.mxu0 %v394
      %v410 = vpop.f32.mrf.mxu0
      %v411 = vadd.f32 %v388, %v410
      %v412 = vpop.f32.mrf.mxu0
      %v413 = vadd.f32 %v389, %v412
      %414 = vdwg.mxu0
      %v415 = vld [vmem:[%s3] sm:$0x1]
      %v417 = vperm.slane %v415, 0
      %v419 = vadd.f32 %v406, %v417
      %v420 = vadd.f32 %v408, %v417
      %v421 = vadd.f32 %v411, %v417
      %v422 = vadd.f32 %v413, %v417
      %v423 = vmul.f32 %v419, %v419
      %v424 = vmul.f32 %v420, %v420
      %v425 = vmul.f32 %v421, %v421
      %v426 = vmul.f32 %v422, %v422
      %vm427 = vcmask 261120
      %v428 = vsel %vm427, %v423, 0.0
      %429 = vadd.xlane.f32.xlu0 %v428
      %v430 = vpop.xlane.xlu0 %429
      %v431 = vsel %vm427, %v424, 0.0
      %432 = vadd.xlane.f32.xlu0 %v431
      %v433 = vpop.xlane.xlu0 %432
      %v434 = vsel %vm427, %v425, 0.0
      %435 = vadd.xlane.f32.xlu0 %v434
      %v436 = vpop.xlane.xlu0 %435
      %v437 = vsel %vm427, %v426, 0.0
      %438 = vadd.xlane.f32.xlu0 %v437
      %v439 = vpop.xlane.xlu0 %438
      %v440 = vadd.f32 %v430, 1.0
      %v441 = vadd.f32 %v433, 1.0
      %v442 = vadd.f32 %v436, 1.0
      %v443 = vadd.f32 %v439, 1.0
      %v444 = vrsqrt.pop %v440
      %v445 = vmul.f32 %v444, %v440
      %v446 = vmul.f32 %v445, %v444
      %v447 = vmul.f32 0.5, %v446
      %v448 = vsub.f32 1.5, %v447
      %v449 = vmul.f32 %v444, %v448
      %v450 = vmul.f32 %v440, %v449
      %vm451 = vcmp.eq.f32.partialorder %v440, inf
      %v452 = vsel %vm451, %v440, %v450
      %vm453 = vcmp.eq.f32.partialorder %v440, 0.0
      %v454 = vand.u32 %v440, 2147483648
      %v455 = vsel %vm453, %v454, %v452
      %v456 = vrsqrt.pop %v441
      %v457 = vmul.f32 %v456, %v441
      %v458 = vmul.f32 %v457, %v456
      %v459 = vmul.f32 0.5, %v458
      %v460 = vsub.f32 1.5, %v459
      %v461 = vmul.f32 %v456, %v460
      %v462 = vmul.f32 %v441, %v461
      %vm463 = vcmp.eq.f32.partialorder %v441, inf
      %v464 = vsel %vm463, %v441, %v462
      %vm465 = vcmp.eq.f32.partialorder %v441, 0.0
      %v466 = vand.u32 %v441, 2147483648
      %v467 = vsel %vm465, %v466, %v464
      %v468 = vrsqrt.pop %v442
      %v469 = vmul.f32 %v468, %v442
      %v470 = vmul.f32 %v469, %v468
      %v471 = vmul.f32 0.5, %v470
      %v472 = vsub.f32 1.5, %v471
      %v473 = vmul.f32 %v468, %v472
      %v474 = vmul.f32 %v442, %v473
      %vm475 = vcmp.eq.f32.partialorder %v442, inf
      %v476 = vsel %vm475, %v442, %v474
      %vm477 = vcmp.eq.f32.partialorder %v442, 0.0
      %v478 = vand.u32 %v442, 2147483648
      %v479 = vsel %vm477, %v478, %v476
      %v480 = vrsqrt.pop %v443
      %v481 = vmul.f32 %v480, %v443
      %v482 = vmul.f32 %v481, %v480
      %v483 = vmul.f32 0.5, %v482
      %v484 = vsub.f32 1.5, %v483
      %v485 = vmul.f32 %v480, %v484
      %v486 = vmul.f32 %v443, %v485
      %vm487 = vcmp.eq.f32.partialorder %v443, inf
      %v488 = vsel %vm487, %v443, %v486
      %vm489 = vcmp.eq.f32.partialorder %v443, 0.0
      %v490 = vand.u32 %v443, 2147483648
      %v491 = vsel %vm489, %v490, %v488
      %496 = vrot.lane.b32.xlu0 %v423, 96
      %v497 = vpop.permute.xlu0 %496
      %498 = vrot.lane.b32.xlu0 %v424, 96
      %v499 = vpop.permute.xlu0 %498
      %500 = vrot.lane.b32.xlu0 %v425, 96
      %v501 = vpop.permute.xlu0 %500
      %502 = vrot.lane.b32.xlu0 %v426, 96
      %v503 = vpop.permute.xlu0 %502
      %v508 = vsel %vm427, %v497, 0.0
      %509 = vadd.xlane.f32.xlu0 %v508
      %v510 = vpop.xlane.xlu0 %509
      %v511 = vsel %vm427, %v499, 0.0
      %512 = vadd.xlane.f32.xlu0 %v511
      %v513 = vpop.xlane.xlu0 %512
      %v514 = vsel %vm427, %v501, 0.0
      %515 = vadd.xlane.f32.xlu0 %v514
      %v516 = vpop.xlane.xlu0 %515
      %v517 = vsel %vm427, %v503, 0.0
      %518 = vadd.xlane.f32.xlu0 %v517
      %v519 = vpop.xlane.xlu0 %518
      %v520 = vadd.f32 %v510, 1.0
      %v521 = vadd.f32 %v513, 1.0
      %v522 = vadd.f32 %v516, 1.0
      %v523 = vadd.f32 %v519, 1.0
      %v524 = vrsqrt.pop %v520
      %v525 = vmul.f32 %v524, %v520
      %v526 = vmul.f32 %v525, %v524
      %v527 = vmul.f32 0.5, %v526
      %v528 = vsub.f32 1.5, %v527
      %v529 = vmul.f32 %v524, %v528
      %v530 = vmul.f32 %v520, %v529
      %vm531 = vcmp.eq.f32.partialorder %v520, inf
      %v532 = vsel %vm531, %v520, %v530
      %vm533 = vcmp.eq.f32.partialorder %v520, 0.0
      %v534 = vand.u32 %v520, 2147483648
      %v535 = vsel %vm533, %v534, %v532
      %v536 = vrsqrt.pop %v521
      %v537 = vmul.f32 %v536, %v521
      %v538 = vmul.f32 %v537, %v536
      %v539 = vmul.f32 0.5, %v538
      %v540 = vsub.f32 1.5, %v539
      %v541 = vmul.f32 %v536, %v540
      %v542 = vmul.f32 %v521, %v541
      %vm543 = vcmp.eq.f32.partialorder %v521, inf
      %v544 = vsel %vm543, %v521, %v542
      %vm545 = vcmp.eq.f32.partialorder %v521, 0.0
      %v546 = vand.u32 %v521, 2147483648
      %v547 = vsel %vm545, %v546, %v544
      %v548 = vrsqrt.pop %v522
      %v549 = vmul.f32 %v548, %v522
      %v550 = vmul.f32 %v549, %v548
      %v551 = vmul.f32 0.5, %v550
      %v552 = vsub.f32 1.5, %v551
      %v553 = vmul.f32 %v548, %v552
      %v554 = vmul.f32 %v522, %v553
      %vm555 = vcmp.eq.f32.partialorder %v522, inf
      %v556 = vsel %vm555, %v522, %v554
      %vm557 = vcmp.eq.f32.partialorder %v522, 0.0
      %v558 = vand.u32 %v522, 2147483648
      %v559 = vsel %vm557, %v558, %v556
      %v560 = vrsqrt.pop %v523
      %v561 = vmul.f32 %v560, %v523
      %v562 = vmul.f32 %v561, %v560
      %v563 = vmul.f32 0.5, %v562
      %v564 = vsub.f32 1.5, %v563
      %v565 = vmul.f32 %v560, %v564
      %v566 = vmul.f32 %v523, %v565
      %vm567 = vcmp.eq.f32.partialorder %v523, inf
      %v568 = vsel %vm567, %v523, %v566
      %vm569 = vcmp.eq.f32.partialorder %v523, 0.0
      %v570 = vand.u32 %v523, 2147483648
      %v571 = vsel %vm569, %v570, %v568
      %v572 = vadd.f32 %v455, %v535
      %v573 = vadd.f32 %v467, %v547
      %v574 = vadd.f32 %v479, %v559
      %v575 = vadd.f32 %v491, %v571
      %v576 = vmul.f32 %v572, 0.5
      %v577 = vmul.f32 %v573, 0.5
      %v578 = vmul.f32 %v574, 0.5
      %v579 = vmul.f32 %v575, 0.5
      %584 = vrot.lane.b32.xlu0 %v419, 96
      %v585 = vpop.permute.xlu0 %584
      %586 = vrot.lane.b32.xlu0 %v420, 96
      %v587 = vpop.permute.xlu0 %586
      %588 = vrot.lane.b32.xlu0 %v421, 96
      %v589 = vpop.permute.xlu0 %588
      %590 = vrot.lane.b32.xlu0 %v422, 96
      %v591 = vpop.permute.xlu0 %590
      %v596 = vadd.f32 %v419, %v585
      %v597 = vadd.f32 %v420, %v587
      %v598 = vadd.f32 %v421, %v589
      %v599 = vadd.f32 %v422, %v591
      %v600 = vmul.f32 %v596, 0.5
      %v601 = vmul.f32 %v597, 0.5
      %v602 = vmul.f32 %v598, 0.5
      %v603 = vmul.f32 %v599, 0.5
      %v604 = vsub.f32 0.0, %v576
      %v605 = vsub.f32 0.0, %v577
      %v606 = vsub.f32 0.0, %v578
      %v607 = vsub.f32 0.0, %v579
      %v608 = vmul.f32 %v604, %v576
      %v609 = vmul.f32 %v605, %v577
      %v610 = vmul.f32 %v606, %v578
      %v611 = vmul.f32 %v607, %v579
      %v612 = vmul.f32 %v600, %v600
      %v613 = vmul.f32 %v601, %v601
      %v614 = vmul.f32 %v602, %v602
      %v615 = vmul.f32 %v603, %v603
      %v616 = vsel %vm427, %v612, 0.0
      %617 = vadd.xlane.f32.xlu0 %v616
      %v618 = vpop.xlane.xlu0 %617
      %v619 = vsel %vm427, %v613, 0.0
      %620 = vadd.xlane.f32.xlu0 %v619
      %v621 = vpop.xlane.xlu0 %620
      %v622 = vsel %vm427, %v614, 0.0
      %623 = vadd.xlane.f32.xlu0 %v622
      %v624 = vpop.xlane.xlu0 %623
      %v625 = vsel %vm427, %v615, 0.0
      %626 = vadd.xlane.f32.xlu0 %v625
      %v627 = vpop.xlane.xlu0 %626
      %v628 = vadd.f32 %v608, %v618
      %v629 = vadd.f32 %v609, %v621
      %v630 = vadd.f32 %v610, %v624
      %v631 = vadd.f32 %v611, %v627
      %v632 = vand.u32 2147483647, %v628
      %v633 = vand.u32 2147483647, %v629
      %v634 = vand.u32 2147483647, %v630
      %v635 = vand.u32 2147483647, %v631
      %v636 = vmax.f32 %v632, 1e-08
      %v637 = vmax.f32 %v633, 1e-08
      %v638 = vmax.f32 %v634, 1e-08
      %v639 = vmax.f32 %v635, 1e-08
      %v640 = vrsqrt.pop %v636
      %v641 = vmul.f32 %v640, %v636
      %v642 = vmul.f32 %v641, %v640
      %v643 = vmul.f32 0.5, %v642
      %v644 = vsub.f32 1.5, %v643
      %v645 = vmul.f32 %v640, %v644
      %v646 = vmul.f32 %v636, %v645
      %vm647 = vcmp.eq.f32.partialorder %v636, inf
      %v648 = vsel %vm647, %v636, %v646
      %vm649 = vcmp.eq.f32.partialorder %v636, 0.0
      %v650 = vand.u32 %v636, 2147483648
      %v651 = vsel %vm649, %v650, %v648
      %v652 = vrsqrt.pop %v637
      %v653 = vmul.f32 %v652, %v637
      %v654 = vmul.f32 %v653, %v652
      %v655 = vmul.f32 0.5, %v654
      %v656 = vsub.f32 1.5, %v655
      %v657 = vmul.f32 %v652, %v656
      %v658 = vmul.f32 %v637, %v657
      %vm659 = vcmp.eq.f32.partialorder %v637, inf
      %v660 = vsel %vm659, %v637, %v658
      %vm661 = vcmp.eq.f32.partialorder %v637, 0.0
      %v662 = vand.u32 %v637, 2147483648
      %v663 = vsel %vm661, %v662, %v660
      %v664 = vrsqrt.pop %v638
      %v665 = vmul.f32 %v664, %v638
      %v666 = vmul.f32 %v665, %v664
      %v667 = vmul.f32 0.5, %v666
      %v668 = vsub.f32 1.5, %v667
      %v669 = vmul.f32 %v664, %v668
      %v670 = vmul.f32 %v638, %v669
      %vm671 = vcmp.eq.f32.partialorder %v638, inf
      %v672 = vsel %vm671, %v638, %v670
      %vm673 = vcmp.eq.f32.partialorder %v638, 0.0
      %v674 = vand.u32 %v638, 2147483648
      %v675 = vsel %vm673, %v674, %v672
      %v676 = vrsqrt.pop %v639
      %v677 = vmul.f32 %v676, %v639
      %v678 = vmul.f32 %v677, %v676
      %v679 = vmul.f32 0.5, %v678
      %v680 = vsub.f32 1.5, %v679
      %v681 = vmul.f32 %v676, %v680
      %v682 = vmul.f32 %v639, %v681
      %vm683 = vcmp.eq.f32.partialorder %v639, inf
      %v684 = vsel %vm683, %v639, %v682
      %vm685 = vcmp.eq.f32.partialorder %v639, 0.0
      %v686 = vand.u32 %v639, 2147483648
      %v687 = vsel %vm685, %v686, %v684
      %v688 = vrcp.pop %v651
      %v689 = vrcp.pop %v663
      %v690 = vrcp.pop %v675
      %v691 = vrcp.pop %v687
      %v692 = vmul.f32 %v600, %v688
      %v693 = vmul.f32 %v601, %v689
      %v694 = vmul.f32 %v602, %v690
      %v695 = vmul.f32 %v603, %v691
      %v696 = vsel %vm427, %v692, 0.0
      %697 = vadd.xlane.f32.xlu0 %v696
      %v698 = vpop.xlane.xlu0 %697
      %v699 = vsel %vm427, %v693, 0.0
      %700 = vadd.xlane.f32.xlu0 %v699
      %v701 = vpop.xlane.xlu0 %700
      %v702 = vsel %vm427, %v694, 0.0
      %703 = vadd.xlane.f32.xlu0 %v702
      %v704 = vpop.xlane.xlu0 %703
      %v705 = vsel %vm427, %v695, 0.0
      %706 = vadd.xlane.f32.xlu0 %v705
      %v707 = vpop.xlane.xlu0 %706
      %v708 = vrcp.pop 32.0
      %v709 = vmul.f32 32.0, %v708
      %v710 = vsub.f32 1.0, %v709
      %v711 = vmul.f32 %v708, %v710
      %v712 = vadd.f32 %v708, %v711
      %vm713 = vweird.f32 %v708
      %v714 = vsel %vm713, %v708, %v712
      %v715 = vmul.f32 %v698, %v714
      %v716 = vmul.f32 %v701, %v714
      %v717 = vmul.f32 %v704, %v714
      %v718 = vmul.f32 %v707, %v714
      %v719 = vsub.f32 %v692, %v715
      %v720 = vsub.f32 %v693, %v716
      %v721 = vsub.f32 %v694, %v717
      %v722 = vsub.f32 %v695, %v718
      %v723 = vmul.f32 %v719, %v719
      %v724 = vmul.f32 %v720, %v720
      %v725 = vmul.f32 %v721, %v721
      %v726 = vmul.f32 %v722, %v722
      %v727 = vsel %vm427, %v723, 0.0
      %728 = vadd.xlane.f32.xlu0 %v727
      %v729 = vpop.xlane.xlu0 %728
      %v730 = vsel %vm427, %v724, 0.0
      %731 = vadd.xlane.f32.xlu0 %v730
      %v732 = vpop.xlane.xlu0 %731
      %v733 = vsel %vm427, %v725, 0.0
      %734 = vadd.xlane.f32.xlu0 %v733
      %v735 = vpop.xlane.xlu0 %734
      %v736 = vsel %vm427, %v726, 0.0
      %737 = vadd.xlane.f32.xlu0 %v736
      %v738 = vpop.xlane.xlu0 %737
      %v739 = vmul.f32 %v729, %v714
      %v740 = vmul.f32 %v732, %v714
      %v741 = vmul.f32 %v735, %v714
      %v742 = vmul.f32 %v738, %v714
      %v743 = vadd.f32 %v739, 1e-05
      %v744 = vadd.f32 %v740, 1e-05
      %v745 = vadd.f32 %v741, 1e-05
      %v746 = vadd.f32 %v742, 1e-05
      %v747 = vrsqrt.pop %v743
      %v748 = vmul.f32 %v747, %v743
      %v749 = vmul.f32 %v748, %v747
      %v750 = vmul.f32 0.5, %v749
      %v751 = vsub.f32 1.5, %v750
      %v752 = vmul.f32 %v747, %v751
      %vm753 = vweird.f32 %v743
      %vm754 = vweird.f32 %v747
      %vm755 = vmor %vm753, %vm754
      %v756 = vsel %vm755, %v747, %v752
      %v757 = vrsqrt.pop %v744
      %v758 = vmul.f32 %v757, %v744
      %v759 = vmul.f32 %v758, %v757
      %v760 = vmul.f32 0.5, %v759
      %v761 = vsub.f32 1.5, %v760
      %v762 = vmul.f32 %v757, %v761
      %vm763 = vweird.f32 %v744
      %vm764 = vweird.f32 %v757
      %vm765 = vmor %vm763, %vm764
      %v766 = vsel %vm765, %v757, %v762
      %v767 = vrsqrt.pop %v745
      %v768 = vmul.f32 %v767, %v745
      %v769 = vmul.f32 %v768, %v767
      %v770 = vmul.f32 0.5, %v769
      %v771 = vsub.f32 1.5, %v770
      %v772 = vmul.f32 %v767, %v771
      %vm773 = vweird.f32 %v745
      %vm774 = vweird.f32 %v767
      %vm775 = vmor %vm773, %vm774
      %v776 = vsel %vm775, %v767, %v772
      %v777 = vrsqrt.pop %v746
      %v778 = vmul.f32 %v777, %v746
      %v779 = vmul.f32 %v778, %v777
      %v780 = vmul.f32 0.5, %v779
      %v781 = vsub.f32 1.5, %v780
      %v782 = vmul.f32 %v777, %v781
      %vm783 = vweird.f32 %v746
      %vm784 = vweird.f32 %v777
      %vm785 = vmor %vm783, %vm784
      %v786 = vsel %vm785, %v777, %v782
      %v787 = vmul.f32 %v719, %v756
      %v788 = vmul.f32 %v720, %v766
      %v789 = vmul.f32 %v721, %v776
      %v790 = vmul.f32 %v722, %v786
      %v791 = vld [vmem:[%s4] sm:$0x1]
      %v793 = vperm.slane %v791, 0
      %v795 = vmul.f32 %v787, %v793
      %v796 = vmul.f32 %v788, %v793
      %v797 = vmul.f32 %v789, %v793
      %v798 = vmul.f32 %v790, %v793
      %v799 = vld [vmem:[%s5] sm:$0x1]
      %v801 = vperm.slane %v799, 0
      %v803 = vadd.f32 %v795, %v801
      %v804 = vadd.f32 %v796, %v801
      %v805 = vadd.f32 %v797, %v801
      %v806 = vadd.f32 %v798, %v801
      %v807 = vmax.f32 %v803, 0.0
      %v808 = vmax.f32 %v804, 0.0
      %v809 = vmax.f32 %v805, 0.0
      %v810 = vmax.f32 %v806, 0.0
      %811 = vst.msk [vmem:[%s253] sm:$0xff] %vm427, %v807
      %812 = vst.msk [vmem:[%s253 + $0x8] sm:$0xff] %vm427, %v808
      %813 = vst.msk [vmem:[%s253 + $0x10] sm:$0xff] %vm427, %v809
      %814 = vst.msk [vmem:[%s253 + $0x18] sm:$0xff] %vm427, %v810
      %s815 = smul.u32 4, %s17
      %p816 = scmp.lt.s32.totalorder %s815, 7
      %s817 = scalar_select %p816, %s815, 7
      %s818 = smul.addr %s817, 8
      %s819 = scalar_lea.vmem %s6, %s818
      // Predicated region
      $region45: #{transconv_forward.4} parent=43 // pred_check
        %p820 = pneg %p166
      $region46: #{transconv_forward.4} parent=43 // pred_check_branch
        %822 = sbr.rel (%p820) target = $region48
      $region47: #{transconv_forward.4} parent=43 // pred_region
        %s823 = smul.u32 4, %s17
      $region48: #{transconv_forward.4} parent=43 // pred_fallthru
        _
    $region44: #{transconv_forward.4} parent=5 // pred_fallthru
      _
    %p824 = scmp.le.s32.totalorder 2, %s12
    // Predicated region
    $region49: #{transconv_forward.4} parent=5 // pred_check
      %p825 = pneg %p824
    $region50: #{transconv_forward.4} parent=5 // pred_check_branch
      %827 = sbr.rel (%p825) target = $region52
    $region51: #{transconv_forward.4} parent=5 // pred_region
      %s828 = ssub.s32 %s12, 2
      // Predicated region
      $region53: #{transconv_forward.4} parent=51 // pred_check
        %p829 = pneg %p172
      $region54: #{transconv_forward.4} parent=51 // pred_check_branch
        %831 = sbr.rel (%p829) target = $region56
      $region55: #{transconv_forward.4} parent=51 // pred_region
        %s832 = smul.u32 4, %s18
        %p833 = scmp.lt.s32.totalorder %s832, 7
        %s834 = scalar_select %p833, %s832, 7
        %s835 = smul.addr %s834, 8
        %s836 = scalar_lea.vmem %s6, %s835
      $region56: #{transconv_forward.4} parent=51 // pred_fallthru
        _
    $region52: #{transconv_forward.4} parent=5 // pred_fallthru
      _
  $region6: #{transconv_forward.4} parent=0 // loop_footer
    %s16 = sadd.s32 1, %s12
  $region7: #{transconv_forward.4} parent=0 // loop_footer_branch
    %11 = sbr.rel target = $region3
  $region8: #{transconv_forward.4} parent=0 // loop_exit
    _

// kernel: transconv_forward.5
$region0: #{transconv_forward.5}
  #allocation0 [shape = 'u32[]', space=smem, size = 0x4, offset = 0x4, fixed_abs, tag = 'smem constant byte address 0x4 - core index']
  #allocation1 [shape = 'u32[72,128]{1,0:T(1,128)}', space=vmem, size = 0x9000, scoped, tag = 'internal scratch']
  #allocation2 [shape = 'f32[32,32]{1,0:T(8,128)}', space=vmem, size = 0x4000, scoped, tag = 'scratch operand']
  #allocation3 [shape = 'f32[1,32]{1,0:T(1,128)}', space=vmem, size = 0x200, scoped, tag = 'scratch operand']
  %s0 = inlined_call_operand.vmem [shape: f32[64,32], index: 0, kind: input, shape index: {}]
  %s1 = inlined_call_operand.vmem [shape: f32[32,64], index: 1, kind: input, shape index: {}]
  %s2 = inlined_call_operand.vmem [shape: f32[1,64], index: 2, kind: input, shape index: {}]
  %s3 = inlined_call_operand.vmem [shape: f32[1,64], index: 3, kind: input, shape index: {}]
  %s4 = inlined_call_operand.vmem [shape: f32[32,64], index: 4, kind: input, shape index: {}]
  %s5 = inlined_call_operand.vmem [shape: f32[1,64], index: 5, kind: input, shape index: {}]
  %s6 = inlined_call_operand.vmem [shape: f32[1,64], index: 6, kind: input, shape index: {}]
  %s7 = inlined_call_operand.vmem [shape: f32[32,32], index: 7, kind: input, shape index: {}]
  %s8 = inlined_call_operand.vmem [shape: f32[1,32], index: 8, kind: input, shape index: {}]
  %s9 = inlined_call_operand.vmem [shape: f32[1,32], index: 9, kind: input, shape index: {}]
  %s10 = inlined_call_operand.vmem [shape: f32[1,32], index: 10, kind: input, shape index: {}]
  %s11 = inlined_call_operand.vmem [shape: f32[64,32], index: 11, kind: output, shape index: {}]
  %s12 = sld [smem:[#allocation0]]
  $region89: #{transconv_forward.5} parent=0
    _
  %s14 = ssub.s32 1, %s12
  %s15 = scalar_select 0, %s14, %s12
  loop: start=0, step=1, limit=6
  $region2: #{transconv_forward.5} parent=0 // loop_pre_header
    _
  $region3: #{transconv_forward.5} parent=0 // loop_header
    %s17 = sphi 0, %s21
    %p18 = scmp.ge.s32.totalorder %s17, 6
    %s24 = sphi 0, %s36
    %s25 = sphi 0, %s32
    %s26 = sphi 0, %s24
    %s27 = sphi 0, %s25
    %s28 = sphi 0, %s26
    %s29 = sphi 0, %s27
    %s39 = sphi 0, %s41
    %s42 = sphi 0, %s39
    %s43 = sphi 0, %s42
    %s59 = sphi 0, %s43
    %s63 = sphi 0, %s63
    %s65 = sphi 0, %s63
    %s66 = sphi 0, %s65
    %s80 = sphi 0, %s66
    %s84 = sphi 0, %s84
    %s86 = sphi 0, %s84
    %s87 = sphi 0, %s86
    %s101 = sphi 0, %s87
    %s105 = sphi 0, %s105
    %s107 = sphi 0, %s105
    %s108 = sphi 0, %s107
    %s122 = sphi 0, %s108
    %s126 = sphi 0, %s126
    %s128 = sphi 0, %s126
    %s129 = sphi 0, %s128
    %s143 = sphi 0, %s129
    %s147 = sphi 0, %s147
    %s149 = sphi 0, %s147
    %s150 = sphi 0, %s149
    %s164 = sphi 0, %s150
    %s168 = sphi 0, %s168
    %s170 = sphi 0, %s168
    %s171 = sphi 0, %s170
    %s185 = sphi 0, %s171
    %s189 = sphi 0, %s189
    %s191 = sphi 0, %s189
    %s192 = sphi 0, %s191
    %s206 = sphi 0, %s192
    %s210 = sphi 0, %s210
    %s212 = sphi 0, %s210
    %s213 = sphi 0, %s212
    %s227 = sphi 0, %s213
    %s231 = sphi 0, %s231
    %s233 = sphi 0, %s231
    %s234 = sphi 0, %s233
    %s248 = sphi 0, %s234
    %s252 = sphi 0, %s252
    %s254 = sphi 0, %s252
    %s255 = sphi 0, %s254
    %s269 = sphi 0, %s255
    %s277 = sphi 0, %s279
    %s280 = sphi 0, %s277
    %s281 = sphi 0, %s280
    %s297 = sphi 0, %s281
  $region4: #{transconv_forward.5} parent=0 // loop_header_branch
    %20 = sbr.rel (%p18) target = $region8
  $region5: #{transconv_forward.5} parent=0 // loop_body
    %s22 = ssub.s32 %s17, 1
    %s23 = ssub.s32 %s17, 2
    %s30 = sadd.s32 1, %s25
    %p31 = scmp.ge.s32.totalorder %s30, 2
    %s32 = scalar_select %p31, 0, %s30
    %s33 = sadd.s32 1, %s24
    %s34 = scalar_select %p31, %s33, %s24
    %p35 = scmp.ge.s32.totalorder %s34, 2
    %s36 = scalar_select %p35, 0, %s34
    %s37 = ssub.s32 %s25, %s32
    %p38 = scmp.eq.s32.totalorder %s37, 0
    %s40 = sadd.s32 %s39, 1
    %s41 = scalar_select %p38, %s39, %s40
    %p44 = pneg %p38
    %p45 = scmp.eq.s32.totalorder %s17, 3
    %p46 = por %p44, %p45
    %p47 = scmp.ne.s32.totalorder %s39, %s42
    %p48 = scmp.eq.s32.totalorder %s17, 0
    %p49 = por %p47, %p48
    %p50 = scmp.ne.s32.totalorder %s39, %s42
    %p51 = scmp.eq.s32.totalorder %s22, 3
    %p52 = por %p50, %p51
    %p53 = scmp.ne.s32.totalorder %s42, %s43
    %p54 = scmp.eq.s32.totalorder %s22, 0
    %p55 = por %p53, %p54
    %p56 = scmp.ne.s32.totalorder %s42, %s43
    %p57 = scmp.eq.s32.totalorder %s23, 3
    %p58 = por %p56, %p57
    %p60 = scmp.ne.s32.totalorder %s43, %s59
    %p61 = scmp.eq.s32.totalorder %s23, 0
    %p62 = por %p60, %p61
    %s64 = sadd.s32 %s63, 1
    %p67 = scmp.eq.s32.totalorder %s17, 3
    %p68 = scmp.ne.s32.totalorder %s63, %s65
    %p69 = scmp.eq.s32.totalorder %s17, 0
    %p70 = por %p68, %p69
    %p71 = scmp.ne.s32.totalorder %s63, %s65
    %p72 = scmp.eq.s32.totalorder %s22, 3
    %p73 = por %p71, %p72
    %p74 = scmp.ne.s32.totalorder %s65, %s66
    %p75 = scmp.eq.s32.totalorder %s22, 0
    %p76 = por %p74, %p75
    %p77 = scmp.ne.s32.totalorder %s65, %s66
    %p78 = scmp.eq.s32.totalorder %s23, 3
    %p79 = por %p77, %p78
    %p81 = scmp.ne.s32.totalorder %s66, %s80
    %p82 = scmp.eq.s32.totalorder %s23, 0
    %p83 = por %p81, %p82
    %s85 = sadd.s32 %s84, 1
    %p88 = scmp.eq.s32.totalorder %s17, 3
    %p89 = scmp.ne.s32.totalorder %s84, %s86
    %p90 = scmp.eq.s32.totalorder %s17, 0
    %p91 = por %p89, %p90
    %p92 = scmp.ne.s32.totalorder %s84, %s86
    %p93 = scmp.eq.s32.totalorder %s22, 3
    %p94 = por %p92, %p93
    %p95 = scmp.ne.s32.totalorder %s86, %s87
    %p96 = scmp.eq.s32.totalorder %s22, 0
    %p97 = por %p95, %p96
    %p98 = scmp.ne.s32.totalorder %s86, %s87
    %p99 = scmp.eq.s32.totalorder %s23, 3
    %p100 = por %p98, %p99
    %p102 = scmp.ne.s32.totalorder %s87, %s101
    %p103 = scmp.eq.s32.totalorder %s23, 0
    %p104 = por %p102, %p103
    %s106 = sadd.s32 %s105, 1
    %p109 = scmp.eq.s32.totalorder %s17, 3
    %p110 = scmp.ne.s32.totalorder %s105, %s107
    %p111 = scmp.eq.s32.totalorder %s17, 0
    %p112 = por %p110, %p111
    %p113 = scmp.ne.s32.totalorder %s105, %s107
    %p114 = scmp.eq.s32.totalorder %s22, 3
    %p115 = por %p113, %p114
    %p116 = scmp.ne.s32.totalorder %s107, %s108
    %p117 = scmp.eq.s32.totalorder %s22, 0
    %p118 = por %p116, %p117
    %p119 = scmp.ne.s32.totalorder %s107, %s108
    %p120 = scmp.eq.s32.totalorder %s23, 3
    %p121 = por %p119, %p120
    %p123 = scmp.ne.s32.totalorder %s108, %s122
    %p124 = scmp.eq.s32.totalorder %s23, 0
    %p125 = por %p123, %p124
    %s127 = sadd.s32 %s126, 1
    %p130 = scmp.eq.s32.totalorder %s17, 3
    %p131 = scmp.ne.s32.totalorder %s126, %s128
    %p132 = scmp.eq.s32.totalorder %s17, 0
    %p133 = por %p131, %p132
    %p134 = scmp.ne.s32.totalorder %s126, %s128
    %p135 = scmp.eq.s32.totalorder %s22, 3
    %p136 = por %p134, %p135
    %p137 = scmp.ne.s32.totalorder %s128, %s129
    %p138 = scmp.eq.s32.totalorder %s22, 0
    %p139 = por %p137, %p138
    %p140 = scmp.ne.s32.totalorder %s128, %s129
    %p141 = scmp.eq.s32.totalorder %s23, 3
    %p142 = por %p140, %p141
    %p144 = scmp.ne.s32.totalorder %s129, %s143
    %p145 = scmp.eq.s32.totalorder %s23, 0
    %p146 = por %p144, %p145
    %s148 = sadd.s32 %s147, 1
    %p151 = scmp.eq.s32.totalorder %s17, 3
    %p152 = scmp.ne.s32.totalorder %s147, %s149
    %p153 = scmp.eq.s32.totalorder %s17, 0
    %p154 = por %p152, %p153
    %p155 = scmp.ne.s32.totalorder %s147, %s149
    %p156 = scmp.eq.s32.totalorder %s22, 3
    %p157 = por %p155, %p156
    %p158 = scmp.ne.s32.totalorder %s149, %s150
    %p159 = scmp.eq.s32.totalorder %s22, 0
    %p160 = por %p158, %p159
    %p161 = scmp.ne.s32.totalorder %s149, %s150
    %p162 = scmp.eq.s32.totalorder %s23, 3
    %p163 = por %p161, %p162
    %p165 = scmp.ne.s32.totalorder %s150, %s164
    %p166 = scmp.eq.s32.totalorder %s23, 0
    %p167 = por %p165, %p166
    %s169 = sadd.s32 %s168, 1
    %p172 = scmp.eq.s32.totalorder %s17, 3
    %p173 = scmp.ne.s32.totalorder %s168, %s170
    %p174 = scmp.eq.s32.totalorder %s17, 0
    %p175 = por %p173, %p174
    %p176 = scmp.ne.s32.totalorder %s168, %s170
    %p177 = scmp.eq.s32.totalorder %s22, 3
    %p178 = por %p176, %p177
    %p179 = scmp.ne.s32.totalorder %s170, %s171
    %p180 = scmp.eq.s32.totalorder %s22, 0
    %p181 = por %p179, %p180
    %p182 = scmp.ne.s32.totalorder %s170, %s171
    %p183 = scmp.eq.s32.totalorder %s23, 3
    %p184 = por %p182, %p183
    %p186 = scmp.ne.s32.totalorder %s171, %s185
    %p187 = scmp.eq.s32.totalorder %s23, 0
    %p188 = por %p186, %p187
    %s190 = sadd.s32 %s189, 1
    %p193 = scmp.eq.s32.totalorder %s17, 3
    %p194 = scmp.ne.s32.totalorder %s189, %s191
    %p195 = scmp.eq.s32.totalorder %s17, 0
    %p196 = por %p194, %p195
    %p197 = scmp.ne.s32.totalorder %s189, %s191
    %p198 = scmp.eq.s32.totalorder %s22, 3
    %p199 = por %p197, %p198
    %p200 = scmp.ne.s32.totalorder %s191, %s192
    %p201 = scmp.eq.s32.totalorder %s22, 0
    %p202 = por %p200, %p201
    %p203 = scmp.ne.s32.totalorder %s191, %s192
    %p204 = scmp.eq.s32.totalorder %s23, 3
    %p205 = por %p203, %p204
    %p207 = scmp.ne.s32.totalorder %s192, %s206
    %p208 = scmp.eq.s32.totalorder %s23, 0
    %p209 = por %p207, %p208
    %s211 = sadd.s32 %s210, 1
    %p214 = scmp.eq.s32.totalorder %s17, 3
    %p215 = scmp.ne.s32.totalorder %s210, %s212
    %p216 = scmp.eq.s32.totalorder %s17, 0
    %p217 = por %p215, %p216
    %p218 = scmp.ne.s32.totalorder %s210, %s212
    %p219 = scmp.eq.s32.totalorder %s22, 3
    %p220 = por %p218, %p219
    %p221 = scmp.ne.s32.totalorder %s212, %s213
    %p222 = scmp.eq.s32.totalorder %s22, 0
    %p223 = por %p221, %p222
    %p224 = scmp.ne.s32.totalorder %s212, %s213
    %p225 = scmp.eq.s32.totalorder %s23, 3
    %p226 = por %p224, %p225
    %p228 = scmp.ne.s32.totalorder %s213, %s227
    %p229 = scmp.eq.s32.totalorder %s23, 0
    %p230 = por %p228, %p229
    %s232 = sadd.s32 %s231, 1
    %p235 = scmp.eq.s32.totalorder %s17, 3
    %p236 = scmp.ne.s32.totalorder %s231, %s233
    %p237 = scmp.eq.s32.totalorder %s17, 0
    %p238 = por %p236, %p237
    %p239 = scmp.ne.s32.totalorder %s231, %s233
    %p240 = scmp.eq.s32.totalorder %s22, 3
    %p241 = por %p239, %p240
    %p242 = scmp.ne.s32.totalorder %s233, %s234
    %p243 = scmp.eq.s32.totalorder %s22, 0
    %p244 = por %p242, %p243
    %p245 = scmp.ne.s32.totalorder %s233, %s234
    %p246 = scmp.eq.s32.totalorder %s23, 3
    %p247 = por %p245, %p246
    %p249 = scmp.ne.s32.totalorder %s234, %s248
    %p250 = scmp.eq.s32.totalorder %s23, 0
    %p251 = por %p249, %p250
    %s253 = sadd.s32 %s252, 1
    %p256 = scmp.eq.s32.totalorder %s17, 3
    %p257 = scmp.ne.s32.totalorder %s252, %s254
    %p258 = scmp.eq.s32.totalorder %s17, 0
    %p259 = por %p257, %p258
    %p260 = scmp.ne.s32.totalorder %s252, %s254
    %p261 = scmp.eq.s32.totalorder %s22, 3
    %p262 = por %p260, %p261
    %p263 = scmp.ne.s32.totalorder %s254, %s255
    %p264 = scmp.eq.s32.totalorder %s22, 0
    %p265 = por %p263, %p264
    %p266 = scmp.ne.s32.totalorder %s254, %s255
    %p267 = scmp.eq.s32.totalorder %s23, 3
    %p268 = por %p266, %p267
    %p270 = scmp.ne.s32.totalorder %s255, %s269
    %p271 = scmp.eq.s32.totalorder %s23, 0
    %p272 = por %p270, %p271
    %s273 = smul.u32 %s24, %s25
    %s274 = smul.u32 %s36, %s32
    %s275 = ssub.s32 %s273, %s274
    %p276 = scmp.eq.s32.totalorder %s275, 0
    %s278 = sadd.s32 %s277, 1
    %s279 = scalar_select %p276, %s277, %s278
    %p282 = pneg %p276
    %p283 = scmp.eq.s32.totalorder %s17, 3
    %p284 = por %p282, %p283
    %p285 = scmp.ne.s32.totalorder %s277, %s280
    %p286 = scmp.eq.s32.totalorder %s17, 0
    %p287 = por %p285, %p286
    %p288 = scmp.ne.s32.totalorder %s277, %s280
    %p289 = scmp.eq.s32.totalorder %s22, 3
    %p290 = por %p288, %p289
    %p291 = scmp.ne.s32.totalorder %s280, %s281
    %p292 = scmp.eq.s32.totalorder %s22, 0
    %p293 = por %p291, %p292
    %p294 = scmp.ne.s32.totalorder %s280, %s281
    %p295 = scmp.eq.s32.totalorder %s23, 3
    %p296 = por %p294, %p295
    %p298 = scmp.ne.s32.totalorder %s281, %s297
    %p299 = scmp.eq.s32.totalorder %s23, 0
    %p300 = por %p298, %p299
    %p301 = scmp.le.s32.totalorder 1, %s17
    %p302 = scmp.lt.s32.totalorder %s17, 5
    %p303 = pnand %p301, %p302
    %p304 = pneg %p303
    // Predicated region
    $region9: #{transconv_forward.5} parent=5 // pred_check
      _
    $region10: #{transconv_forward.5} parent=5 // pred_check_branch
      %306 = sbr.rel (%p303) target = $region12
    $region11: #{transconv_forward.5} parent=5 // pred_region
      %s307 = ssub.s32 %s17, 1
      // Predicated region
      $region13: #{transconv_forward.5} parent=11 // pred_check
        %p308 = pneg %p76
      $region14: #{transconv_forward.5} parent=11 // pred_check_branch
        %310 = sbr.rel (%p308) target = $region16
      $region15: #{transconv_forward.5} parent=11 // pred_region
        _
      $region16: #{transconv_forward.5} parent=11 // pred_fallthru
        _
      // Predicated region
      $region17: #{transconv_forward.5} parent=11 // pred_check
        %p311 = pneg %p97
      $region18: #{transconv_forward.5} parent=11 // pred_check_branch
        %313 = sbr.rel (%p311) target = $region20
      $region19: #{transconv_forward.5} parent=11 // pred_region
        _
      $region20: #{transconv_forward.5} parent=11 // pred_fallthru
        _
      // Predicated region
      $region21: #{transconv_forward.5} parent=11 // pred_check
        %p314 = pneg %p118
      $region22: #{transconv_forward.5} parent=11 // pred_check_branch
        %316 = sbr.rel (%p314) target = $region24
      $region23: #{transconv_forward.5} parent=11 // pred_region
        _
      $region24: #{transconv_forward.5} parent=11 // pred_fallthru
        _
      // Predicated region
      $region25: #{transconv_forward.5} parent=11 // pred_check
        %p317 = pneg %p139
      $region26: #{transconv_forward.5} parent=11 // pred_check_branch
        %319 = sbr.rel (%p317) target = $region28
      $region27: #{transconv_forward.5} parent=11 // pred_region
        _
      $region28: #{transconv_forward.5} parent=11 // pred_fallthru
        _
      // Predicated region
      $region29: #{transconv_forward.5} parent=11 // pred_check
        %p320 = pneg %p160
      $region30: #{transconv_forward.5} parent=11 // pred_check_branch
        %322 = sbr.rel (%p320) target = $region32
      $region31: #{transconv_forward.5} parent=11 // pred_region
        _
      $region32: #{transconv_forward.5} parent=11 // pred_fallthru
        _
      // Predicated region
      $region33: #{transconv_forward.5} parent=11 // pred_check
        %p323 = pneg %p181
      $region34: #{transconv_forward.5} parent=11 // pred_check_branch
        %325 = sbr.rel (%p323) target = $region36
      $region35: #{transconv_forward.5} parent=11 // pred_region
        _
      $region36: #{transconv_forward.5} parent=11 // pred_fallthru
        _
      // Predicated region
      $region37: #{transconv_forward.5} parent=11 // pred_check
        %p326 = pneg %p202
      $region38: #{transconv_forward.5} parent=11 // pred_check_branch
        %328 = sbr.rel (%p326) target = $region40
      $region39: #{transconv_forward.5} parent=11 // pred_region
        _
      $region40: #{transconv_forward.5} parent=11 // pred_fallthru
        _
      // Predicated region
      $region41: #{transconv_forward.5} parent=11 // pred_check
        %p329 = pneg %p223
      $region42: #{transconv_forward.5} parent=11 // pred_check_branch
        %331 = sbr.rel (%p329) target = $region44
      $region43: #{transconv_forward.5} parent=11 // pred_region
        _
      $region44: #{transconv_forward.5} parent=11 // pred_fallthru
        _
      // Predicated region
      $region45: #{transconv_forward.5} parent=11 // pred_check
        %p332 = pneg %p244
      $region46: #{transconv_forward.5} parent=11 // pred_check_branch
        %334 = sbr.rel (%p332) target = $region48
      $region47: #{transconv_forward.5} parent=11 // pred_region
        _
      $region48: #{transconv_forward.5} parent=11 // pred_fallthru
        _
      // Predicated region
      $region49: #{transconv_forward.5} parent=11 // pred_check
        %p335 = pneg %p265
      $region50: #{transconv_forward.5} parent=11 // pred_check_branch
        %337 = sbr.rel (%p335) target = $region52
      $region51: #{transconv_forward.5} parent=11 // pred_region
        _
      $region52: #{transconv_forward.5} parent=11 // pred_fallthru
        _
    $region12: #{transconv_forward.5} parent=5 // pred_fallthru
      _
    %p338 = scmp.lt.s32.totalorder %s17, 4
    // Predicated region
    $region53: #{transconv_forward.5} parent=5 // pred_check
      %p339 = pneg %p338
    $region54: #{transconv_forward.5} parent=5 // pred_check_branch
      %341 = sbr.rel (%p339) target = $region56
    $region55: #{transconv_forward.5} parent=5 // pred_region
      // Predicated region
      $region57: #{transconv_forward.5} parent=55 // pred_check
        %p342 = pneg %p49
      $region58: #{transconv_forward.5} parent=55 // pred_check_branch
        %344 = sbr.rel (%p342) target = $region60
      $region59: #{transconv_forward.5} parent=55 // pred_region
        %s345 = smul.u32 4, %s25
        %p346 = scmp.lt.s32.totalorder %s345, 7
        %s347 = scalar_select %p346, %s345, 7
        %s348 = smul.addr %s347, 8
        %s349 = scalar_lea.vmem %s0, %s348
        %s350 = smul.u32 4, %s25
      $region60: #{transconv_forward.5} parent=55 // pred_fallthru
        _
    $region56: #{transconv_forward.5} parent=5 // pred_fallthru
      _
    %p351 = scmp.le.s32.totalorder 1, %s17
    %p352 = scmp.lt.s32.totalorder %s17, 5
    %p353 = pnand %p351, %p352
    %p354 = pneg %p353
    // Predicated region
    $region61: #{transconv_forward.5} parent=5 // pred_check
      _
    $region62: #{transconv_forward.5} parent=5 // pred_check_branch
      %356 = sbr.rel (%p353) target = $region64
    $region63: #{transconv_forward.5} parent=5 // pred_region
      %s357 = ssub.s32 %s17, 1
      %s358 = smul.u32 4, %s27
      %p359 = scmp.lt.s32.totalorder %s358, 7
      %s360 = scalar_select %p359, %s358, 7
      %s361 = smul.addr %s360, 8
      %s362 = scalar_lea.vmem %s0, %s361
      %p363 = pneg %p55
      %p364 = pneg %p52
      %p365 = pneg %p76
      %p366 = pneg %p73
      %p367 = pneg %p97
      %p368 = pneg %p94
      %p369 = pneg %p118
      %p370 = pneg %p115
      %p371 = pneg %p139
      %p372 = pneg %p136
      %p373 = pneg %p160
      %p374 = pneg %p157
      %p375 = pneg %p181
      %p376 = pneg %p178
      %p377 = pneg %p202
      %p378 = pneg %p199
      %p379 = pneg %p223
      %p380 = pneg %p220
      %p381 = pneg %p244
      %p382 = pneg %p241
      %p383 = pneg %p265
      %p384 = pneg %p262
      %p385 = pneg %p293
      %p386 = pneg %p290
      %s387 = smul.u32 %s26, %s27
      %s388 = smul.u32 4, %s387
      %p389 = scmp.lt.s32.totalorder %s388, 7
      %s390 = scalar_select %p389, %s388, 7
      %s391 = smul.addr %s390, 8
      %s392 = scalar_lea.vmem %s11, %s391
      %s393 = smul.u32 4, %s27
      %p394 = scmp.lt.s32.totalorder %s393, 7
      %s395 = scalar_select %p394, %s393, 7
      %s396 = smul.addr %s395, 8
      %s397 = scalar_lea.vmem %s0, %s396
      %s398 = smul.u32 4, %s27
      %s399 = smul.u32 %s26, %s27
      %s400 = smul.u32 4, %s399
      %p401 = scmp.lt.s32.totalorder %s400, 7
      %s402 = scalar_select %p401, %s400, 7
      %s403 = smul.addr %s402, 8
      %s404 = scalar_lea.vmem %s11, %s403
      %s405 = smul.u32 %s26, %s27
      %s406 = smul.u32 4, %s405
      %v408 = vld [vmem:[%s397] sm:$0xff]
      %v409 = vld [vmem:[%s397 + $0x8] sm:$0xff]
      %v410 = vld [vmem:[%s397 + $0x10] sm:$0xff]
      %v411 = vld [vmem:[%s397 + $0x18] sm:$0xff]
      %v412 = vmul.f32 %v408, %v408
      %v413 = vmul.f32 %v409, %v409
      %v414 = vmul.f32 %v410, %v410
      %v415 = vmul.f32 %v411, %v411
      %vm416 = vcmask 261120
      %v417 = vsel %vm416, %v412, 0.0
      %418 = vadd.xlane.f32.xlu0 %v417
      %v419 = vpop.xlane.xlu0 %418
      %v420 = vsel %vm416, %v413, 0.0
      %421 = vadd.xlane.f32.xlu0 %v420
      %v422 = vpop.xlane.xlu0 %421
      %v423 = vsel %vm416, %v414, 0.0
      %424 = vadd.xlane.f32.xlu0 %v423
      %v425 = vpop.xlane.xlu0 %424
      %v426 = vsel %vm416, %v415, 0.0
      %427 = vadd.xlane.f32.xlu0 %v426
      %v428 = vpop.xlane.xlu0 %427
      %v429 = vadd.f32 %v419, 1.0
      %v430 = vadd.f32 %v422, 1.0
      %v431 = vadd.f32 %v425, 1.0
      %v432 = vadd.f32 %v428, 1.0
      %v433 = vrsqrt.pop %v429
      %v434 = vmul.f32 %v433, %v429
      %v435 = vmul.f32 %v434, %v433
      %v436 = vmul.f32 0.5, %v435
      %v437 = vsub.f32 1.5, %v436
      %v438 = vmul.f32 %v433, %v437
      %v439 = vmul.f32 %v429, %v438
      %vm440 = vcmp.eq.f32.partialorder %v429, inf
      %v441 = vsel %vm440, %v429, %v439
      %vm442 = vcmp.eq.f32.partialorder %v429, 0.0
      %v443 = vand.u32 %v429, 2147483648
      %v444 = vsel %vm442, %v443, %v441
      %v445 = vrsqrt.pop %v430
      %v446 = vmul.f32 %v445, %v430
      %v447 = vmul.f32 %v446, %v445
      %v448 = vmul.f32 0.5, %v447
      %v449 = vsub.f32 1.5, %v448
      %v450 = vmul.f32 %v445, %v449
      %v451 = vmul.f32 %v430, %v450
      %vm452 = vcmp.eq.f32.partialorder %v430, inf
      %v453 = vsel %vm452, %v430, %v451
      %vm454 = vcmp.eq.f32.partialorder %v430, 0.0
      %v455 = vand.u32 %v430, 2147483648
      %v456 = vsel %vm454, %v455, %v453
      %v457 = vrsqrt.pop %v431
      %v458 = vmul.f32 %v457, %v431
      %v459 = vmul.f32 %v458, %v457
      %v460 = vmul.f32 0.5, %v459
      %v461 = vsub.f32 1.5, %v460
      %v462 = vmul.f32 %v457, %v461
      %v463 = vmul.f32 %v431, %v462
      %vm464 = vcmp.eq.f32.partialorder %v431, inf
      %v465 = vsel %vm464, %v431, %v463
      %vm466 = vcmp.eq.f32.partialorder %v431, 0.0
      %v467 = vand.u32 %v431, 2147483648
      %v468 = vsel %vm466, %v467, %v465
      %v469 = vrsqrt.pop %v432
      %v470 = vmul.f32 %v469, %v432
      %v471 = vmul.f32 %v470, %v469
      %v472 = vmul.f32 0.5, %v471
      %v473 = vsub.f32 1.5, %v472
      %v474 = vmul.f32 %v469, %v473
      %v475 = vmul.f32 %v432, %v474
      %vm476 = vcmp.eq.f32.partialorder %v432, inf
      %v477 = vsel %vm476, %v432, %v475
      %vm478 = vcmp.eq.f32.partialorder %v432, 0.0
      %v479 = vand.u32 %v432, 2147483648
      %v480 = vsel %vm478, %v479, %v477
      %p481 = scmp.eq.s32.totalorder %s26, 0
      // Predicated region
      $region65: #{transconv_forward.5} parent=63 // pred_check
        %p482 = pneg %p481
      $region66: #{transconv_forward.5} parent=63 // pred_check_branch
        %484 = sbr.rel (%p482) target = $region68
      $region67: #{transconv_forward.5} parent=63 // pred_region
        %p485 = scmp.eq.s32.totalorder %s27, 0
        // Predicated region
        $region69: #{transconv_forward.5} parent=67 // pred_check
          %p486 = pneg %p485
        $region70: #{transconv_forward.5} parent=67 // pred_check_branch
          %488 = sbr.rel (%p486) target = $region72
        $region71: #{transconv_forward.5} parent=67 // pred_region
          %489 = vst.msk [vmem:[#allocation2] sm:$0xff] %vm416, 0.0
          %490 = vst.msk [vmem:[#allocation2 + $0x8] sm:$0xff] %vm416, 0.0
          %491 = vst.msk [vmem:[#allocation2 + $0x10] sm:$0xff] %vm416, 0.0
          %492 = vst.msk [vmem:[#allocation2 + $0x18] sm:$0xff] %vm416, 0.0
          %vm493 = vcmask 253952
          %494 = vst.msk [vmem:[#allocation3] sm:$0x1] %vm493, 0.0
        $region72: #{transconv_forward.5} parent=67 // pred_fallthru
          _
        %v495 = vld [vmem:[%s1] sm:$0xff]
        %v496 = vld [vmem:[%s1 + $0x8] sm:$0xff]
        %v497 = vld [vmem:[%s1 + $0x10] sm:$0xff]
        %v498 = vld [vmem:[%s1 + $0x18] sm:$0xff]
        %v499 = vpack.c.bf16 %v409, %v408
        %v500 = vpack.c.bf16 %v411, %v410
        %v501 = vpack.c.bf16 %v496, %v495
        %v502 = vpack.c.bf16 %v498, %v497
        %v503 = vld [vmem:[%s2] sm:$0x1]
        %v505 = vperm.slane %v503, 0
        %v507 = vmul.f32 %v444, %v505
        %v508 = vmul.f32 %v456, %v505
        %v509 = vmul.f32 %v468, %v505
        %v510 = vmul.f32 %v480, %v505
        %v512 = vsel %vm416, %v499, 0
        %v515 = vsel %vm416, %v500, 0
        %517 = vmatpush.bf16.msra.mxu0 0
        %518 = vmatpush.bf16.msra.mxu0 0
        %519 = vmatpush.bf16.msra.mxu0 0
        %520 = vmatpush.bf16.msra.mxu0 0
        %521 = vmatpush.bf16.msra.mxu0 0
        %522 = vmatpush.bf16.msra.mxu0 0
        %523 = vmatpush.bf16.msra.mxu0 %v502
        %524 = vmatpush.bf16.msra.mxu0 %v501
        %525 = vmatmul.bf16.gmra.mxu0 %v512
        %v526 = vpop.f32.mrf.mxu0
        %v527 = vadd.f32 %v507, %v526
        %v528 = vpop.f32.mrf.mxu0
        %v529 = vadd.f32 %v508, %v528
        %530 = vmatmul.bf16.gmra.mxu0 %v515
        %v531 = vpop.f32.mrf.mxu0
        %v532 = vadd.f32 %v509, %v531
        %v533 = vpop.f32.mrf.mxu0
        %v534 = vadd.f32 %v510, %v533
        %535 = vdwg.mxu0
        %v536 = vld [vmem:[%s3] sm:$0x1]
        %v538 = vperm.slane %v536, 0
        %v540 = vadd.f32 %v527, %v538
        %v541 = vadd.f32 %v529, %v538
        %v542 = vadd.f32 %v532, %v538
        %v543 = vadd.f32 %v534, %v538
        %v544 = vmax.f32 %v540, 0.0
        %v545 = vmax.f32 %v541, 0.0
        %v546 = vmax.f32 %v542, 0.0
        %v547 = vmax.f32 %v543, 0.0
        %v548 = vadd.f32 %v544, 1e-06
        %v549 = vadd.f32 %v545, 1e-06
        %v550 = vadd.f32 %v546, 1e-06
        %v551 = vadd.f32 %v547, 1e-06
        %v552 = vmul.f32 %v548, %v548
        %v553 = vmul.f32 %v549, %v549
        %v554 = vmul.f32 %v550, %v550
        %v555 = vmul.f32 %v551, %v551
        %v556 = vsel %vm416, %v552, 0.0
        %557 = vadd.xlane.f32.xlu0 %v556
        %v558 = vpop.xlane.xlu0 %557
        %v559 = vsel %vm416, %v553, 0.0
        %560 = vadd.xlane.f32.xlu0 %v559
        %v561 = vpop.xlane.xlu0 %560
        %v562 = vsel %vm416, %v554, 0.0
        %563 = vadd.xlane.f32.xlu0 %v562
        %v564 = vpop.xlane.xlu0 %563
        %v565 = vsel %vm416, %v555, 0.0
        %566 = vadd.xlane.f32.xlu0 %v565
        %v567 = vpop.xlane.xlu0 %566
        %v568 = vrsqrt.pop %v558
        %v569 = vmul.f32 %v568, %v558
        %v570 = vmul.f32 %v569, %v568
        %v571 = vmul.f32 0.5, %v570
        %v572 = vsub.f32 1.5, %v571
        %v573 = vmul.f32 %v568, %v572
        %v574 = vmul.f32 %v558, %v573
        %vm575 = vcmp.eq.f32.partialorder %v558, inf
        %v576 = vsel %vm575, %v558, %v574
        %vm577 = vcmp.eq.f32.partialorder %v558, 0.0
        %v578 = vand.u32 %v558, 2147483648
        %v579 = vsel %vm577, %v578, %v576
        %v580 = vrsqrt.pop %v561
        %v581 = vmul.f32 %v580, %v561
        %v582 = vmul.f32 %v581, %v580
        %v583 = vmul.f32 0.5, %v582
        %v584 = vsub.f32 1.5, %v583
        %v585 = vmul.f32 %v580, %v584
        %v586 = vmul.f32 %v561, %v585
        %vm587 = vcmp.eq.f32.partialorder %v561, inf
        %v588 = vsel %vm587, %v561, %v586
        %vm589 = vcmp.eq.f32.partialorder %v561, 0.0
        %v590 = vand.u32 %v561, 2147483648
        %v591 = vsel %vm589, %v590, %v588
        %v592 = vrsqrt.pop %v564
        %v593 = vmul.f32 %v592, %v564
        %v594 = vmul.f32 %v593, %v592
        %v595 = vmul.f32 0.5, %v594
        %v596 = vsub.f32 1.5, %v595
        %v597 = vmul.f32 %v592, %v596
        %v598 = vmul.f32 %v564, %v597
        %vm599 = vcmp.eq.f32.partialorder %v564, inf
        %v600 = vsel %vm599, %v564, %v598
        %vm601 = vcmp.eq.f32.partialorder %v564, 0.0
        %v602 = vand.u32 %v564, 2147483648
        %v603 = vsel %vm601, %v602, %v600
        %v604 = vrsqrt.pop %v567
        %v605 = vmul.f32 %v604, %v567
        %v606 = vmul.f32 %v605, %v604
        %v607 = vmul.f32 0.5, %v606
        %v608 = vsub.f32 1.5, %v607
        %v609 = vmul.f32 %v604, %v608
        %v610 = vmul.f32 %v567, %v609
        %vm611 = vcmp.eq.f32.partialorder %v567, inf
        %v612 = vsel %vm611, %v567, %v610
        %vm613 = vcmp.eq.f32.partialorder %v567, 0.0
        %v614 = vand.u32 %v567, 2147483648
        %v615 = vsel %vm613, %v614, %v612
        %v616 = vmul.f32 %v552, %v552
        %v617 = vmul.f32 %v553, %v553
        %v618 = vmul.f32 %v554, %v554
        %v619 = vmul.f32 %v555, %v555
        %v620 = vsel %vm416, %v616, 0.0
        %621 = vadd.xlane.f32.xlu0 %v620
        %v622 = vpop.xlane.xlu0 %621
        %v623 = vsel %vm416, %v617, 0.0
        %624 = vadd.xlane.f32.xlu0 %v623
        %v625 = vpop.xlane.xlu0 %624
        %v626 = vsel %vm416, %v618, 0.0
        %627 = vadd.xlane.f32.xlu0 %v626
        %v628 = vpop.xlane.xlu0 %627
        %v629 = vsel %vm416, %v619, 0.0
        %630 = vadd.xlane.f32.xlu0 %v629
        %v631 = vpop.xlane.xlu0 %630
        %v632 = vrsqrt.pop %v622
        %v633 = vmul.f32 %v632, %v622
        %v634 = vmul.f32 %v633, %v632
        %v635 = vmul.f32 0.5, %v634
        %v636 = vsub.f32 1.5, %v635
        %v637 = vmul.f32 %v632, %v636
        %v638 = vmul.f32 %v622, %v637
        %vm639 = vcmp.eq.f32.partialorder %v622, inf
        %v640 = vsel %vm639, %v622, %v638
        %vm641 = vcmp.eq.f32.partialorder %v622, 0.0
        %v642 = vand.u32 %v622, 2147483648
        %v643 = vsel %vm641, %v642, %v640
        %v644 = vrsqrt.pop %v625
        %v645 = vmul.f32 %v644, %v625
        %v646 = vmul.f32 %v645, %v644
        %v647 = vmul.f32 0.5, %v646
        %v648 = vsub.f32 1.5, %v647
        %v649 = vmul.f32 %v644, %v648
        %v650 = vmul.f32 %v625, %v649
        %vm651 = vcmp.eq.f32.partialorder %v625, inf
        %v652 = vsel %vm651, %v625, %v650
        %vm653 = vcmp.eq.f32.partialorder %v625, 0.0
        %v654 = vand.u32 %v625, 2147483648
        %v655 = vsel %vm653, %v654, %v652
        %v656 = vrsqrt.pop %v628
        %v657 = vmul.f32 %v656, %v628
        %v658 = vmul.f32 %v657, %v656
        %v659 = vmul.f32 0.5, %v658
        %v660 = vsub.f32 1.5, %v659
        %v661 = vmul.f32 %v656, %v660
        %v662 = vmul.f32 %v628, %v661
        %vm663 = vcmp.eq.f32.partialorder %v628, inf
        %v664 = vsel %vm663, %v628, %v662
        %vm665 = vcmp.eq.f32.partialorder %v628, 0.0
        %v666 = vand.u32 %v628, 2147483648
        %v667 = vsel %vm665, %v666, %v664
        %v668 = vrsqrt.pop %v631
        %v669 = vmul.f32 %v668, %v631
        %v670 = vmul.f32 %v669, %v668
        %v671 = vmul.f32 0.5, %v670
        %v672 = vsub.f32 1.5, %v671
        %v673 = vmul.f32 %v668, %v672
        %v674 = vmul.f32 %v631, %v673
        %vm675 = vcmp.eq.f32.partialorder %v631, inf
        %v676 = vsel %vm675, %v631, %v674
        %vm677 = vcmp.eq.f32.partialorder %v631, 0.0
        %v678 = vand.u32 %v631, 2147483648
        %v679 = vsel %vm677, %v678, %v676
        %v680 = vrcp.pop %v643
        %v681 = vrcp.pop %v655
        %v682 = vrcp.pop %v667
        %v683 = vrcp.pop %v679
        %v684 = vmul.f32 %v579, %v680
        %v685 = vmul.f32 %v591, %v681
        %v686 = vmul.f32 %v603, %v682
        %v687 = vmul.f32 %v615, %v683
        %v688 = vmul.f32 %v684, %v552
        %v689 = vmul.f32 %v685, %v553
        %v690 = vmul.f32 %v686, %v554
        %v691 = vmul.f32 %v687, %v555
        %v692 = vld [vmem:[#allocation2] sm:$0xff]
        %v693 = vld [vmem:[#allocation2 + $0x8] sm:$0xff]
        %v694 = vld [vmem:[#allocation2 + $0x10] sm:$0xff]
        %v695 = vld [vmem:[#allocation2 + $0x18] sm:$0xff]
        %v696 = vpack.c.bf16 %v689, %v688
        %v697 = vpack.c.bf16 %v691, %v690
        %v698 = vpack.c.bf16 %v541, %v540
        %v699 = vpack.c.bf16 %v543, %v542
        %700 = vxpose.xlu0.c.b16.start [1/8] %v696, 128
        %701 = vxpose.xlu0.c.b16.cont [2/8] %v697, 128
        %702 = vxpose.xlu0.c.b16.cont [3/8] 0, 128
        %703 = vxpose.xlu0.c.b16.cont [4/8] 0, 128
        %704 = vxpose.xlu0.c.b16.cont [5/8] 0, 128
        %705 = vxpose.xlu0.c.b16.cont [6/8] 0, 128
        %706 = vxpose.xlu0.c.b16.cont [7/8] 0, 128
        %707 = vxpose.xlu0.c.b16.end [8/8] 0, 128
        %v708 = vpop.trf.xlu0
        %v709 = vpop.trf.xlu0
        %v710 = vpop.trf.xlu0
        %v711 = vpop.trf.xlu0
        %v712 = vpop.trf.xlu0
        %v713 = vpop.trf.xlu0
        %v714 = vpop.trf.xlu0
        %v715 = vpop.trf.xlu0
        %718 = vrot.lane.b32.xlu0 %v698, 96
        %v719 = vpop.permute.xlu0 %718
        %720 = vrot.lane.b32.xlu0 %v699, 96
        %v721 = vpop.permute.xlu0 %720
        %v725 = vsel %vm416, %v708, 0
        %v728 = vsel %vm416, %v709, 0
        %730 = vmatpush.bf16.msra.mxu0 0
        %731 = vmatpush.bf16.msra.mxu0 0
        %732 = vmatpush.bf16.msra.mxu0 0
        %733 = vmatpush.bf16.msra.mxu0 0
        %734 = vmatpush.bf16.msra.mxu0 0
        %735 = vmatpush.bf16.msra.mxu0 0
        %736 = vmatpush.bf16.msra.mxu0 %v721
        %737 = vmatpush.bf16.msra.mxu0 %v719
        %738 = vmatmul.bf16.gmra.mxu0 %v725
        %v739 = vpop.f32.mrf.mxu0
        %v740 = vadd.f32 0.0, %v739
        %v741 = vpop.f32.mrf.mxu0
        %v742 = vadd.f32 0.0, %v741
        %743 = vmatmul.bf16.gmra.mxu0 %v728
        %v744 = vpop.f32.mrf.mxu0
        %v745 = vadd.f32 0.0, %v744
        %v746 = vpop.f32.mrf.mxu0
        %v747 = vadd.f32 0.0, %v746
        %748 = vdwg.mxu0
        %v749 = vadd.f32 %v692, %v740
        %v750 = vadd.f32 %v693, %v742
        %v751 = vadd.f32 %v694, %v745
        %v752 = vadd.f32 %v695, %v747
        %753 = vst.msk [vmem:[#allocation2] sm:$0xff] %vm416, %v749
        %754 = vst.msk [vmem:[#allocation2 + $0x8] sm:$0xff] %vm416, %v750
        %755 = vst.msk [vmem:[#allocation2 + $0x10] sm:$0xff] %vm416, %v751
        %756 = vst.msk [vmem:[#allocation2 + $0x18] sm:$0xff] %vm416, %v752
        %v757 = vld [vmem:[#allocation3] sm:$0x1]
        %v758 = vsel %vm416, %v688, 0.0
        %v759 = vsel %vm416, %v689, 0.0
        %v760 = vadd.f32 %v758, %v759
        %v761 = vsel %vm416, %v690, 0.0
        %v762 = vadd.f32 %v760, %v761
        %v763 = vsel %vm416, %v691, 0.0
        %v764 = vadd.f32 %v762, %v763
        %v765 = vrot.slane %v764, 4
        %v766 = vadd.f32 %v764, %v765
        %v767 = vrot.slane %v766, 2
        %v768 = vadd.f32 %v766, %v767
        %v769 = vrot.slane %v768, 1
        %v770 = vadd.f32 %v768, %v769
        %v771 = vadd.f32 %v757, %v770
        %vm772 = vcmask 253952
        %773 = vst.msk [vmem:[#allocation3] sm:$0x1] %vm772, %v771
      $region68: #{transconv_forward.5} parent=63 // pred_fallthru
        _
      %p774 = scmp.eq.s32.totalorder %s26, 1
      // Predicated region
      $region73: #{transconv_forward.5} parent=63 // pred_check
        %p775 = pneg %p774
      $region74: #{transconv_forward.5} parent=63 // pred_check_branch
        %777 = sbr.rel (%p775) target = $region76
      $region75: #{transconv_forward.5} parent=63 // pred_region
        %v778 = vld [vmem:[%s4] sm:$0xff]
        %v779 = vld [vmem:[%s4 + $0x8] sm:$0xff]
        %v780 = vld [vmem:[%s4 + $0x10] sm:$0xff]
        %v781 = vld [vmem:[%s4 + $0x18] sm:$0xff]
        %v782 = vpack.c.bf16 %v409, %v408
        %v783 = vpack.c.bf16 %v411, %v410
        %v784 = vpack.c.bf16 %v779, %v778
        %v785 = vpack.c.bf16 %v781, %v780
        %v786 = vld [vmem:[%s5] sm:$0x1]
        %v788 = vperm.slane %v786, 0
        %v790 = vmul.f32 %v444, %v788
        %v791 = vmul.f32 %v456, %v788
        %v792 = vmul.f32 %v468, %v788
        %v793 = vmul.f32 %v480, %v788
        %v795 = vsel %vm416, %v782, 0
        %v798 = vsel %vm416, %v783, 0
        %800 = vmatpush.bf16.msra.mxu0 0
        %801 = vmatpush.bf16.msra.mxu0 0
        %802 = vmatpush.bf16.msra.mxu0 0
        %803 = vmatpush.bf16.msra.mxu0 0
        %804 = vmatpush.bf16.msra.mxu0 0
        %805 = vmatpush.bf16.msra.mxu0 0
        %806 = vmatpush.bf16.msra.mxu0 %v785
        %807 = vmatpush.bf16.msra.mxu0 %v784
        %808 = vmatmul.bf16.gmra.mxu0 %v795
        %v809 = vpop.f32.mrf.mxu0
        %v810 = vadd.f32 %v790, %v809
        %v811 = vpop.f32.mrf.mxu0
        %v812 = vadd.f32 %v791, %v811
        %813 = vmatmul.bf16.gmra.mxu0 %v798
        %v814 = vpop.f32.mrf.mxu0
        %v815 = vadd.f32 %v792, %v814
        %v816 = vpop.f32.mrf.mxu0
        %v817 = vadd.f32 %v793, %v816
        %818 = vdwg.mxu0
        %v819 = vld [vmem:[%s6] sm:$0x1]
        %v821 = vperm.slane %v819, 0
        %v823 = vadd.f32 %v810, %v821
        %v824 = vadd.f32 %v812, %v821
        %v825 = vadd.f32 %v815, %v821
        %v826 = vadd.f32 %v817, %v821
        %v827 = vmax.f32 %v823, 0.0
        %v828 = vmax.f32 %v824, 0.0
        %v829 = vmax.f32 %v825, 0.0
        %v830 = vmax.f32 %v826, 0.0
        %v831 = vadd.f32 %v827, 1e-06
        %v832 = vadd.f32 %v828, 1e-06
        %v833 = vadd.f32 %v829, 1e-06
        %v834 = vadd.f32 %v830, 1e-06
        %v835 = vmul.f32 %v831, %v831
        %v836 = vmul.f32 %v832, %v832
        %v837 = vmul.f32 %v833, %v833
        %v838 = vmul.f32 %v834, %v834
        %v839 = vsel %vm416, %v835, 0.0
        %840 = vadd.xlane.f32.xlu0 %v839
        %v841 = vpop.xlane.xlu0 %840
        %v842 = vsel %vm416, %v836, 0.0
        %843 = vadd.xlane.f32.xlu0 %v842
        %v844 = vpop.xlane.xlu0 %843
        %v845 = vsel %vm416, %v837, 0.0
        %846 = vadd.xlane.f32.xlu0 %v845
        %v847 = vpop.xlane.xlu0 %846
        %v848 = vsel %vm416, %v838, 0.0
        %849 = vadd.xlane.f32.xlu0 %v848
        %v850 = vpop.xlane.xlu0 %849
        %v851 = vrsqrt.pop %v841
        %v852 = vmul.f32 %v851, %v841
        %v853 = vmul.f32 %v852, %v851
        %v854 = vmul.f32 0.5, %v853
        %v855 = vsub.f32 1.5, %v854
        %v856 = vmul.f32 %v851, %v855
        %v857 = vmul.f32 %v841, %v856
        %vm858 = vcmp.eq.f32.partialorder %v841, inf
        %v859 = vsel %vm858, %v841, %v857
        %vm860 = vcmp.eq.f32.partialorder %v841, 0.0
        %v861 = vand.u32 %v841, 2147483648
        %v862 = vsel %vm860, %v861, %v859
        %v863 = vrsqrt.pop %v844
        %v864 = vmul.f32 %v863, %v844
        %v865 = vmul.f32 %v864, %v863
        %v866 = vmul.f32 0.5, %v865
        %v867 = vsub.f32 1.5, %v866
        %v868 = vmul.f32 %v863, %v867
        %v869 = vmul.f32 %v844, %v868
        %vm870 = vcmp.eq.f32.partialorder %v844, inf
        %v871 = vsel %vm870, %v844, %v869
        %vm872 = vcmp.eq.f32.partialorder %v844, 0.0
        %v873 = vand.u32 %v844, 2147483648
        %v874 = vsel %vm872, %v873, %v871
        %v875 = vrsqrt.pop %v847
        %v876 = vmul.f32 %v875, %v847
        %v877 = vmul.f32 %v876, %v875
        %v878 = vmul.f32 0.5, %v877
        %v879 = vsub.f32 1.5, %v878
        %v880 = vmul.f32 %v875, %v879
        %v881 = vmul.f32 %v847, %v880
        %vm882 = vcmp.eq.f32.partialorder %v847, inf
        %v883 = vsel %vm882, %v847, %v881
        %vm884 = vcmp.eq.f32.partialorder %v847, 0.0
        %v885 = vand.u32 %v847, 2147483648
        %v886 = vsel %vm884, %v885, %v883
        %v887 = vrsqrt.pop %v850
        %v888 = vmul.f32 %v887, %v850
        %v889 = vmul.f32 %v888, %v887
        %v890 = vmul.f32 0.5, %v889
        %v891 = vsub.f32 1.5, %v890
        %v892 = vmul.f32 %v887, %v891
        %v893 = vmul.f32 %v850, %v892
        %vm894 = vcmp.eq.f32.partialorder %v850, inf
        %v895 = vsel %vm894, %v850, %v893
        %vm896 = vcmp.eq.f32.partialorder %v850, 0.0
        %v897 = vand.u32 %v850, 2147483648
        %v898 = vsel %vm896, %v897, %v895
        %v899 = vmul.f32 %v835, %v835
        %v900 = vmul.f32 %v836, %v836
        %v901 = vmul.f32 %v837, %v837
        %v902 = vmul.f32 %v838, %v838
        %v903 = vsel %vm416, %v899, 0.0
        %904 = vadd.xlane.f32.xlu0 %v903
        %v905 = vpop.xlane.xlu0 %904
        %v906 = vsel %vm416, %v900, 0.0
        %907 = vadd.xlane.f32.xlu0 %v906
        %v908 = vpop.xlane.xlu0 %907
        %v909 = vsel %vm416, %v901, 0.0
        %910 = vadd.xlane.f32.xlu0 %v909
        %v911 = vpop.xlane.xlu0 %910
        %v912 = vsel %vm416, %v902, 0.0
        %913 = vadd.xlane.f32.xlu0 %v912
        %v914 = vpop.xlane.xlu0 %913
        %v915 = vrsqrt.pop %v905
        %v916 = vmul.f32 %v915, %v905
        %v917 = vmul.f32 %v916, %v915
        %v918 = vmul.f32 0.5, %v917
        %v919 = vsub.f32 1.5, %v918
        %v920 = vmul.f32 %v915, %v919
        %v921 = vmul.f32 %v905, %v920
        %vm922 = vcmp.eq.f32.partialorder %v905, inf
        %v923 = vsel %vm922, %v905, %v921
        %vm924 = vcmp.eq.f32.partialorder %v905, 0.0
        %v925 = vand.u32 %v905, 2147483648
        %v926 = vsel %vm924, %v925, %v923
        %v927 = vrsqrt.pop %v908
        %v928 = vmul.f32 %v927, %v908
        %v929 = vmul.f32 %v928, %v927
        %v930 = vmul.f32 0.5, %v929
        %v931 = vsub.f32 1.5, %v930
        %v932 = vmul.f32 %v927, %v931
        %v933 = vmul.f32 %v908, %v932
        %vm934 = vcmp.eq.f32.partialorder %v908, inf
        %v935 = vsel %vm934, %v908, %v933
        %vm936 = vcmp.eq.f32.partialorder %v908, 0.0
        %v937 = vand.u32 %v908, 2147483648
        %v938 = vsel %vm936, %v937, %v935
        %v939 = vrsqrt.pop %v911
        %v940 = vmul.f32 %v939, %v911
        %v941 = vmul.f32 %v940, %v939
        %v942 = vmul.f32 0.5, %v941
        %v943 = vsub.f32 1.5, %v942
        %v944 = vmul.f32 %v939, %v943
        %v945 = vmul.f32 %v911, %v944
        %vm946 = vcmp.eq.f32.partialorder %v911, inf
        %v947 = vsel %vm946, %v911, %v945
        %vm948 = vcmp.eq.f32.partialorder %v911, 0.0
        %v949 = vand.u32 %v911, 2147483648
        %v950 = vsel %vm948, %v949, %v947
        %v951 = vrsqrt.pop %v914
        %v952 = vmul.f32 %v951, %v914
        %v953 = vmul.f32 %v952, %v951
        %v954 = vmul.f32 0.5, %v953
        %v955 = vsub.f32 1.5, %v954
        %v956 = vmul.f32 %v951, %v955
        %v957 = vmul.f32 %v914, %v956
        %vm958 = vcmp.eq.f32.partialorder %v914, inf
        %v959 = vsel %vm958, %v914, %v957
        %vm960 = vcmp.eq.f32.partialorder %v914, 0.0
        %v961 = vand.u32 %v914, 2147483648
        %v962 = vsel %vm960, %v961, %v959
        %v963 = vrcp.pop %v926
        %v964 = vrcp.pop %v938
        %v965 = vrcp.pop %v950
        %v966 = vrcp.pop %v962
        %v967 = vmul.f32 %v862, %v963
        %v968 = vmul.f32 %v874, %v964
        %v969 = vmul.f32 %v886, %v965
        %v970 = vmul.f32 %v898, %v966
        %v971 = vmul.f32 %v967, %v835
        %v972 = vmul.f32 %v968, %v836
        %v973 = vmul.f32 %v969, %v837
        %v974 = vmul.f32 %v970, %v838
        %v975 = vld [vmem:[#allocation2] sm:$0xff]
        %v976 = vld [vmem:[#allocation2 + $0x8] sm:$0xff]
        %v977 = vld [vmem:[#allocation2 + $0x10] sm:$0xff]
        %v978 = vld [vmem:[#allocation2 + $0x18] sm:$0xff]
        %v979 = vpack.c.bf16 %v972, %v971
        %v980 = vpack.c.bf16 %v974, %v973
        %v981 = vpack.c.bf16 %v976, %v975
        %v982 = vpack.c.bf16 %v978, %v977
        %v984 = vsel %vm416, %v979, 0
        %v987 = vsel %vm416, %v980, 0
        %989 = vmatpush.bf16.msra.mxu0 0
        %990 = vmatpush.bf16.msra.mxu0 0
        %991 = vmatpush.bf16.msra.mxu0 0
        %992 = vmatpush.bf16.msra.mxu0 0
        %993 = vmatpush.bf16.msra.mxu0 0
        %994 = vmatpush.bf16.msra.mxu0 0
        %995 = vmatpush.bf16.msra.mxu0 %v982
        %996 = vmatpush.bf16.msra.mxu0 %v981
        %997 = vmatmul.bf16.gmra.mxu0 %v984
        %v998 = vpop.f32.mrf.mxu0
        %v999 = vadd.f32 0.0, %v998
        %v1000 = vpop.f32.mrf.mxu0
        %v1001 = vadd.f32 0.0, %v1000
        %1002 = vmatmul.bf16.gmra.mxu0 %v987
        %v1003 = vpop.f32.mrf.mxu0
        %v1004 = vadd.f32 0.0, %v1003
        %v1005 = vpop.f32.mrf.mxu0
        %v1006 = vadd.f32 0.0, %v1005
        %1007 = vdwg.mxu0
        %v1008 = vld [vmem:[#allocation3] sm:$0x1]
        %v1010 = vperm.slane %v1008, 0
        %v1012 = vmul.f32 %v971, %v1010
        %v1013 = vmul.f32 %v972, %v1010
        %v1014 = vmul.f32 %v973, %v1010
        %v1015 = vmul.f32 %v974, %v1010
        %v1016 = vsel %vm416, %v1012, 0.0
        %1017 = vadd.xlane.f32.xlu0 %v1016
        %v1018 = vpop.xlane.xlu0 %1017
        %v1019 = vsel %vm416, %v1013, 0.0
        %1020 = vadd.xlane.f32.xlu0 %v1019
        %v1021 = vpop.xlane.xlu0 %1020
        %v1022 = vsel %vm416, %v1014, 0.0
        %1023 = vadd.xlane.f32.xlu0 %v1022
        %v1024 = vpop.xlane.xlu0 %1023
        %v1025 = vsel %vm416, %v1015, 0.0
        %1026 = vadd.xlane.f32.xlu0 %v1025
        %v1027 = vpop.xlane.xlu0 %1026
        %v1028 = vadd.f32 %v1018, 1e-06
        %v1029 = vadd.f32 %v1021, 1e-06
        %v1030 = vadd.f32 %v1024, 1e-06
        %v1031 = vadd.f32 %v1027, 1e-06
        %v1032 = vrcp.pop %v1028
        %v1033 = vrcp.pop %v1029
        %v1034 = vrcp.pop %v1030
        %v1035 = vrcp.pop %v1031
        %v1036 = vmul.f32 %v999, %v1032
        %v1037 = vmul.f32 %v1001, %v1033
        %v1038 = vmul.f32 %v1004, %v1034
        %v1039 = vmul.f32 %v1006, %v1035
        %v1040 = vld [vmem:[%s7] sm:$0xff]
        %v1041 = vld [vmem:[%s7 + $0x8] sm:$0xff]
        %v1042 = vld [vmem:[%s7 + $0x10] sm:$0xff]
        %v1043 = vld [vmem:[%s7 + $0x18] sm:$0xff]
        %v1044 = vpack.c.bf16 %v824, %v823
        %v1045 = vpack.c.bf16 %v826, %v825
        %v1046 = vpack.c.bf16 %v1041, %v1040
        %v1047 = vpack.c.bf16 %v1043, %v1042
        %v1048 = vld [vmem:[%s8] sm:$0x1]
        %v1050 = vperm.slane %v1048, 0
        %1054 = vrot.lane.b32.xlu0 %v1044, 96
        %v1055 = vpop.permute.xlu0 %1054
        %1056 = vrot.lane.b32.xlu0 %v1045, 96
        %v1057 = vpop.permute.xlu0 %1056
        %v1059 = vsel %vm416, %v1055, 0
        %v1062 = vsel %vm416, %v1057, 0
        %1064 = vmatpush.bf16.msra.mxu0 0
        %1065 = vmatpush.bf16.msra.mxu0 0
        %1066 = vmatpush.bf16.msra.mxu0 0
        %1067 = vmatpush.bf16.msra.mxu0 0
        %1068 = vmatpush.bf16.msra.mxu0 0
        %1069 = vmatpush.bf16.msra.mxu0 0
        %1070 = vmatpush.bf16.msra.mxu0 %v1047
        %1071 = vmatpush.bf16.msra.mxu0 %v1046
        %1072 = vmatmul.bf16.gmra.mxu0 %v1059
        %v1073 = vpop.f32.mrf.mxu0
        %v1074 = vadd.f32 %v1050, %v1073
        %v1075 = vpop.f32.mrf.mxu0
        %v1076 = vadd.f32 %v1050, %v1075
        %1077 = vmatmul.bf16.gmra.mxu0 %v1062
        %v1078 = vpop.f32.mrf.mxu0
        %v1079 = vadd.f32 %v1050, %v1078
        %v1080 = vpop.f32.mrf.mxu0
        %v1081 = vadd.f32 %v1050, %v1080
        %1082 = vdwg.mxu0
        %v1083 = vadd.f32 %v1036, %v1074
        %v1084 = vadd.f32 %v1037, %v1076
        %v1085 = vadd.f32 %v1038, %v1079
        %v1086 = vadd.f32 %v1039, %v1081
        %v1087 = vmul.f32 %v1083, %v1083
        %v1088 = vmul.f32 %v1084, %v1084
        %v1089 = vmul.f32 %v1085, %v1085
        %v1090 = vmul.f32 %v1086, %v1086
        %v1091 = vsel %vm416, %v1087, 0.0
        %1092 = vadd.xlane.f32.xlu0 %v1091
        %v1093 = vpop.xlane.xlu0 %1092
        %v1094 = vsel %vm416, %v1088, 0.0
        %1095 = vadd.xlane.f32.xlu0 %v1094
        %v1096 = vpop.xlane.xlu0 %1095
        %v1097 = vsel %vm416, %v1089, 0.0
        %1098 = vadd.xlane.f32.xlu0 %v1097
        %v1099 = vpop.xlane.xlu0 %1098
        %v1100 = vsel %vm416, %v1090, 0.0
        %1101 = vadd.xlane.f32.xlu0 %v1100
        %v1102 = vpop.xlane.xlu0 %1101
        %v1103 = vadd.f32 %v1093, 1.0
        %v1104 = vadd.f32 %v1096, 1.0
        %v1105 = vadd.f32 %v1099, 1.0
        %v1106 = vadd.f32 %v1102, 1.0
        %v1107 = vrsqrt.pop %v1103
        %v1108 = vmul.f32 %v1107, %v1103
        %v1109 = vmul.f32 %v1108, %v1107
        %v1110 = vmul.f32 0.5, %v1109
        %v1111 = vsub.f32 1.5, %v1110
        %v1112 = vmul.f32 %v1107, %v1111
        %v1113 = vmul.f32 %v1103, %v1112
        %vm1114 = vcmp.eq.f32.partialorder %v1103, inf
        %v1115 = vsel %vm1114, %v1103, %v1113
        %vm1116 = vcmp.eq.f32.partialorder %v1103, 0.0
        %v1117 = vand.u32 %v1103, 2147483648
        %v1118 = vsel %vm1116, %v1117, %v1115
        %v1119 = vrsqrt.pop %v1104
        %v1120 = vmul.f32 %v1119, %v1104
        %v1121 = vmul.f32 %v1120, %v1119
        %v1122 = vmul.f32 0.5, %v1121
        %v1123 = vsub.f32 1.5, %v1122
        %v1124 = vmul.f32 %v1119, %v1123
        %v1125 = vmul.f32 %v1104, %v1124
        %vm1126 = vcmp.eq.f32.partialorder %v1104, inf
        %v1127 = vsel %vm1126, %v1104, %v1125
        %vm1128 = vcmp.eq.f32.partialorder %v1104, 0.0
        %v1129 = vand.u32 %v1104, 2147483648
        %v1130 = vsel %vm1128, %v1129, %v1127
        %v1131 = vrsqrt.pop %v1105
        %v1132 = vmul.f32 %v1131, %v1105
        %v1133 = vmul.f32 %v1132, %v1131
        %v1134 = vmul.f32 0.5, %v1133
        %v1135 = vsub.f32 1.5, %v1134
        %v1136 = vmul.f32 %v1131, %v1135
        %v1137 = vmul.f32 %v1105, %v1136
        %vm1138 = vcmp.eq.f32.partialorder %v1105, inf
        %v1139 = vsel %vm1138, %v1105, %v1137
        %vm1140 = vcmp.eq.f32.partialorder %v1105, 0.0
        %v1141 = vand.u32 %v1105, 2147483648
        %v1142 = vsel %vm1140, %v1141, %v1139
        %v1143 = vrsqrt.pop %v1106
        %v1144 = vmul.f32 %v1143, %v1106
        %v1145 = vmul.f32 %v1144, %v1143
        %v1146 = vmul.f32 0.5, %v1145
        %v1147 = vsub.f32 1.5, %v1146
        %v1148 = vmul.f32 %v1143, %v1147
        %v1149 = vmul.f32 %v1106, %v1148
        %vm1150 = vcmp.eq.f32.partialorder %v1106, inf
        %v1151 = vsel %vm1150, %v1106, %v1149
        %vm1152 = vcmp.eq.f32.partialorder %v1106, 0.0
        %v1153 = vand.u32 %v1106, 2147483648
        %v1154 = vsel %vm1152, %v1153, %v1151
        %v1155 = vadd.f32 %v1118, %v444
        %v1156 = vadd.f32 %v1130, %v456
        %v1157 = vadd.f32 %v1142, %v468
        %v1158 = vadd.f32 %v1154, %v480
        %v1159 = vmul.f32 %v1155, 0.5
        %v1160 = vmul.f32 %v1156, 0.5
        %v1161 = vmul.f32 %v1157, 0.5
        %v1162 = vmul.f32 %v1158, 0.5
        %v1163 = vadd.f32 %v1083, %v408
        %v1164 = vadd.f32 %v1084, %v409
        %v1165 = vadd.f32 %v1085, %v410
        %v1166 = vadd.f32 %v1086, %v411
        %v1167 = vmul.f32 %v1163, 0.5
        %v1168 = vmul.f32 %v1164, 0.5
        %v1169 = vmul.f32 %v1165, 0.5
        %v1170 = vmul.f32 %v1166, 0.5
        %v1171 = vsub.f32 0.0, %v1159
        %v1172 = vsub.f32 0.0, %v1160
        %v1173 = vsub.f32 0.0, %v1161
        %v1174 = vsub.f32 0.0, %v1162
        %v1175 = vmul.f32 %v1171, %v1159
        %v1176 = vmul.f32 %v1172, %v1160
        %v1177 = vmul.f32 %v1173, %v1161
        %v1178 = vmul.f32 %v1174, %v1162
        %v1179 = vmul.f32 %v1167, %v1167
        %v1180 = vmul.f32 %v1168, %v1168
        %v1181 = vmul.f32 %v1169, %v1169
        %v1182 = vmul.f32 %v1170, %v1170
        %v1183 = vsel %vm416, %v1179, 0.0
        %1184 = vadd.xlane.f32.xlu0 %v1183
        %v1185 = vpop.xlane.xlu0 %1184
        %v1186 = vsel %vm416, %v1180, 0.0
        %1187 = vadd.xlane.f32.xlu0 %v1186
        %v1188 = vpop.xlane.xlu0 %1187
        %v1189 = vsel %vm416, %v1181, 0.0
        %1190 = vadd.xlane.f32.xlu0 %v1189
        %v1191 = vpop.xlane.xlu0 %1190
        %v1192 = vsel %vm416, %v1182, 0.0
        %1193 = vadd.xlane.f32.xlu0 %v1192
        %v1194 = vpop.xlane.xlu0 %1193
        %v1195 = vadd.f32 %v1175, %v1185
        %v1196 = vadd.f32 %v1176, %v1188
        %v1197 = vadd.f32 %v1177, %v1191
        %v1198 = vadd.f32 %v1178, %v1194
        %v1199 = vand.u32 2147483647, %v1195
        %v1200 = vand.u32 2147483647, %v1196
        %v1201 = vand.u32 2147483647, %v1197
        %v1202 = vand.u32 2147483647, %v1198
        %v1203 = vmax.f32 %v1199, 1e-08
        %v1204 = vmax.f32 %v1200, 1e-08
        %v1205 = vmax.f32 %v1201, 1e-08
        %v1206 = vmax.f32 %v1202, 1e-08
        %v1207 = vrsqrt.pop %v1203
        %v1208 = vmul.f32 %v1207, %v1203
        %v1209 = vmul.f32 %v1208, %v1207
        %v1210 = vmul.f32 0.5, %v1209
        %v1211 = vsub.f32 1.5, %v1210
        %v1212 = vmul.f32 %v1207, %v1211
        %v1213 = vmul.f32 %v1203, %v1212
        %vm1214 = vcmp.eq.f32.partialorder %v1203, inf
        %v1215 = vsel %vm1214, %v1203, %v1213
        %vm1216 = vcmp.eq.f32.partialorder %v1203, 0.0
        %v1217 = vand.u32 %v1203, 2147483648
        %v1218 = vsel %vm1216, %v1217, %v1215
        %v1219 = vrsqrt.pop %v1204
        %v1220 = vmul.f32 %v1219, %v1204
        %v1221 = vmul.f32 %v1220, %v1219
        %v1222 = vmul.f32 0.5, %v1221
        %v1223 = vsub.f32 1.5, %v1222
        %v1224 = vmul.f32 %v1219, %v1223
        %v1225 = vmul.f32 %v1204, %v1224
        %vm1226 = vcmp.eq.f32.partialorder %v1204, inf
        %v1227 = vsel %vm1226, %v1204, %v1225
        %vm1228 = vcmp.eq.f32.partialorder %v1204, 0.0
        %v1229 = vand.u32 %v1204, 2147483648
        %v1230 = vsel %vm1228, %v1229, %v1227
        %v1231 = vrsqrt.pop %v1205
        %v1232 = vmul.f32 %v1231, %v1205
        %v1233 = vmul.f32 %v1232, %v1231
        %v1234 = vmul.f32 0.5, %v1233
        %v1235 = vsub.f32 1.5, %v1234
        %v1236 = vmul.f32 %v1231, %v1235
        %v1237 = vmul.f32 %v1205, %v1236
        %vm1238 = vcmp.eq.f32.partialorder %v1205, inf
        %v1239 = vsel %vm1238, %v1205, %v1237
        %vm1240 = vcmp.eq.f32.partialorder %v1205, 0.0
        %v1241 = vand.u32 %v1205, 2147483648
        %v1242 = vsel %vm1240, %v1241, %v1239
        %v1243 = vrsqrt.pop %v1206
        %v1244 = vmul.f32 %v1243, %v1206
        %v1245 = vmul.f32 %v1244, %v1243
        %v1246 = vmul.f32 0.5, %v1245
        %v1247 = vsub.f32 1.5, %v1246
        %v1248 = vmul.f32 %v1243, %v1247
        %v1249 = vmul.f32 %v1206, %v1248
        %vm1250 = vcmp.eq.f32.partialorder %v1206, inf
        %v1251 = vsel %vm1250, %v1206, %v1249
        %vm1252 = vcmp.eq.f32.partialorder %v1206, 0.0
        %v1253 = vand.u32 %v1206, 2147483648
        %v1254 = vsel %vm1252, %v1253, %v1251
        %v1255 = vrcp.pop %v1218
        %v1256 = vrcp.pop %v1230
        %v1257 = vrcp.pop %v1242
        %v1258 = vrcp.pop %v1254
        %v1259 = vmul.f32 %v1167, %v1255
        %v1260 = vmul.f32 %v1168, %v1256
        %v1261 = vmul.f32 %v1169, %v1257
        %v1262 = vmul.f32 %v1170, %v1258
        %v1263 = vsel %vm416, %v1259, 0.0
        %1264 = vadd.xlane.f32.xlu0 %v1263
        %v1265 = vpop.xlane.xlu0 %1264
        %v1266 = vsel %vm416, %v1260, 0.0
        %1267 = vadd.xlane.f32.xlu0 %v1266
        %v1268 = vpop.xlane.xlu0 %1267
        %v1269 = vsel %vm416, %v1261, 0.0
        %1270 = vadd.xlane.f32.xlu0 %v1269
        %v1271 = vpop.xlane.xlu0 %1270
        %v1272 = vsel %vm416, %v1262, 0.0
        %1273 = vadd.xlane.f32.xlu0 %v1272
        %v1274 = vpop.xlane.xlu0 %1273
        %v1275 = vrcp.pop 32.0
        %v1276 = vmul.f32 32.0, %v1275
        %v1277 = vsub.f32 1.0, %v1276
        %v1278 = vmul.f32 %v1275, %v1277
        %v1279 = vadd.f32 %v1275, %v1278
        %vm1280 = vweird.f32 %v1275
        %v1281 = vsel %vm1280, %v1275, %v1279
        %v1282 = vmul.f32 %v1265, %v1281
        %v1283 = vmul.f32 %v1268, %v1281
        %v1284 = vmul.f32 %v1271, %v1281
        %v1285 = vmul.f32 %v1274, %v1281
        %v1286 = vsub.f32 %v1259, %v1282
        %v1287 = vsub.f32 %v1260, %v1283
        %v1288 = vsub.f32 %v1261, %v1284
        %v1289 = vsub.f32 %v1262, %v1285
        %v1290 = vmul.f32 %v1286, %v1286
        %v1291 = vmul.f32 %v1287, %v1287
        %v1292 = vmul.f32 %v1288, %v1288
        %v1293 = vmul.f32 %v1289, %v1289
        %v1294 = vsel %vm416, %v1290, 0.0
        %1295 = vadd.xlane.f32.xlu0 %v1294
        %v1296 = vpop.xlane.xlu0 %1295
        %v1297 = vsel %vm416, %v1291, 0.0
        %1298 = vadd.xlane.f32.xlu0 %v1297
        %v1299 = vpop.xlane.xlu0 %1298
        %v1300 = vsel %vm416, %v1292, 0.0
        %1301 = vadd.xlane.f32.xlu0 %v1300
        %v1302 = vpop.xlane.xlu0 %1301
        %v1303 = vsel %vm416, %v1293, 0.0
        %1304 = vadd.xlane.f32.xlu0 %v1303
        %v1305 = vpop.xlane.xlu0 %1304
        %v1306 = vmul.f32 %v1296, %v1281
        %v1307 = vmul.f32 %v1299, %v1281
        %v1308 = vmul.f32 %v1302, %v1281
        %v1309 = vmul.f32 %v1305, %v1281
        %v1310 = vadd.f32 %v1306, 1e-05
        %v1311 = vadd.f32 %v1307, 1e-05
        %v1312 = vadd.f32 %v1308, 1e-05
        %v1313 = vadd.f32 %v1309, 1e-05
        %v1314 = vrsqrt.pop %v1310
        %v1315 = vmul.f32 %v1314, %v1310
        %v1316 = vmul.f32 %v1315, %v1314
        %v1317 = vmul.f32 0.5, %v1316
        %v1318 = vsub.f32 1.5, %v1317
        %v1319 = vmul.f32 %v1314, %v1318
        %vm1320 = vweird.f32 %v1310
        %vm1321 = vweird.f32 %v1314
        %vm1322 = vmor %vm1320, %vm1321
        %v1323 = vsel %vm1322, %v1314, %v1319
        %v1324 = vrsqrt.pop %v1311
        %v1325 = vmul.f32 %v1324, %v1311
        %v1326 = vmul.f32 %v1325, %v1324
        %v1327 = vmul.f32 0.5, %v1326
        %v1328 = vsub.f32 1.5, %v1327
        %v1329 = vmul.f32 %v1324, %v1328
        %vm1330 = vweird.f32 %v1311
        %vm1331 = vweird.f32 %v1324
        %vm1332 = vmor %vm1330, %vm1331
        %v1333 = vsel %vm1332, %v1324, %v1329
        %v1334 = vrsqrt.pop %v1312
        %v1335 = vmul.f32 %v1334, %v1312
        %v1336 = vmul.f32 %v1335, %v1334
        %v1337 = vmul.f32 0.5, %v1336
        %v1338 = vsub.f32 1.5, %v1337
        %v1339 = vmul.f32 %v1334, %v1338
        %vm1340 = vweird.f32 %v1312
        %vm1341 = vweird.f32 %v1334
        %vm1342 = vmor %vm1340, %vm1341
        %v1343 = vsel %vm1342, %v1334, %v1339
        %v1344 = vrsqrt.pop %v1313
        %v1345 = vmul.f32 %v1344, %v1313
        %v1346 = vmul.f32 %v1345, %v1344
        %v1347 = vmul.f32 0.5, %v1346
        %v1348 = vsub.f32 1.5, %v1347
        %v1349 = vmul.f32 %v1344, %v1348
        %vm1350 = vweird.f32 %v1313
        %vm1351 = vweird.f32 %v1344
        %vm1352 = vmor %vm1350, %vm1351
        %v1353 = vsel %vm1352, %v1344, %v1349
        %v1354 = vmul.f32 %v1286, %v1323
        %v1355 = vmul.f32 %v1287, %v1333
        %v1356 = vmul.f32 %v1288, %v1343
        %v1357 = vmul.f32 %v1289, %v1353
        %v1358 = vld [vmem:[%s9] sm:$0x1]
        %v1360 = vperm.slane %v1358, 0
        %v1362 = vmul.f32 %v1354, %v1360
        %v1363 = vmul.f32 %v1355, %v1360
        %v1364 = vmul.f32 %v1356, %v1360
        %v1365 = vmul.f32 %v1357, %v1360
        %v1366 = vld [vmem:[%s10] sm:$0x1]
        %v1368 = vperm.slane %v1366, 0
        %v1370 = vadd.f32 %v1362, %v1368
        %v1371 = vadd.f32 %v1363, %v1368
        %v1372 = vadd.f32 %v1364, %v1368
        %v1373 = vadd.f32 %v1365, %v1368
        %v1374 = vmax.f32 %v1370, 0.0
        %v1375 = vmax.f32 %v1371, 0.0
        %v1376 = vmax.f32 %v1372, 0.0
        %v1377 = vmax.f32 %v1373, 0.0
        %1378 = vst.msk [vmem:[%s404] sm:$0xff] %vm416, %v1374
        %1379 = vst.msk [vmem:[%s404 + $0x8] sm:$0xff] %vm416, %v1375
        %1380 = vst.msk [vmem:[%s404 + $0x10] sm:$0xff] %vm416, %v1376
        %1381 = vst.msk [vmem:[%s404 + $0x18] sm:$0xff] %vm416, %v1377
      $region76: #{transconv_forward.5} parent=63 // pred_fallthru
        _
      %s1382 = smul.u32 %s26, %s27
      %s1383 = smul.u32 4, %s1382
      %p1384 = scmp.lt.s32.totalorder %s1383, 7
      %s1385 = scalar_select %p1384, %s1383, 7
      %s1386 = smul.addr %s1385, 8
      %s1387 = scalar_lea.vmem %s11, %s1386
      // Predicated region
      $region77: #{transconv_forward.5} parent=63 // pred_check
        %p1388 = pneg %p290
      $region78: #{transconv_forward.5} parent=63 // pred_check_branch
        %1390 = sbr.rel (%p1388) target = $region80
      $region79: #{transconv_forward.5} parent=63 // pred_region
        %s1391 = smul.u32 %s26, %s27
        %s1392 = smul.u32 4, %s1391
      $region80: #{transconv_forward.5} parent=63 // pred_fallthru
        _
    $region64: #{transconv_forward.5} parent=5 // pred_fallthru
      _
    %p1393 = scmp.le.s32.totalorder 2, %s17
    // Predicated region
    $region81: #{transconv_forward.5} parent=5 // pred_check
      %p1394 = pneg %p1393
    $region82: #{transconv_forward.5} parent=5 // pred_check_branch
      %1396 = sbr.rel (%p1394) target = $region84
    $region83: #{transconv_forward.5} parent=5 // pred_region
      %s1397 = ssub.s32 %s17, 2
      // Predicated region
      $region85: #{transconv_forward.5} parent=83 // pred_check
        %p1398 = pneg %p296
      $region86: #{transconv_forward.5} parent=83 // pred_check_branch
        %1400 = sbr.rel (%p1398) target = $region88
      $region87: #{transconv_forward.5} parent=83 // pred_region
        %s1401 = smul.u32 %s28, %s29
        %s1402 = smul.u32 4, %s1401
        %p1403 = scmp.lt.s32.totalorder %s1402, 7
        %s1404 = scalar_select %p1403, %s1402, 7
        %s1405 = smul.addr %s1404, 8
        %s1406 = scalar_lea.vmem %s11, %s1405
      $region88: #{transconv_forward.5} parent=83 // pred_fallthru
        _
    $region84: #{transconv_forward.5} parent=5 // pred_fallthru
      _
  $region6: #{transconv_forward.5} parent=0 // loop_footer
    %s21 = sadd.s32 1, %s17
  $region7: #{transconv_forward.5} parent=0 // loop_footer_branch
    %16 = sbr.rel target = $region3
  $region8: #{transconv_forward.5} parent=0 // loop_exit
    _

</llo_original>
